<compile_context>
chip_gen: v5e
topology: v5e:2x2
jax: 0.10.0
libtpu: 0.0.40
codegen_flags: <defaults>
</compile_context>

<pallas_src>
import jax
import jax.numpy as jnp
from jax.experimental import pallas as pl
from jax.experimental.pallas import tpu as pltpu

# Logical (PyTorch) dims
D_IN, D1, D2, D3, D_OUT = 768, 1048, 500, 50, 1
# Lane-aligned padded dims used by the kernel
D_INP, D1P, D2P, D3P, D_OUTP = 768, 1152, 512, 128, 128


def _round_up(x, m):
    return (x + m - 1) // m * m


def _mlp_kernel(x_ref, w1_ref, b1_ref, w2_ref, b2_ref,
                w3_ref, b3_ref, w4_ref, b4_ref, o_ref):
    # bf16 MXU operands, f32 accumulation; bias/ReLU/sigmoid in f32.
    x = x_ref[...].astype(jnp.bfloat16)
    h = jnp.dot(x, w1_ref[...],
                preferred_element_type=jnp.float32) + b1_ref[...]
    h = jnp.maximum(h, 0.0)
    h = jnp.dot(h.astype(jnp.bfloat16), w2_ref[...],
                preferred_element_type=jnp.float32) + b2_ref[...]
    h = jnp.maximum(h, 0.0)
    h = jnp.dot(h.astype(jnp.bfloat16), w3_ref[...],
                preferred_element_type=jnp.float32) + b3_ref[...]
    h = jnp.maximum(h, 0.0)
    z = jnp.dot(h.astype(jnp.bfloat16), w4_ref[...],
                preferred_element_type=jnp.float32) + b4_ref[...]
    # sigmoid: exp on the EUP, divide via approx reciprocal (EUP slot, not VALU)
    o_ref[...] = pl.reciprocal(1.0 + jnp.exp(-z), approx=True).astype(o_ref.dtype)


def prepare_params(params):
    """Pad logical f32 params ([in,out] weights, [1,out] biases) to lane-aligned
    padded shapes; weights cast to bf16, biases kept f32."""
    w1, b1, w2, b2, w3, b3, w4, b4 = params

    def pad_w(w, ip, op):
        out = jnp.zeros((ip, op), jnp.bfloat16)
        return out.at[:w.shape[0], :w.shape[1]].set(w.astype(jnp.bfloat16))

    def pad_b(b, op):
        out = jnp.zeros((1, op), jnp.float32)
        return out.at[:, :b.shape[1]].set(b.astype(jnp.float32))

    return (pad_w(w1, D_INP, D1P), pad_b(b1, D1P),
            pad_w(w2, D1P, D2P), pad_b(b2, D2P),
            pad_w(w3, D2P, D3P), pad_b(b3, D3P),
            pad_w(w4, D3P, D_OUTP), pad_b(b4, D_OUTP))


def eval_nn_forward(x, padded_params, *, tb=256):
    """Fused forward pass of EvalNN.  x: [B, 768] f32 -> [B, 1] f32."""
    B = x.shape[0]
    # Clamp the batch tile for small batches; keep it a multiple of 8 (f32 sublane).
    tb = min(tb, _round_up(B, 8))
    assert tb % 8 == 0, "batch tile must be a multiple of 8"
    Bp = _round_up(B, tb)
    if Bp != B:
        x = jnp.pad(x, ((0, Bp - B), (0, 0)))

    w1, b1, w2, b2, w3, b3, w4, b4 = padded_params
    n_tiles = Bp // tb

    def w_spec(arr):
        # whole-array block; constant index map -> fetched once, resident
        return pl.BlockSpec(arr.shape, lambda i: (0, 0))

    flops = 2 * Bp * (D_INP * D1P + D1P * D2P + D2P * D3P + D3P * D_OUTP)
    bytes_accessed = (
        sum(int(a.size) * a.dtype.itemsize for a in padded_params)
        + Bp * D_INP * 4 + Bp * D_OUTP * 4)
    cost = pl.CostEstimate(flops=flops,
                           transcendentals=Bp * D_OUTP,
                           bytes_accessed=bytes_accessed)

    out = pl.pallas_call(
        _mlp_kernel,
        out_shape=jax.ShapeDtypeStruct((Bp, D_OUTP), jnp.float32),
        grid=(n_tiles,),
        in_specs=[
            pl.BlockSpec((tb, D_INP), lambda i: (i, 0)),   # x tile over batch
            w_spec(w1), w_spec(b1),
            w_spec(w2), w_spec(b2),
            w_spec(w3), w_spec(b3),
            w_spec(w4), w_spec(b4),
        ],
        out_specs=pl.BlockSpec((tb, D_OUTP), lambda i: (i, 0)),
        compiler_params=pltpu.CompilerParams(
            dimension_semantics=("parallel",),
            vmem_limit_bytes=32 << 20,
        ),
        cost_estimate=cost,
    )(x, w1, b1, w2, b2, w3, b3, w4, b4)

    return out[:B, :D_OUT]


def init_params(key):
    """Deterministic init matching nn.Linear defaults + xavier_uniform_ weights.
    Weights stored [in, out] (transposed vs PyTorch) so the kernel does x @ W."""
    def xavier_w(k, fan_in, fan_out):
        bound = (6.0 / (fan_in + fan_out)) ** 0.5
        return jax.random.uniform(k, (fan_in, fan_out), jnp.float32, -bound, bound)

    def linear_b(k, fan_in, fan_out):
        bound = 1.0 / (fan_in ** 0.5)
        return jax.random.uniform(k, (1, fan_out), jnp.float32, -bound, bound)

    ks = jax.random.split(key, 8)
    dims = [(D_IN, D1), (D1, D2), (D2, D3), (D3, D_OUT)]
    params = []
    for idx, (fi, fo) in enumerate(dims):
        params.append(xavier_w(ks[2 * idx], fi, fo))
        params.append(linear_b(ks[2 * idx + 1], fi, fo))
    return tuple(params)


def _reference_forward(x, params):
    """Full-precision f32 reference (unpadded params)."""
    w1, b1, w2, b2, w3, b3, w4, b4 = params
    h = jnp.maximum(x @ w1 + b1, 0.0)
    h = jnp.maximum(h @ w2 + b2, 0.0)
    h = jnp.maximum(h @ w3 + b3, 0.0)
    return jax.nn.sigmoid(h @ w4 + b4)


if __name__ == "__main__":
    key = jax.random.PRNGKey(0)
    k_params, k_x = jax.random.split(key)

    params = init_params(k_params)
    padded_params = prepare_params(params)

    batch = 8
    x = jax.random.normal(k_x, (batch, D_IN), dtype=jnp.float32)

    out = eval_nn_forward(x, padded_params)
    out = jax.block_until_ready(out)

    ref = _reference_forward(x, params)
    assert out.shape == (batch, D_OUT)
    # bf16 matmuls + approx reciprocal vs f32 reference: allow small deviation.
    assert jnp.allclose(out, ref, atol=3e-2, rtol=0.0), \
        f"max abs diff {float(jnp.max(jnp.abs(out - ref)))}"

    print("KERNEL_OK")
</pallas_src>

<mosaic_0001>
module attributes {stable_mosaic.version = 11 : i64} {
  func.func @_mlp_kernel(%arg0: i32, %arg1: memref<8x768xf32, #tpu.memory_space<vmem>>, %arg2: memref<768x1152xbf16, #tpu.memory_space<vmem>>, %arg3: memref<1x1152xf32, #tpu.memory_space<vmem>>, %arg4: memref<1152x512xbf16, #tpu.memory_space<vmem>>, %arg5: memref<1x512xf32, #tpu.memory_space<vmem>>, %arg6: memref<512x128xbf16, #tpu.memory_space<vmem>>, %arg7: memref<1x128xf32, #tpu.memory_space<vmem>>, %arg8: memref<128x128xbf16, #tpu.memory_space<vmem>>, %arg9: memref<1x128xf32, #tpu.memory_space<vmem>>, %arg10: memref<8x128xf32, #tpu.memory_space<vmem>>) attributes {dimension_semantics = [#tpu.dimension_semantics<parallel>], iteration_bounds = array<i64: 1>, scalar_prefetch = 0 : i64, scratch_operands = 0 : i64, tpu.core_type = #tpu.core_type<tc>, window_params = [{transform_indices = @transform_0, window_bounds = array<i64: 8, 768>}, {pipeline_mode = #tpu.pipeline_mode<synchronous>, transform_indices = @transform_1, window_bounds = array<i64: 768, 1152>}, {pipeline_mode = #tpu.pipeline_mode<synchronous>, transform_indices = @transform_2, window_bounds = array<i64: 1, 1152>}, {pipeline_mode = #tpu.pipeline_mode<synchronous>, transform_indices = @transform_3, window_bounds = array<i64: 1152, 512>}, {pipeline_mode = #tpu.pipeline_mode<synchronous>, transform_indices = @transform_4, window_bounds = array<i64: 1, 512>}, {pipeline_mode = #tpu.pipeline_mode<synchronous>, transform_indices = @transform_5, window_bounds = array<i64: 512, 128>}, {pipeline_mode = #tpu.pipeline_mode<synchronous>, transform_indices = @transform_6, window_bounds = array<i64: 1, 128>}, {pipeline_mode = #tpu.pipeline_mode<synchronous>, transform_indices = @transform_7, window_bounds = array<i64: 128, 128>}, {pipeline_mode = #tpu.pipeline_mode<synchronous>, transform_indices = @transform_8, window_bounds = array<i64: 1, 128>}, {transform_indices = @transform_9, window_bounds = array<i64: 8, 128>}]} {
    %c0 = arith.constant 0 : index
    %c0_0 = arith.constant 0 : index
    %0 = vector.load %arg1[%c0, %c0_0] : memref<8x768xf32, #tpu.memory_space<vmem>>, vector<8x768xf32>
    %1 = arith.truncf %0 : vector<8x768xf32> to vector<8x768xbf16>
    %c0_1 = arith.constant 0 : index
    %c0_2 = arith.constant 0 : index
    %2 = vector.load %arg2[%c0_1, %c0_2] : memref<768x1152xbf16, #tpu.memory_space<vmem>>, vector<768x1152xbf16>
    %cst = arith.constant dense<0.000000e+00> : vector<8x1152xf32>
    %3 = tpu.matmul %1, %2, %cst {dimension_numbers = #tpu.dot_dimension_numbers<[1], [0], [0], [1], [0, 0, 1, 1], [], []>} : vector<8x768xbf16>, vector<768x1152xbf16>, vector<8x1152xf32> -> vector<8x1152xf32>
    %c0_3 = arith.constant 0 : index
    %c0_4 = arith.constant 0 : index
    %4 = vector.load %arg3[%c0_3, %c0_4] : memref<1x1152xf32, #tpu.memory_space<vmem>>, vector<1x1152xf32>
    %5 = vector.broadcast %4 : vector<1x1152xf32> to vector<8x1152xf32>
    %6 = arith.addf %3, %5 : vector<8x1152xf32>
    %cst_5 = arith.constant 0.000000e+00 : f32
    %7 = vector.broadcast %cst_5 : f32 to vector<8x1152xf32>
    %8 = arith.maximumf %6, %7 : vector<8x1152xf32>
    %9 = arith.truncf %8 : vector<8x1152xf32> to vector<8x1152xbf16>
    %c0_6 = arith.constant 0 : index
    %c0_7 = arith.constant 0 : index
    %10 = vector.load %arg4[%c0_6, %c0_7] : memref<1152x512xbf16, #tpu.memory_space<vmem>>, vector<1152x512xbf16>
    %cst_8 = arith.constant dense<0.000000e+00> : vector<8x512xf32>
    %11 = tpu.matmul %9, %10, %cst_8 {dimension_numbers = #tpu.dot_dimension_numbers<[1], [0], [0], [1], [0, 0, 1, 1], [], []>} : vector<8x1152xbf16>, vector<1152x512xbf16>, vector<8x512xf32> -> vector<8x512xf32>
    %c0_9 = arith.constant 0 : index
    %c0_10 = arith.constant 0 : index
    %12 = vector.load %arg5[%c0_9, %c0_10] : memref<1x512xf32, #tpu.memory_space<vmem>>, vector<1x512xf32>
    %13 = vector.broadcast %12 : vector<1x512xf32> to vector<8x512xf32>
    %14 = arith.addf %11, %13 : vector<8x512xf32>
    %cst_11 = arith.constant 0.000000e+00 : f32
    %15 = vector.broadcast %cst_11 : f32 to vector<8x512xf32>
    %16 = arith.maximumf %14, %15 : vector<8x512xf32>
    %17 = arith.truncf %16 : vector<8x512xf32> to vector<8x512xbf16>
    %c0_12 = arith.constant 0 : index
    %c0_13 = arith.constant 0 : index
    %18 = vector.load %arg6[%c0_12, %c0_13] : memref<512x128xbf16, #tpu.memory_space<vmem>>, vector<512x128xbf16>
    %cst_14 = arith.constant dense<0.000000e+00> : vector<8x128xf32>
    %19 = tpu.matmul %17, %18, %cst_14 {dimension_numbers = #tpu.dot_dimension_numbers<[1], [0], [0], [1], [0, 0, 1, 1], [], []>} : vector<8x512xbf16>, vector<512x128xbf16>, vector<8x128xf32> -> vector<8x128xf32>
    %c0_15 = arith.constant 0 : index
    %c0_16 = arith.constant 0 : index
    %20 = vector.load %arg7[%c0_15, %c0_16] : memref<1x128xf32, #tpu.memory_space<vmem>>, vector<1x128xf32>
    %21 = vector.broadcast %20 : vector<1x128xf32> to vector<8x128xf32>
    %22 = arith.addf %19, %21 : vector<8x128xf32>
    %cst_17 = arith.constant 0.000000e+00 : f32
    %23 = vector.broadcast %cst_17 : f32 to vector<8x128xf32>
    %24 = arith.maximumf %22, %23 : vector<8x128xf32>
    %25 = arith.truncf %24 : vector<8x128xf32> to vector<8x128xbf16>
    %c0_18 = arith.constant 0 : index
    %c0_19 = arith.constant 0 : index
    %26 = vector.load %arg8[%c0_18, %c0_19] : memref<128x128xbf16, #tpu.memory_space<vmem>>, vector<128x128xbf16>
    %cst_20 = arith.constant dense<0.000000e+00> : vector<8x128xf32>
    %27 = tpu.matmul %25, %26, %cst_20 {dimension_numbers = #tpu.dot_dimension_numbers<[1], [0], [0], [1], [0, 0, 1, 1], [], []>} : vector<8x128xbf16>, vector<128x128xbf16>, vector<8x128xf32> -> vector<8x128xf32>
    %c0_21 = arith.constant 0 : index
    %c0_22 = arith.constant 0 : index
    %28 = vector.load %arg9[%c0_21, %c0_22] : memref<1x128xf32, #tpu.memory_space<vmem>>, vector<1x128xf32>
    %29 = vector.broadcast %28 : vector<1x128xf32> to vector<8x128xf32>
    %30 = arith.addf %27, %29 : vector<8x128xf32>
    %cst_23 = arith.constant 0.000000e+00 : f32
    %31 = vector.broadcast %cst_23 : f32 to vector<8x128xf32>
    %32 = arith.subf %31, %30 : vector<8x128xf32>
    %33 = math.exp %32 : vector<8x128xf32>
    %cst_24 = arith.constant 1.000000e+00 : f32
    %34 = vector.broadcast %cst_24 : f32 to vector<8x128xf32>
    %35 = arith.addf %34, %33 : vector<8x128xf32>
    %36 = tpu.reciprocal %35 {approx = true} : vector<8x128xf32> -> vector<8x128xf32>
    %c0_25 = arith.constant 0 : index
    %c0_26 = arith.constant 0 : index
    %37 = vector.load %arg10[%c0_25, %c0_26] : memref<8x128xf32, #tpu.memory_space<vmem>>, vector<8x128xf32>
    tpu.vector_store %arg10[%c0_25, %c0_26], %36 {strides = array<i32>} : memref<8x128xf32, #tpu.memory_space<vmem>>, vector<8x128xf32>,
    return
  }
  func.func @transform_0(%arg0: i32) -> (i32, i32) {
    %c0_i32 = arith.constant 0 : i32
    %c0_i32_0 = arith.constant 0 : i32
    return %arg0, %c0_i32 : i32, i32
  }
  func.func @transform_1(%arg0: i32) -> (i32, i32) {
    %c0_i32 = arith.constant 0 : i32
    %c0_i32_0 = arith.constant 0 : i32
    %c0_i32_1 = arith.constant 0 : i32
    return %c0_i32, %c0_i32_0 : i32, i32
  }
  func.func @transform_2(%arg0: i32) -> (i32, i32) {
    %c0_i32 = arith.constant 0 : i32
    %c0_i32_0 = arith.constant 0 : i32
    %c0_i32_1 = arith.constant 0 : i32
    return %c0_i32, %c0_i32_0 : i32, i32
  }
  func.func @transform_3(%arg0: i32) -> (i32, i32) {
    %c0_i32 = arith.constant 0 : i32
    %c0_i32_0 = arith.constant 0 : i32
    %c0_i32_1 = arith.constant 0 : i32
    return %c0_i32, %c0_i32_0 : i32, i32
  }
  func.func @transform_4(%arg0: i32) -> (i32, i32) {
    %c0_i32 = arith.constant 0 : i32
    %c0_i32_0 = arith.constant 0 : i32
    %c0_i32_1 = arith.constant 0 : i32
    return %c0_i32, %c0_i32_0 : i32, i32
  }
  func.func @transform_5(%arg0: i32) -> (i32, i32) {
    %c0_i32 = arith.constant 0 : i32
    %c0_i32_0 = arith.constant 0 : i32
    %c0_i32_1 = arith.constant 0 : i32
    return %c0_i32, %c0_i32_0 : i32, i32
  }
  func.func @transform_6(%arg0: i32) -> (i32, i32) {
    %c0_i32 = arith.constant 0 : i32
    %c0_i32_0 = arith.constant 0 : i32
    %c0_i32_1 = arith.constant 0 : i32
    return %c0_i32, %c0_i32_0 : i32, i32
  }
  func.func @transform_7(%arg0: i32) -> (i32, i32) {
    %c0_i32 = arith.constant 0 : i32
    %c0_i32_0 = arith.constant 0 : i32
    %c0_i32_1 = arith.constant 0 : i32
    return %c0_i32, %c0_i32_0 : i32, i32
  }
  func.func @transform_8(%arg0: i32) -> (i32, i32) {
    %c0_i32 = arith.constant 0 : i32
    %c0_i32_0 = arith.constant 0 : i32
    %c0_i32_1 = arith.constant 0 : i32
    return %c0_i32, %c0_i32_0 : i32, i32
  }
  func.func @transform_9(%arg0: i32) -> (i32, i32) {
    %c0_i32 = arith.constant 0 : i32
    %c0_i32_0 = arith.constant 0 : i32
    return %arg0, %c0_i32 : i32, i32
  }
}

</mosaic_0001>

<llo_original>
// kernel: tpu_custom_call.1
$region0: #{tpu_custom_call.1}
  #allocation0 [shape = 'u32[]', space=smem, size = 0x4, offset = 0x4, fixed_abs, tag = 'smem constant byte address 0x4 - core index']
  #allocation1 [shape = 'u32[72,128]{1,0:T(1,128)}', space=vmem, size = 0x9000, scoped, tag = 'internal scratch']
  %s0 = inlined_call_operand.hbm [shape: f32[8,768], index: 0, kind: input, shape index: {}]
  %s1 = inlined_call_operand.hbm [shape: bf16[768,1152], index: 1, kind: input, shape index: {}]
  %s2 = inlined_call_operand.hbm [shape: f32[1,1152], index: 2, kind: input, shape index: {}]
  %s3 = inlined_call_operand.hbm [shape: bf16[1152,512], index: 3, kind: input, shape index: {}]
  %s4 = inlined_call_operand.hbm [shape: f32[1,512], index: 4, kind: input, shape index: {}]
  %s5 = inlined_call_operand.hbm [shape: bf16[512,128], index: 5, kind: input, shape index: {}]
  %s6 = inlined_call_operand.hbm [shape: f32[1,128], index: 6, kind: input, shape index: {}]
  %s7 = inlined_call_operand.hbm [shape: bf16[128,128], index: 7, kind: input, shape index: {}]
  %s8 = inlined_call_operand.hbm [shape: f32[1,128], index: 8, kind: input, shape index: {}]
  %s9 = inlined_call_operand.hbm [shape: f32[8,128], index: 9, kind: output, shape index: {}]
  %s10 = sld [smem:[#allocation0]]
  $region82: #{tpu_custom_call.1} parent=0
    _
  %s12 = ssub.s32 1, %s10
  %s13 = scalar_select 0, %s12, %s10
  $region1: #{tpu_custom_call.1} parent=0
    #allocation2 [shape = 'u8[24576]{0}', space=vmem, size = 0x6000, scoped, tag = 'input window, operand 0, single buffered']
    #allocation3 [shape = 's32[1]{0}', space=sflag, size = 0x4, scoped, tag = 'scoped memory for tpu_custom_call.1']
    #allocation4 [shape = 's32[1]{0}', space=sflag, size = 0x4, scoped, tag = 'scoped memory for tpu_custom_call.1']
    #allocation5 [shape = 'u8[1769472]{0}', space=vmem, size = 0x1b0000, scoped, tag = 'input window, operand 1, single buffered']
    #allocation6 [shape = 's32[1]{0}', space=sflag, size = 0x4, scoped, tag = 'scoped memory for tpu_custom_call.1']
    #allocation7 [shape = 'u8[4608]{0}', space=vmem, size = 0x1400, scoped, tag = 'input window, operand 2, single buffered']
    #allocation8 [shape = 'u8[1179648]{0}', space=vmem, size = 0x120000, scoped, tag = 'input window, operand 3, single buffered']
    #allocation9 [shape = 's32[1]{0}', space=sflag, size = 0x4, scoped, tag = 'scoped memory for tpu_custom_call.1']
    #allocation10 [shape = 'u8[2048]{0}', space=vmem, size = 0x800, scoped, tag = 'input window, operand 4, single buffered']
    #allocation11 [shape = 'u8[131072]{0}', space=vmem, size = 0x20000, scoped, tag = 'input window, operand 5, single buffered']
    #allocation12 [shape = 's32[1]{0}', space=sflag, size = 0x4, scoped, tag = 'scoped memory for tpu_custom_call.1']
    #allocation13 [shape = 'u8[512]{0}', space=vmem, size = 0x400, scoped, tag = 'input window, operand 6, single buffered']
    #allocation14 [shape = 'u8[32768]{0}', space=vmem, size = 0x8000, scoped, tag = 'input window, operand 7, single buffered']
    #allocation15 [shape = 's32[1]{0}', space=sflag, size = 0x4, scoped, tag = 'scoped memory for tpu_custom_call.1']
    #allocation16 [shape = 'u8[512]{0}', space=vmem, size = 0x400, scoped, tag = 'input window, operand 8, single buffered']
    #allocation17 [shape = 'u8[4096]{0}', space=vmem, size = 0x1000, scoped, tag = 'output window, operand 0, single buffered']
    %14 = vsyncpa [#allocation3], 0
    %15 = vsyncpa [#allocation6], 0
    %16 = vsyncpa [#allocation9], 0
    %17 = vsyncpa [#allocation12], 0
    %18 = vsyncpa [#allocation15], 0
    %19 = vsyncpa [#allocation4], 0
    // Predicated region
    $region2: #{tpu_custom_call.1} parent=1 // pred_check
      _
    $region3: #{tpu_custom_call.1} parent=1 // pred_check_branch
      %21 = sbr.rel (0) target = $region5
    $region4: #{tpu_custom_call.1} parent=1 // pred_region
      %23 = vsyncadd [#allocation3], 0
      %s25 = sshll.u32 %s0, 4
      %s26 = int_to_ptr.hbm [resolvable:$true] %s25
      %s27 = sshll.u32 [#allocation2], 4
      %s28 = int_to_ptr.vmem [resolvable:$true] %s27
      %30 = dma.hbm_to_vmem [thread:$0]  %s26, 768, %s28, [#allocation3]
    $region5: #{tpu_custom_call.1} parent=1 // pred_fallthru
      _
    // Predicated region
    $region6: #{tpu_custom_call.1} parent=1 // pred_check
      _
    $region7: #{tpu_custom_call.1} parent=1 // pred_check_branch
      %32 = sbr.rel (0) target = $region9
    $region8: #{tpu_custom_call.1} parent=1 // pred_region
      %34 = vsyncadd [#allocation6], 0
      %s35 = sshll.u32 %s1, 4
      %s36 = int_to_ptr.hbm [resolvable:$true] %s35
      %s37 = sshll.u32 [#allocation5], 4
      %s38 = int_to_ptr.vmem [resolvable:$true] %s37
      %43 = dma.hbm_to_vmem [thread:$0]  %s36, 55296, %s38, [#allocation6], 576, 576, 36
    $region9: #{tpu_custom_call.1} parent=1 // pred_fallthru
      _
    // Predicated region
    $region10: #{tpu_custom_call.1} parent=1 // pred_check
      _
    $region11: #{tpu_custom_call.1} parent=1 // pred_check_branch
      %45 = sbr.rel (0) target = $region13
    $region12: #{tpu_custom_call.1} parent=1 // pred_region
      %47 = vsyncadd [#allocation6], 0
      %s49 = sshll.u32 %s2, 4
      %s50 = int_to_ptr.hbm [resolvable:$true] %s49
      %s51 = sshll.u32 [#allocation7], 4
      %s52 = int_to_ptr.vmem [resolvable:$true] %s51
      %54 = dma.hbm_to_vmem [thread:$0]  %s50, 144, %s52, [#allocation6]
    $region13: #{tpu_custom_call.1} parent=1 // pred_fallthru
      _
    // Predicated region
    $region14: #{tpu_custom_call.1} parent=1 // pred_check
      _
    $region15: #{tpu_custom_call.1} parent=1 // pred_check_branch
      %56 = sbr.rel (0) target = $region17
    $region16: #{tpu_custom_call.1} parent=1 // pred_region
      %58 = vsyncadd [#allocation9], 0
      %s59 = sshll.u32 %s3, 4
      %s60 = int_to_ptr.hbm [resolvable:$true] %s59
      %s61 = sshll.u32 [#allocation8], 4
      %s62 = int_to_ptr.vmem [resolvable:$true] %s61
      %67 = dma.hbm_to_vmem [thread:$0]  %s60, 36864, %s62, [#allocation9], 256, 256, 16
    $region17: #{tpu_custom_call.1} parent=1 // pred_fallthru
      _
    // Predicated region
    $region18: #{tpu_custom_call.1} parent=1 // pred_check
      _
    $region19: #{tpu_custom_call.1} parent=1 // pred_check_branch
      %69 = sbr.rel (0) target = $region21
    $region20: #{tpu_custom_call.1} parent=1 // pred_region
      %71 = vsyncadd [#allocation9], 0
      %s73 = sshll.u32 %s4, 4
      %s74 = int_to_ptr.hbm [resolvable:$true] %s73
      %s75 = sshll.u32 [#allocation10], 4
      %s76 = int_to_ptr.vmem [resolvable:$true] %s75
      %78 = dma.hbm_to_vmem [thread:$0]  %s74, 64, %s76, [#allocation9]
    $region21: #{tpu_custom_call.1} parent=1 // pred_fallthru
      _
    // Predicated region
    $region22: #{tpu_custom_call.1} parent=1 // pred_check
      _
    $region23: #{tpu_custom_call.1} parent=1 // pred_check_branch
      %80 = sbr.rel (0) target = $region25
    $region24: #{tpu_custom_call.1} parent=1 // pred_region
      %82 = vsyncadd [#allocation12], 0
      %s83 = sshll.u32 %s5, 4
      %s84 = int_to_ptr.hbm [resolvable:$true] %s83
      %s85 = sshll.u32 [#allocation11], 4
      %s86 = int_to_ptr.vmem [resolvable:$true] %s85
      %91 = dma.hbm_to_vmem [thread:$0]  %s84, 4096, %s86, [#allocation12], 64, 64, 4
    $region25: #{tpu_custom_call.1} parent=1 // pred_fallthru
      _
    // Predicated region
    $region26: #{tpu_custom_call.1} parent=1 // pred_check
      _
    $region27: #{tpu_custom_call.1} parent=1 // pred_check_branch
      %93 = sbr.rel (0) target = $region29
    $region28: #{tpu_custom_call.1} parent=1 // pred_region
      %95 = vsyncadd [#allocation12], 0
      %s97 = sshll.u32 %s6, 4
      %s98 = int_to_ptr.hbm [resolvable:$true] %s97
      %s99 = sshll.u32 [#allocation13], 4
      %s100 = int_to_ptr.vmem [resolvable:$true] %s99
      %102 = dma.hbm_to_vmem [thread:$0]  %s98, 16, %s100, [#allocation12]
    $region29: #{tpu_custom_call.1} parent=1 // pred_fallthru
      _
    // Predicated region
    $region30: #{tpu_custom_call.1} parent=1 // pred_check
      _
    $region31: #{tpu_custom_call.1} parent=1 // pred_check_branch
      %104 = sbr.rel (0) target = $region33
    $region32: #{tpu_custom_call.1} parent=1 // pred_region
      %106 = vsyncadd [#allocation15], 0
      %s107 = sshll.u32 %s7, 4
      %s108 = int_to_ptr.hbm [resolvable:$true] %s107
      %s109 = sshll.u32 [#allocation14], 4
      %s110 = int_to_ptr.vmem [resolvable:$true] %s109
      %115 = dma.hbm_to_vmem [thread:$0]  %s108, 1024, %s110, [#allocation15], 64, 64, 4
    $region33: #{tpu_custom_call.1} parent=1 // pred_fallthru
      _
    // Predicated region
    $region34: #{tpu_custom_call.1} parent=1 // pred_check
      _
    $region35: #{tpu_custom_call.1} parent=1 // pred_check_branch
      %117 = sbr.rel (0) target = $region37
    $region36: #{tpu_custom_call.1} parent=1 // pred_region
      %119 = vsyncadd [#allocation15], 0
      %s121 = sshll.u32 %s8, 4
      %s122 = int_to_ptr.hbm [resolvable:$true] %s121
      %s123 = sshll.u32 [#allocation16], 4
      %s124 = int_to_ptr.vmem [resolvable:$true] %s123
      %126 = dma.hbm_to_vmem [thread:$0]  %s122, 16, %s124, [#allocation15]
    $region37: #{tpu_custom_call.1} parent=1 // pred_fallthru
      _
    // Predicated region
    $region38: #{tpu_custom_call.1} parent=1 // pred_check
      _
    $region39: #{tpu_custom_call.1} parent=1 // pred_check_branch
      %128 = sbr.rel (0) target = $region41
    $region40: #{tpu_custom_call.1} parent=1 // pred_region
      %130 = dma.done [#allocation3], 768
    $region41: #{tpu_custom_call.1} parent=1 // pred_fallthru
      _
    // Predicated region
    $region42: #{tpu_custom_call.1} parent=1 // pred_check
      _
    $region43: #{tpu_custom_call.1} parent=1 // pred_check_branch
      %132 = sbr.rel (0) target = $region45
    $region44: #{tpu_custom_call.1} parent=1 // pred_region
      %134 = dma.done [#allocation6], 55296
    $region45: #{tpu_custom_call.1} parent=1 // pred_fallthru
      _
    // Predicated region
    $region46: #{tpu_custom_call.1} parent=1 // pred_check
      _
    $region47: #{tpu_custom_call.1} parent=1 // pred_check_branch
      %136 = sbr.rel (0) target = $region49
    $region48: #{tpu_custom_call.1} parent=1 // pred_region
      %138 = dma.done [#allocation6], 144
    $region49: #{tpu_custom_call.1} parent=1 // pred_fallthru
      _
    // Predicated region
    $region50: #{tpu_custom_call.1} parent=1 // pred_check
      _
    $region51: #{tpu_custom_call.1} parent=1 // pred_check_branch
      %140 = sbr.rel (0) target = $region53
    $region52: #{tpu_custom_call.1} parent=1 // pred_region
      %142 = dma.done [#allocation9], 36864
    $region53: #{tpu_custom_call.1} parent=1 // pred_fallthru
      _
    // Predicated region
    $region54: #{tpu_custom_call.1} parent=1 // pred_check
      _
    $region55: #{tpu_custom_call.1} parent=1 // pred_check_branch
      %144 = sbr.rel (0) target = $region57
    $region56: #{tpu_custom_call.1} parent=1 // pred_region
      %146 = dma.done [#allocation9], 64
    $region57: #{tpu_custom_call.1} parent=1 // pred_fallthru
      _
    // Predicated region
    $region58: #{tpu_custom_call.1} parent=1 // pred_check
      _
    $region59: #{tpu_custom_call.1} parent=1 // pred_check_branch
      %148 = sbr.rel (0) target = $region61
    $region60: #{tpu_custom_call.1} parent=1 // pred_region
      %150 = dma.done [#allocation12], 4096
    $region61: #{tpu_custom_call.1} parent=1 // pred_fallthru
      _
    // Predicated region
    $region62: #{tpu_custom_call.1} parent=1 // pred_check
      _
    $region63: #{tpu_custom_call.1} parent=1 // pred_check_branch
      %152 = sbr.rel (0) target = $region65
    $region64: #{tpu_custom_call.1} parent=1 // pred_region
      %154 = dma.done [#allocation12], 16
    $region65: #{tpu_custom_call.1} parent=1 // pred_fallthru
      _
    // Predicated region
    $region66: #{tpu_custom_call.1} parent=1 // pred_check
      _
    $region67: #{tpu_custom_call.1} parent=1 // pred_check_branch
      %156 = sbr.rel (0) target = $region69
    $region68: #{tpu_custom_call.1} parent=1 // pred_region
      %158 = dma.done [#allocation15], 1024
    $region69: #{tpu_custom_call.1} parent=1 // pred_fallthru
      _
    // Predicated region
    $region70: #{tpu_custom_call.1} parent=1 // pred_check
      _
    $region71: #{tpu_custom_call.1} parent=1 // pred_check_branch
      %160 = sbr.rel (0) target = $region73
    $region72: #{tpu_custom_call.1} parent=1 // pred_region
      %162 = dma.done [#allocation15], 16
    $region73: #{tpu_custom_call.1} parent=1 // pred_fallthru
      _
    %v163 = vld [vmem:[#allocation2] sm:$0xff]
    %v164 = vld [vmem:[#allocation2 + $0x8] sm:$0xff]
    %v165 = vld [vmem:[#allocation2 + $0x10] sm:$0xff]
    %v166 = vld [vmem:[#allocation2 + $0x18] sm:$0xff]
    %v167 = vld [vmem:[#allocation2 + $0x20] sm:$0xff]
    %v168 = vld [vmem:[#allocation2 + $0x28] sm:$0xff]
    %v169 = vpack.c.bf16 %v163, %v163
    %v170 = vpack.c.bf16 %v164, %v164
    %v171 = vpack.c.bf16 %v165, %v165
    %v172 = vpack.c.bf16 %v166, %v166
    %v173 = vpack.c.bf16 %v167, %v167
    %v174 = vpack.c.bf16 %v168, %v168
    %v175 = vld [vmem:[#allocation5] sm:$0xff]
    %v176 = vld [vmem:[#allocation5 + $0x8] sm:$0xff]
    %v177 = vld [vmem:[#allocation5 + $0x10] sm:$0xff]
    %v178 = vld [vmem:[#allocation5 + $0x18] sm:$0xff]
    %v179 = vld [vmem:[#allocation5 + $0x20] sm:$0xf]
    %v180 = vld [vmem:[#allocation5 + $0x24] sm:$0xff]
    %v181 = vld [vmem:[#allocation5 + $0x2c] sm:$0xff]
    %v182 = vld [vmem:[#allocation5 + $0x34] sm:$0xff]
    %v183 = vld [vmem:[#allocation5 + $0x3c] sm:$0xff]
    %v184 = vld [vmem:[#allocation5 + $0x44] sm:$0xf]
    %v185 = vld [vmem:[#allocation5 + $0x48] sm:$0xff]
    %v186 = vld [vmem:[#allocation5 + $0x50] sm:$0xff]
    %v187 = vld [vmem:[#allocation5 + $0x58] sm:$0xff]
    %v188 = vld [vmem:[#allocation5 + $0x60] sm:$0xff]
    %v189 = vld [vmem:[#allocation5 + $0x68] sm:$0xf]
    %v190 = vld [vmem:[#allocation5 + $0x6c] sm:$0xff]
    %v191 = vld [vmem:[#allocation5 + $0x74] sm:$0xff]
    %v192 = vld [vmem:[#allocation5 + $0x7c] sm:$0xff]
    %v193 = vld [vmem:[#allocation5 + $0x84] sm:$0xff]
    %v194 = vld [vmem:[#allocation5 + $0x8c] sm:$0xf]
    %v195 = vld [vmem:[#allocation5 + $0x90] sm:$0xff]
    %v196 = vld [vmem:[#allocation5 + $0x98] sm:$0xff]
    %v197 = vld [vmem:[#allocation5 + $0xa0] sm:$0xff]
    %v198 = vld [vmem:[#allocation5 + $0xa8] sm:$0xff]
    %v199 = vld [vmem:[#allocation5 + $0xb0] sm:$0xf]
    %v200 = vld [vmem:[#allocation5 + $0xb4] sm:$0xff]
    %v201 = vld [vmem:[#allocation5 + $0xbc] sm:$0xff]
    %v202 = vld [vmem:[#allocation5 + $0xc4] sm:$0xff]
    %v203 = vld [vmem:[#allocation5 + $0xcc] sm:$0xff]
    %v204 = vld [vmem:[#allocation5 + $0xd4] sm:$0xf]
    %v205 = vld [vmem:[#allocation5 + $0xd8] sm:$0xff]
    %v206 = vld [vmem:[#allocation5 + $0xe0] sm:$0xff]
    %v207 = vld [vmem:[#allocation5 + $0xe8] sm:$0xff]
    %v208 = vld [vmem:[#allocation5 + $0xf0] sm:$0xff]
    %v209 = vld [vmem:[#allocation5 + $0xf8] sm:$0xf]
    %v210 = vld [vmem:[#allocation5 + $0xfc] sm:$0xff]
    %v211 = vld [vmem:[#allocation5 + $0x104] sm:$0xff]
    %v212 = vld [vmem:[#allocation5 + $0x10c] sm:$0xff]
    %v213 = vld [vmem:[#allocation5 + $0x114] sm:$0xff]
    %v214 = vld [vmem:[#allocation5 + $0x11c] sm:$0xf]
    %v215 = vld [vmem:[#allocation5 + $0x120] sm:$0xff]
    %v216 = vld [vmem:[#allocation5 + $0x128] sm:$0xff]
    %v217 = vld [vmem:[#allocation5 + $0x130] sm:$0xff]
    %v218 = vld [vmem:[#allocation5 + $0x138] sm:$0xff]
    %v219 = vld [vmem:[#allocation5 + $0x140] sm:$0xf]
    %v220 = vld [vmem:[#allocation5 + $0x144] sm:$0xff]
    %v221 = vld [vmem:[#allocation5 + $0x14c] sm:$0xff]
    %v222 = vld [vmem:[#allocation5 + $0x154] sm:$0xff]
    %v223 = vld [vmem:[#allocation5 + $0x15c] sm:$0xff]
    %v224 = vld [vmem:[#allocation5 + $0x164] sm:$0xf]
    %v225 = vld [vmem:[#allocation5 + $0x168] sm:$0xff]
    %v226 = vld [vmem:[#allocation5 + $0x170] sm:$0xff]
    %v227 = vld [vmem:[#allocation5 + $0x178] sm:$0xff]
    %v228 = vld [vmem:[#allocation5 + $0x180] sm:$0xff]
    %v229 = vld [vmem:[#allocation5 + $0x188] sm:$0xf]
    %v230 = vld [vmem:[#allocation5 + $0x18c] sm:$0xff]
    %v231 = vld [vmem:[#allocation5 + $0x194] sm:$0xff]
    %v232 = vld [vmem:[#allocation5 + $0x19c] sm:$0xff]
    %v233 = vld [vmem:[#allocation5 + $0x1a4] sm:$0xff]
    %v234 = vld [vmem:[#allocation5 + $0x1ac] sm:$0xf]
    %v235 = vld [vmem:[#allocation5 + $0x1b0] sm:$0xff]
    %v236 = vld [vmem:[#allocation5 + $0x1b8] sm:$0xff]
    %v237 = vld [vmem:[#allocation5 + $0x1c0] sm:$0xff]
    %v238 = vld [vmem:[#allocation5 + $0x1c8] sm:$0xff]
    %v239 = vld [vmem:[#allocation5 + $0x1d0] sm:$0xf]
    %v240 = vld [vmem:[#allocation5 + $0x1d4] sm:$0xff]
    %v241 = vld [vmem:[#allocation5 + $0x1dc] sm:$0xff]
    %v242 = vld [vmem:[#allocation5 + $0x1e4] sm:$0xff]
    %v243 = vld [vmem:[#allocation5 + $0x1ec] sm:$0xff]
    %v244 = vld [vmem:[#allocation5 + $0x1f4] sm:$0xf]
    %v245 = vld [vmem:[#allocation5 + $0x1f8] sm:$0xff]
    %v246 = vld [vmem:[#allocation5 + $0x200] sm:$0xff]
    %v247 = vld [vmem:[#allocation5 + $0x208] sm:$0xff]
    %v248 = vld [vmem:[#allocation5 + $0x210] sm:$0xff]
    %v249 = vld [vmem:[#allocation5 + $0x218] sm:$0xf]
    %v250 = vld [vmem:[#allocation5 + $0x21c] sm:$0xff]
    %v251 = vld [vmem:[#allocation5 + $0x224] sm:$0xff]
    %v252 = vld [vmem:[#allocation5 + $0x22c] sm:$0xff]
    %v253 = vld [vmem:[#allocation5 + $0x234] sm:$0xff]
    %v254 = vld [vmem:[#allocation5 + $0x23c] sm:$0xf]
    %v255 = vld [vmem:[#allocation5 + $0x240] sm:$0xff]
    %v256 = vld [vmem:[#allocation5 + $0x248] sm:$0xff]
    %v257 = vld [vmem:[#allocation5 + $0x250] sm:$0xff]
    %v258 = vld [vmem:[#allocation5 + $0x258] sm:$0xff]
    %v259 = vld [vmem:[#allocation5 + $0x260] sm:$0xf]
    %v260 = vld [vmem:[#allocation5 + $0x264] sm:$0xff]
    %v261 = vld [vmem:[#allocation5 + $0x26c] sm:$0xff]
    %v262 = vld [vmem:[#allocation5 + $0x274] sm:$0xff]
    %v263 = vld [vmem:[#allocation5 + $0x27c] sm:$0xff]
    %v264 = vld [vmem:[#allocation5 + $0x284] sm:$0xf]
    %v265 = vld [vmem:[#allocation5 + $0x288] sm:$0xff]
    %v266 = vld [vmem:[#allocation5 + $0x290] sm:$0xff]
    %v267 = vld [vmem:[#allocation5 + $0x298] sm:$0xff]
    %v268 = vld [vmem:[#allocation5 + $0x2a0] sm:$0xff]
    %v269 = vld [vmem:[#allocation5 + $0x2a8] sm:$0xf]
    %v270 = vld [vmem:[#allocation5 + $0x2ac] sm:$0xff]
    %v271 = vld [vmem:[#allocation5 + $0x2b4] sm:$0xff]
    %v272 = vld [vmem:[#allocation5 + $0x2bc] sm:$0xff]
    %v273 = vld [vmem:[#allocation5 + $0x2c4] sm:$0xff]
    %v274 = vld [vmem:[#allocation5 + $0x2cc] sm:$0xf]
    %v275 = vld [vmem:[#allocation5 + $0x2d0] sm:$0xff]
    %v276 = vld [vmem:[#allocation5 + $0x2d8] sm:$0xff]
    %v277 = vld [vmem:[#allocation5 + $0x2e0] sm:$0xff]
    %v278 = vld [vmem:[#allocation5 + $0x2e8] sm:$0xff]
    %v279 = vld [vmem:[#allocation5 + $0x2f0] sm:$0xf]
    %v280 = vld [vmem:[#allocation5 + $0x2f4] sm:$0xff]
    %v281 = vld [vmem:[#allocation5 + $0x2fc] sm:$0xff]
    %v282 = vld [vmem:[#allocation5 + $0x304] sm:$0xff]
    %v283 = vld [vmem:[#allocation5 + $0x30c] sm:$0xff]
    %v284 = vld [vmem:[#allocation5 + $0x314] sm:$0xf]
    %v285 = vld [vmem:[#allocation5 + $0x318] sm:$0xff]
    %v286 = vld [vmem:[#allocation5 + $0x320] sm:$0xff]
    %v287 = vld [vmem:[#allocation5 + $0x328] sm:$0xff]
    %v288 = vld [vmem:[#allocation5 + $0x330] sm:$0xff]
    %v289 = vld [vmem:[#allocation5 + $0x338] sm:$0xf]
    %v290 = vld [vmem:[#allocation5 + $0x33c] sm:$0xff]
    %v291 = vld [vmem:[#allocation5 + $0x344] sm:$0xff]
    %v292 = vld [vmem:[#allocation5 + $0x34c] sm:$0xff]
    %v293 = vld [vmem:[#allocation5 + $0x354] sm:$0xff]
    %v294 = vld [vmem:[#allocation5 + $0x35c] sm:$0xf]
    %v295 = vld [vmem:[#allocation5 + $0x360] sm:$0xff]
    %v296 = vld [vmem:[#allocation5 + $0x368] sm:$0xff]
    %v297 = vld [vmem:[#allocation5 + $0x370] sm:$0xff]
    %v298 = vld [vmem:[#allocation5 + $0x378] sm:$0xff]
    %v299 = vld [vmem:[#allocation5 + $0x380] sm:$0xf]
    %v300 = vld [vmem:[#allocation5 + $0x384] sm:$0xff]
    %v301 = vld [vmem:[#allocation5 + $0x38c] sm:$0xff]
    %v302 = vld [vmem:[#allocation5 + $0x394] sm:$0xff]
    %v303 = vld [vmem:[#allocation5 + $0x39c] sm:$0xff]
    %v304 = vld [vmem:[#allocation5 + $0x3a4] sm:$0xf]
    %v305 = vld [vmem:[#allocation5 + $0x3a8] sm:$0xff]
    %v306 = vld [vmem:[#allocation5 + $0x3b0] sm:$0xff]
    %v307 = vld [vmem:[#allocation5 + $0x3b8] sm:$0xff]
    %v308 = vld [vmem:[#allocation5 + $0x3c0] sm:$0xff]
    %v309 = vld [vmem:[#allocation5 + $0x3c8] sm:$0xf]
    %v310 = vld [vmem:[#allocation5 + $0x3cc] sm:$0xff]
    %v311 = vld [vmem:[#allocation5 + $0x3d4] sm:$0xff]
    %v312 = vld [vmem:[#allocation5 + $0x3dc] sm:$0xff]
    %v313 = vld [vmem:[#allocation5 + $0x3e4] sm:$0xff]
    %v314 = vld [vmem:[#allocation5 + $0x3ec] sm:$0xf]
    %v315 = vld [vmem:[#allocation5 + $0x3f0] sm:$0xff]
    %v316 = vld [vmem:[#allocation5 + $0x3f8] sm:$0xff]
    %v317 = vld [vmem:[#allocation5 + $0x400] sm:$0xff]
    %v318 = vld [vmem:[#allocation5 + $0x408] sm:$0xff]
    %v319 = vld [vmem:[#allocation5 + $0x410] sm:$0xf]
    %v320 = vld [vmem:[#allocation5 + $0x414] sm:$0xff]
    %v321 = vld [vmem:[#allocation5 + $0x41c] sm:$0xff]
    %v322 = vld [vmem:[#allocation5 + $0x424] sm:$0xff]
    %v323 = vld [vmem:[#allocation5 + $0x42c] sm:$0xff]
    %v324 = vld [vmem:[#allocation5 + $0x434] sm:$0xf]
    %v325 = vld [vmem:[#allocation5 + $0x438] sm:$0xff]
    %v326 = vld [vmem:[#allocation5 + $0x440] sm:$0xff]
    %v327 = vld [vmem:[#allocation5 + $0x448] sm:$0xff]
    %v328 = vld [vmem:[#allocation5 + $0x450] sm:$0xff]
    %v329 = vld [vmem:[#allocation5 + $0x458] sm:$0xf]
    %v330 = vld [vmem:[#allocation5 + $0x45c] sm:$0xff]
    %v331 = vld [vmem:[#allocation5 + $0x464] sm:$0xff]
    %v332 = vld [vmem:[#allocation5 + $0x46c] sm:$0xff]
    %v333 = vld [vmem:[#allocation5 + $0x474] sm:$0xff]
    %v334 = vld [vmem:[#allocation5 + $0x47c] sm:$0xf]
    %v335 = vld [vmem:[#allocation5 + $0x480] sm:$0xff]
    %v336 = vld [vmem:[#allocation5 + $0x488] sm:$0xff]
    %v337 = vld [vmem:[#allocation5 + $0x490] sm:$0xff]
    %v338 = vld [vmem:[#allocation5 + $0x498] sm:$0xff]
    %v339 = vld [vmem:[#allocation5 + $0x4a0] sm:$0xf]
    %v340 = vld [vmem:[#allocation5 + $0x4a4] sm:$0xff]
    %v341 = vld [vmem:[#allocation5 + $0x4ac] sm:$0xff]
    %v342 = vld [vmem:[#allocation5 + $0x4b4] sm:$0xff]
    %v343 = vld [vmem:[#allocation5 + $0x4bc] sm:$0xff]
    %v344 = vld [vmem:[#allocation5 + $0x4c4] sm:$0xf]
    %v345 = vld [vmem:[#allocation5 + $0x4c8] sm:$0xff]
    %v346 = vld [vmem:[#allocation5 + $0x4d0] sm:$0xff]
    %v347 = vld [vmem:[#allocation5 + $0x4d8] sm:$0xff]
    %v348 = vld [vmem:[#allocation5 + $0x4e0] sm:$0xff]
    %v349 = vld [vmem:[#allocation5 + $0x4e8] sm:$0xf]
    %v350 = vld [vmem:[#allocation5 + $0x4ec] sm:$0xff]
    %v351 = vld [vmem:[#allocation5 + $0x4f4] sm:$0xff]
    %v352 = vld [vmem:[#allocation5 + $0x4fc] sm:$0xff]
    %v353 = vld [vmem:[#allocation5 + $0x504] sm:$0xff]
    %v354 = vld [vmem:[#allocation5 + $0x50c] sm:$0xf]
    %v355 = vld [vmem:[#allocation5 + $0x510] sm:$0xff]
    %v356 = vld [vmem:[#allocation5 + $0x518] sm:$0xff]
    %v357 = vld [vmem:[#allocation5 + $0x520] sm:$0xff]
    %v358 = vld [vmem:[#allocation5 + $0x528] sm:$0xff]
    %v359 = vld [vmem:[#allocation5 + $0x530] sm:$0xf]
    %v360 = vld [vmem:[#allocation5 + $0x534] sm:$0xff]
    %v361 = vld [vmem:[#allocation5 + $0x53c] sm:$0xff]
    %v362 = vld [vmem:[#allocation5 + $0x544] sm:$0xff]
    %v363 = vld [vmem:[#allocation5 + $0x54c] sm:$0xff]
    %v364 = vld [vmem:[#allocation5 + $0x554] sm:$0xf]
    %v365 = vld [vmem:[#allocation5 + $0x558] sm:$0xff]
    %v366 = vld [vmem:[#allocation5 + $0x560] sm:$0xff]
    %v367 = vld [vmem:[#allocation5 + $0x568] sm:$0xff]
    %v368 = vld [vmem:[#allocation5 + $0x570] sm:$0xff]
    %v369 = vld [vmem:[#allocation5 + $0x578] sm:$0xf]
    %v370 = vld [vmem:[#allocation5 + $0x57c] sm:$0xff]
    %v371 = vld [vmem:[#allocation5 + $0x584] sm:$0xff]
    %v372 = vld [vmem:[#allocation5 + $0x58c] sm:$0xff]
    %v373 = vld [vmem:[#allocation5 + $0x594] sm:$0xff]
    %v374 = vld [vmem:[#allocation5 + $0x59c] sm:$0xf]
    %v375 = vld [vmem:[#allocation5 + $0x5a0] sm:$0xff]
    %v376 = vld [vmem:[#allocation5 + $0x5a8] sm:$0xff]
    %v377 = vld [vmem:[#allocation5 + $0x5b0] sm:$0xff]
    %v378 = vld [vmem:[#allocation5 + $0x5b8] sm:$0xff]
    %v379 = vld [vmem:[#allocation5 + $0x5c0] sm:$0xf]
    %v380 = vld [vmem:[#allocation5 + $0x5c4] sm:$0xff]
    %v381 = vld [vmem:[#allocation5 + $0x5cc] sm:$0xff]
    %v382 = vld [vmem:[#allocation5 + $0x5d4] sm:$0xff]
    %v383 = vld [vmem:[#allocation5 + $0x5dc] sm:$0xff]
    %v384 = vld [vmem:[#allocation5 + $0x5e4] sm:$0xf]
    %v385 = vld [vmem:[#allocation5 + $0x5e8] sm:$0xff]
    %v386 = vld [vmem:[#allocation5 + $0x5f0] sm:$0xff]
    %v387 = vld [vmem:[#allocation5 + $0x5f8] sm:$0xff]
    %v388 = vld [vmem:[#allocation5 + $0x600] sm:$0xff]
    %v389 = vld [vmem:[#allocation5 + $0x608] sm:$0xf]
    %v390 = vld [vmem:[#allocation5 + $0x60c] sm:$0xff]
    %v391 = vld [vmem:[#allocation5 + $0x614] sm:$0xff]
    %v392 = vld [vmem:[#allocation5 + $0x61c] sm:$0xff]
    %v393 = vld [vmem:[#allocation5 + $0x624] sm:$0xff]
    %v394 = vld [vmem:[#allocation5 + $0x62c] sm:$0xf]
    %v395 = vld [vmem:[#allocation5 + $0x630] sm:$0xff]
    %v396 = vld [vmem:[#allocation5 + $0x638] sm:$0xff]
    %v397 = vld [vmem:[#allocation5 + $0x640] sm:$0xff]
    %v398 = vld [vmem:[#allocation5 + $0x648] sm:$0xff]
    %v399 = vld [vmem:[#allocation5 + $0x650] sm:$0xf]
    %v400 = vld [vmem:[#allocation5 + $0x654] sm:$0xff]
    %v401 = vld [vmem:[#allocation5 + $0x65c] sm:$0xff]
    %v402 = vld [vmem:[#allocation5 + $0x664] sm:$0xff]
    %v403 = vld [vmem:[#allocation5 + $0x66c] sm:$0xff]
    %v404 = vld [vmem:[#allocation5 + $0x674] sm:$0xf]
    %v405 = vld [vmem:[#allocation5 + $0x678] sm:$0xff]
    %v406 = vld [vmem:[#allocation5 + $0x680] sm:$0xff]
    %v407 = vld [vmem:[#allocation5 + $0x688] sm:$0xff]
    %v408 = vld [vmem:[#allocation5 + $0x690] sm:$0xff]
    %v409 = vld [vmem:[#allocation5 + $0x698] sm:$0xf]
    %v410 = vld [vmem:[#allocation5 + $0x69c] sm:$0xff]
    %v411 = vld [vmem:[#allocation5 + $0x6a4] sm:$0xff]
    %v412 = vld [vmem:[#allocation5 + $0x6ac] sm:$0xff]
    %v413 = vld [vmem:[#allocation5 + $0x6b4] sm:$0xff]
    %v414 = vld [vmem:[#allocation5 + $0x6bc] sm:$0xf]
    %v415 = vld [vmem:[#allocation5 + $0x6c0] sm:$0xff]
    %v416 = vld [vmem:[#allocation5 + $0x6c8] sm:$0xff]
    %v417 = vld [vmem:[#allocation5 + $0x6d0] sm:$0xff]
    %v418 = vld [vmem:[#allocation5 + $0x6d8] sm:$0xff]
    %v419 = vld [vmem:[#allocation5 + $0x6e0] sm:$0xf]
    %v420 = vld [vmem:[#allocation5 + $0x6e4] sm:$0xff]
    %v421 = vld [vmem:[#allocation5 + $0x6ec] sm:$0xff]
    %v422 = vld [vmem:[#allocation5 + $0x6f4] sm:$0xff]
    %v423 = vld [vmem:[#allocation5 + $0x6fc] sm:$0xff]
    %v424 = vld [vmem:[#allocation5 + $0x704] sm:$0xf]
    %v425 = vld [vmem:[#allocation5 + $0x708] sm:$0xff]
    %v426 = vld [vmem:[#allocation5 + $0x710] sm:$0xff]
    %v427 = vld [vmem:[#allocation5 + $0x718] sm:$0xff]
    %v428 = vld [vmem:[#allocation5 + $0x720] sm:$0xff]
    %v429 = vld [vmem:[#allocation5 + $0x728] sm:$0xf]
    %v430 = vld [vmem:[#allocation5 + $0x72c] sm:$0xff]
    %v431 = vld [vmem:[#allocation5 + $0x734] sm:$0xff]
    %v432 = vld [vmem:[#allocation5 + $0x73c] sm:$0xff]
    %v433 = vld [vmem:[#allocation5 + $0x744] sm:$0xff]
    %v434 = vld [vmem:[#allocation5 + $0x74c] sm:$0xf]
    %v435 = vld [vmem:[#allocation5 + $0x750] sm:$0xff]
    %v436 = vld [vmem:[#allocation5 + $0x758] sm:$0xff]
    %v437 = vld [vmem:[#allocation5 + $0x760] sm:$0xff]
    %v438 = vld [vmem:[#allocation5 + $0x768] sm:$0xff]
    %v439 = vld [vmem:[#allocation5 + $0x770] sm:$0xf]
    %v440 = vld [vmem:[#allocation5 + $0x774] sm:$0xff]
    %v441 = vld [vmem:[#allocation5 + $0x77c] sm:$0xff]
    %v442 = vld [vmem:[#allocation5 + $0x784] sm:$0xff]
    %v443 = vld [vmem:[#allocation5 + $0x78c] sm:$0xff]
    %v444 = vld [vmem:[#allocation5 + $0x794] sm:$0xf]
    %v445 = vld [vmem:[#allocation5 + $0x798] sm:$0xff]
    %v446 = vld [vmem:[#allocation5 + $0x7a0] sm:$0xff]
    %v447 = vld [vmem:[#allocation5 + $0x7a8] sm:$0xff]
    %v448 = vld [vmem:[#allocation5 + $0x7b0] sm:$0xff]
    %v449 = vld [vmem:[#allocation5 + $0x7b8] sm:$0xf]
    %v450 = vld [vmem:[#allocation5 + $0x7bc] sm:$0xff]
    %v451 = vld [vmem:[#allocation5 + $0x7c4] sm:$0xff]
    %v452 = vld [vmem:[#allocation5 + $0x7cc] sm:$0xff]
    %v453 = vld [vmem:[#allocation5 + $0x7d4] sm:$0xff]
    %v454 = vld [vmem:[#allocation5 + $0x7dc] sm:$0xf]
    %v455 = vld [vmem:[#allocation5 + $0x7e0] sm:$0xff]
    %v456 = vld [vmem:[#allocation5 + $0x7e8] sm:$0xff]
    %v457 = vld [vmem:[#allocation5 + $0x7f0] sm:$0xff]
    %v458 = vld [vmem:[#allocation5 + $0x7f8] sm:$0xff]
    %v459 = vld [vmem:[#allocation5 + $0x800] sm:$0xf]
    %v460 = vld [vmem:[#allocation5 + $0x804] sm:$0xff]
    %v461 = vld [vmem:[#allocation5 + $0x80c] sm:$0xff]
    %v462 = vld [vmem:[#allocation5 + $0x814] sm:$0xff]
    %v463 = vld [vmem:[#allocation5 + $0x81c] sm:$0xff]
    %v464 = vld [vmem:[#allocation5 + $0x824] sm:$0xf]
    %v465 = vld [vmem:[#allocation5 + $0x828] sm:$0xff]
    %v466 = vld [vmem:[#allocation5 + $0x830] sm:$0xff]
    %v467 = vld [vmem:[#allocation5 + $0x838] sm:$0xff]
    %v468 = vld [vmem:[#allocation5 + $0x840] sm:$0xff]
    %v469 = vld [vmem:[#allocation5 + $0x848] sm:$0xf]
    %v470 = vld [vmem:[#allocation5 + $0x84c] sm:$0xff]
    %v471 = vld [vmem:[#allocation5 + $0x854] sm:$0xff]
    %v472 = vld [vmem:[#allocation5 + $0x85c] sm:$0xff]
    %v473 = vld [vmem:[#allocation5 + $0x864] sm:$0xff]
    %v474 = vld [vmem:[#allocation5 + $0x86c] sm:$0xf]
    %v475 = vld [vmem:[#allocation5 + $0x870] sm:$0xff]
    %v476 = vld [vmem:[#allocation5 + $0x878] sm:$0xff]
    %v477 = vld [vmem:[#allocation5 + $0x880] sm:$0xff]
    %v478 = vld [vmem:[#allocation5 + $0x888] sm:$0xff]
    %v479 = vld [vmem:[#allocation5 + $0x890] sm:$0xf]
    %v480 = vld [vmem:[#allocation5 + $0x894] sm:$0xff]
    %v481 = vld [vmem:[#allocation5 + $0x89c] sm:$0xff]
    %v482 = vld [vmem:[#allocation5 + $0x8a4] sm:$0xff]
    %v483 = vld [vmem:[#allocation5 + $0x8ac] sm:$0xff]
    %v484 = vld [vmem:[#allocation5 + $0x8b4] sm:$0xf]
    %v485 = vld [vmem:[#allocation5 + $0x8b8] sm:$0xff]
    %v486 = vld [vmem:[#allocation5 + $0x8c0] sm:$0xff]
    %v487 = vld [vmem:[#allocation5 + $0x8c8] sm:$0xff]
    %v488 = vld [vmem:[#allocation5 + $0x8d0] sm:$0xff]
    %v489 = vld [vmem:[#allocation5 + $0x8d8] sm:$0xf]
    %v490 = vld [vmem:[#allocation5 + $0x8dc] sm:$0xff]
    %v491 = vld [vmem:[#allocation5 + $0x8e4] sm:$0xff]
    %v492 = vld [vmem:[#allocation5 + $0x8ec] sm:$0xff]
    %v493 = vld [vmem:[#allocation5 + $0x8f4] sm:$0xff]
    %v494 = vld [vmem:[#allocation5 + $0x8fc] sm:$0xf]
    %v495 = vld [vmem:[#allocation5 + $0x900] sm:$0xff]
    %v496 = vld [vmem:[#allocation5 + $0x908] sm:$0xff]
    %v497 = vld [vmem:[#allocation5 + $0x910] sm:$0xff]
    %v498 = vld [vmem:[#allocation5 + $0x918] sm:$0xff]
    %v499 = vld [vmem:[#allocation5 + $0x920] sm:$0xf]
    %v500 = vld [vmem:[#allocation5 + $0x924] sm:$0xff]
    %v501 = vld [vmem:[#allocation5 + $0x92c] sm:$0xff]
    %v502 = vld [vmem:[#allocation5 + $0x934] sm:$0xff]
    %v503 = vld [vmem:[#allocation5 + $0x93c] sm:$0xff]
    %v504 = vld [vmem:[#allocation5 + $0x944] sm:$0xf]
    %v505 = vld [vmem:[#allocation5 + $0x948] sm:$0xff]
    %v506 = vld [vmem:[#allocation5 + $0x950] sm:$0xff]
    %v507 = vld [vmem:[#allocation5 + $0x958] sm:$0xff]
    %v508 = vld [vmem:[#allocation5 + $0x960] sm:$0xff]
    %v509 = vld [vmem:[#allocation5 + $0x968] sm:$0xf]
    %v510 = vld [vmem:[#allocation5 + $0x96c] sm:$0xff]
    %v511 = vld [vmem:[#allocation5 + $0x974] sm:$0xff]
    %v512 = vld [vmem:[#allocation5 + $0x97c] sm:$0xff]
    %v513 = vld [vmem:[#allocation5 + $0x984] sm:$0xff]
    %v514 = vld [vmem:[#allocation5 + $0x98c] sm:$0xf]
    %v515 = vld [vmem:[#allocation5 + $0x990] sm:$0xff]
    %v516 = vld [vmem:[#allocation5 + $0x998] sm:$0xff]
    %v517 = vld [vmem:[#allocation5 + $0x9a0] sm:$0xff]
    %v518 = vld [vmem:[#allocation5 + $0x9a8] sm:$0xff]
    %v519 = vld [vmem:[#allocation5 + $0x9b0] sm:$0xf]
    %v520 = vld [vmem:[#allocation5 + $0x9b4] sm:$0xff]
    %v521 = vld [vmem:[#allocation5 + $0x9bc] sm:$0xff]
    %v522 = vld [vmem:[#allocation5 + $0x9c4] sm:$0xff]
    %v523 = vld [vmem:[#allocation5 + $0x9cc] sm:$0xff]
    %v524 = vld [vmem:[#allocation5 + $0x9d4] sm:$0xf]
    %v525 = vld [vmem:[#allocation5 + $0x9d8] sm:$0xff]
    %v526 = vld [vmem:[#allocation5 + $0x9e0] sm:$0xff]
    %v527 = vld [vmem:[#allocation5 + $0x9e8] sm:$0xff]
    %v528 = vld [vmem:[#allocation5 + $0x9f0] sm:$0xff]
    %v529 = vld [vmem:[#allocation5 + $0x9f8] sm:$0xf]
    %v530 = vld [vmem:[#allocation5 + $0x9fc] sm:$0xff]
    %v531 = vld [vmem:[#allocation5 + $0xa04] sm:$0xff]
    %v532 = vld [vmem:[#allocation5 + $0xa0c] sm:$0xff]
    %v533 = vld [vmem:[#allocation5 + $0xa14] sm:$0xff]
    %v534 = vld [vmem:[#allocation5 + $0xa1c] sm:$0xf]
    %v535 = vld [vmem:[#allocation5 + $0xa20] sm:$0xff]
    %v536 = vld [vmem:[#allocation5 + $0xa28] sm:$0xff]
    %v537 = vld [vmem:[#allocation5 + $0xa30] sm:$0xff]
    %v538 = vld [vmem:[#allocation5 + $0xa38] sm:$0xff]
    %v539 = vld [vmem:[#allocation5 + $0xa40] sm:$0xf]
    %v540 = vld [vmem:[#allocation5 + $0xa44] sm:$0xff]
    %v541 = vld [vmem:[#allocation5 + $0xa4c] sm:$0xff]
    %v542 = vld [vmem:[#allocation5 + $0xa54] sm:$0xff]
    %v543 = vld [vmem:[#allocation5 + $0xa5c] sm:$0xff]
    %v544 = vld [vmem:[#allocation5 + $0xa64] sm:$0xf]
    %v545 = vld [vmem:[#allocation5 + $0xa68] sm:$0xff]
    %v546 = vld [vmem:[#allocation5 + $0xa70] sm:$0xff]
    %v547 = vld [vmem:[#allocation5 + $0xa78] sm:$0xff]
    %v548 = vld [vmem:[#allocation5 + $0xa80] sm:$0xff]
    %v549 = vld [vmem:[#allocation5 + $0xa88] sm:$0xf]
    %v550 = vld [vmem:[#allocation5 + $0xa8c] sm:$0xff]
    %v551 = vld [vmem:[#allocation5 + $0xa94] sm:$0xff]
    %v552 = vld [vmem:[#allocation5 + $0xa9c] sm:$0xff]
    %v553 = vld [vmem:[#allocation5 + $0xaa4] sm:$0xff]
    %v554 = vld [vmem:[#allocation5 + $0xaac] sm:$0xf]
    %v555 = vld [vmem:[#allocation5 + $0xab0] sm:$0xff]
    %v556 = vld [vmem:[#allocation5 + $0xab8] sm:$0xff]
    %v557 = vld [vmem:[#allocation5 + $0xac0] sm:$0xff]
    %v558 = vld [vmem:[#allocation5 + $0xac8] sm:$0xff]
    %v559 = vld [vmem:[#allocation5 + $0xad0] sm:$0xf]
    %v560 = vld [vmem:[#allocation5 + $0xad4] sm:$0xff]
    %v561 = vld [vmem:[#allocation5 + $0xadc] sm:$0xff]
    %v562 = vld [vmem:[#allocation5 + $0xae4] sm:$0xff]
    %v563 = vld [vmem:[#allocation5 + $0xaec] sm:$0xff]
    %v564 = vld [vmem:[#allocation5 + $0xaf4] sm:$0xf]
    %v565 = vld [vmem:[#allocation5 + $0xaf8] sm:$0xff]
    %v566 = vld [vmem:[#allocation5 + $0xb00] sm:$0xff]
    %v567 = vld [vmem:[#allocation5 + $0xb08] sm:$0xff]
    %v568 = vld [vmem:[#allocation5 + $0xb10] sm:$0xff]
    %v569 = vld [vmem:[#allocation5 + $0xb18] sm:$0xf]
    %v570 = vld [vmem:[#allocation5 + $0xb1c] sm:$0xff]
    %v571 = vld [vmem:[#allocation5 + $0xb24] sm:$0xff]
    %v572 = vld [vmem:[#allocation5 + $0xb2c] sm:$0xff]
    %v573 = vld [vmem:[#allocation5 + $0xb34] sm:$0xff]
    %v574 = vld [vmem:[#allocation5 + $0xb3c] sm:$0xf]
    %v575 = vld [vmem:[#allocation5 + $0xb40] sm:$0xff]
    %v576 = vld [vmem:[#allocation5 + $0xb48] sm:$0xff]
    %v577 = vld [vmem:[#allocation5 + $0xb50] sm:$0xff]
    %v578 = vld [vmem:[#allocation5 + $0xb58] sm:$0xff]
    %v579 = vld [vmem:[#allocation5 + $0xb60] sm:$0xf]
    %v580 = vld [vmem:[#allocation5 + $0xb64] sm:$0xff]
    %v581 = vld [vmem:[#allocation5 + $0xb6c] sm:$0xff]
    %v582 = vld [vmem:[#allocation5 + $0xb74] sm:$0xff]
    %v583 = vld [vmem:[#allocation5 + $0xb7c] sm:$0xff]
    %v584 = vld [vmem:[#allocation5 + $0xb84] sm:$0xf]
    %v585 = vld [vmem:[#allocation5 + $0xb88] sm:$0xff]
    %v586 = vld [vmem:[#allocation5 + $0xb90] sm:$0xff]
    %v587 = vld [vmem:[#allocation5 + $0xb98] sm:$0xff]
    %v588 = vld [vmem:[#allocation5 + $0xba0] sm:$0xff]
    %v589 = vld [vmem:[#allocation5 + $0xba8] sm:$0xf]
    %v590 = vld [vmem:[#allocation5 + $0xbac] sm:$0xff]
    %v591 = vld [vmem:[#allocation5 + $0xbb4] sm:$0xff]
    %v592 = vld [vmem:[#allocation5 + $0xbbc] sm:$0xff]
    %v593 = vld [vmem:[#allocation5 + $0xbc4] sm:$0xff]
    %v594 = vld [vmem:[#allocation5 + $0xbcc] sm:$0xf]
    %v595 = vld [vmem:[#allocation5 + $0xbd0] sm:$0xff]
    %v596 = vld [vmem:[#allocation5 + $0xbd8] sm:$0xff]
    %v597 = vld [vmem:[#allocation5 + $0xbe0] sm:$0xff]
    %v598 = vld [vmem:[#allocation5 + $0xbe8] sm:$0xff]
    %v599 = vld [vmem:[#allocation5 + $0xbf0] sm:$0xf]
    %v600 = vld [vmem:[#allocation5 + $0xbf4] sm:$0xff]
    %v601 = vld [vmem:[#allocation5 + $0xbfc] sm:$0xff]
    %v602 = vld [vmem:[#allocation5 + $0xc04] sm:$0xff]
    %v603 = vld [vmem:[#allocation5 + $0xc0c] sm:$0xff]
    %v604 = vld [vmem:[#allocation5 + $0xc14] sm:$0xf]
    %v605 = vld [vmem:[#allocation5 + $0xc18] sm:$0xff]
    %v606 = vld [vmem:[#allocation5 + $0xc20] sm:$0xff]
    %v607 = vld [vmem:[#allocation5 + $0xc28] sm:$0xff]
    %v608 = vld [vmem:[#allocation5 + $0xc30] sm:$0xff]
    %v609 = vld [vmem:[#allocation5 + $0xc38] sm:$0xf]
    %v610 = vld [vmem:[#allocation5 + $0xc3c] sm:$0xff]
    %v611 = vld [vmem:[#allocation5 + $0xc44] sm:$0xff]
    %v612 = vld [vmem:[#allocation5 + $0xc4c] sm:$0xff]
    %v613 = vld [vmem:[#allocation5 + $0xc54] sm:$0xff]
    %v614 = vld [vmem:[#allocation5 + $0xc5c] sm:$0xf]
    %v615 = vld [vmem:[#allocation5 + $0xc60] sm:$0xff]
    %v616 = vld [vmem:[#allocation5 + $0xc68] sm:$0xff]
    %v617 = vld [vmem:[#allocation5 + $0xc70] sm:$0xff]
    %v618 = vld [vmem:[#allocation5 + $0xc78] sm:$0xff]
    %v619 = vld [vmem:[#allocation5 + $0xc80] sm:$0xf]
    %v620 = vld [vmem:[#allocation5 + $0xc84] sm:$0xff]
    %v621 = vld [vmem:[#allocation5 + $0xc8c] sm:$0xff]
    %v622 = vld [vmem:[#allocation5 + $0xc94] sm:$0xff]
    %v623 = vld [vmem:[#allocation5 + $0xc9c] sm:$0xff]
    %v624 = vld [vmem:[#allocation5 + $0xca4] sm:$0xf]
    %v625 = vld [vmem:[#allocation5 + $0xca8] sm:$0xff]
    %v626 = vld [vmem:[#allocation5 + $0xcb0] sm:$0xff]
    %v627 = vld [vmem:[#allocation5 + $0xcb8] sm:$0xff]
    %v628 = vld [vmem:[#allocation5 + $0xcc0] sm:$0xff]
    %v629 = vld [vmem:[#allocation5 + $0xcc8] sm:$0xf]
    %v630 = vld [vmem:[#allocation5 + $0xccc] sm:$0xff]
    %v631 = vld [vmem:[#allocation5 + $0xcd4] sm:$0xff]
    %v632 = vld [vmem:[#allocation5 + $0xcdc] sm:$0xff]
    %v633 = vld [vmem:[#allocation5 + $0xce4] sm:$0xff]
    %v634 = vld [vmem:[#allocation5 + $0xcec] sm:$0xf]
    %v635 = vld [vmem:[#allocation5 + $0xcf0] sm:$0xff]
    %v636 = vld [vmem:[#allocation5 + $0xcf8] sm:$0xff]
    %v637 = vld [vmem:[#allocation5 + $0xd00] sm:$0xff]
    %v638 = vld [vmem:[#allocation5 + $0xd08] sm:$0xff]
    %v639 = vld [vmem:[#allocation5 + $0xd10] sm:$0xf]
    %v640 = vld [vmem:[#allocation5 + $0xd14] sm:$0xff]
    %v641 = vld [vmem:[#allocation5 + $0xd1c] sm:$0xff]
    %v642 = vld [vmem:[#allocation5 + $0xd24] sm:$0xff]
    %v643 = vld [vmem:[#allocation5 + $0xd2c] sm:$0xff]
    %v644 = vld [vmem:[#allocation5 + $0xd34] sm:$0xf]
    %v645 = vld [vmem:[#allocation5 + $0xd38] sm:$0xff]
    %v646 = vld [vmem:[#allocation5 + $0xd40] sm:$0xff]
    %v647 = vld [vmem:[#allocation5 + $0xd48] sm:$0xff]
    %v648 = vld [vmem:[#allocation5 + $0xd50] sm:$0xff]
    %v649 = vld [vmem:[#allocation5 + $0xd58] sm:$0xf]
    %v650 = vld [vmem:[#allocation5 + $0xd5c] sm:$0xff]
    %v651 = vld [vmem:[#allocation5 + $0xd64] sm:$0xff]
    %v652 = vld [vmem:[#allocation5 + $0xd6c] sm:$0xff]
    %v653 = vld [vmem:[#allocation5 + $0xd74] sm:$0xff]
    %v654 = vld [vmem:[#allocation5 + $0xd7c] sm:$0xf]
    %v655 = vld [vmem:[#allocation7] sm:$0xff]
    %v656 = vld [vmem:[#allocation7 + $0x8] sm:$0x1]
    %v659 = vperm.slane %v655, 0
    %v660 = vperm.slane %v655, 1
    %v661 = vperm.slane %v655, 2
    %v662 = vperm.slane %v655, 3
    %v663 = vperm.slane %v655, 4
    %v664 = vperm.slane %v655, 5
    %v665 = vperm.slane %v655, 6
    %v666 = vperm.slane %v655, 7
    %v667 = vperm.slane %v656, 0
    %v1157 = vunpack.c.l.b16 %v175
    %v1158 = vunpack.c.h.b16 %v175
    %v1159 = vunpack.c.l.b16 %v176
    %v1160 = vunpack.c.h.b16 %v176
    %v1161 = vunpack.c.l.b16 %v177
    %v1162 = vunpack.c.h.b16 %v177
    %v1163 = vunpack.c.l.b16 %v178
    %v1164 = vunpack.c.h.b16 %v178
    %v1165 = vunpack.c.l.b16 %v179
    %v1166 = vunpack.c.l.b16 %v180
    %v1167 = vunpack.c.h.b16 %v180
    %v1168 = vunpack.c.l.b16 %v181
    %v1169 = vunpack.c.h.b16 %v181
    %v1170 = vunpack.c.l.b16 %v182
    %v1171 = vunpack.c.h.b16 %v182
    %v1172 = vunpack.c.l.b16 %v183
    %v1173 = vunpack.c.h.b16 %v183
    %v1174 = vunpack.c.l.b16 %v184
    %v1175 = vunpack.c.l.b16 %v185
    %v1176 = vunpack.c.h.b16 %v185
    %v1177 = vunpack.c.l.b16 %v186
    %v1178 = vunpack.c.h.b16 %v186
    %v1179 = vunpack.c.l.b16 %v187
    %v1180 = vunpack.c.h.b16 %v187
    %v1181 = vunpack.c.l.b16 %v188
    %v1182 = vunpack.c.h.b16 %v188
    %v1183 = vunpack.c.l.b16 %v189
    %v1184 = vunpack.c.l.b16 %v190
    %v1185 = vunpack.c.h.b16 %v190
    %v1186 = vunpack.c.l.b16 %v191
    %v1187 = vunpack.c.h.b16 %v191
    %v1188 = vunpack.c.l.b16 %v192
    %v1189 = vunpack.c.h.b16 %v192
    %v1190 = vunpack.c.l.b16 %v193
    %v1191 = vunpack.c.h.b16 %v193
    %v1192 = vunpack.c.l.b16 %v194
    %v1193 = vunpack.c.l.b16 %v195
    %v1194 = vunpack.c.h.b16 %v195
    %v1195 = vunpack.c.l.b16 %v196
    %v1196 = vunpack.c.h.b16 %v196
    %v1197 = vunpack.c.l.b16 %v197
    %v1198 = vunpack.c.h.b16 %v197
    %v1199 = vunpack.c.l.b16 %v198
    %v1200 = vunpack.c.h.b16 %v198
    %v1201 = vunpack.c.l.b16 %v199
    %v1202 = vunpack.c.l.b16 %v200
    %v1203 = vunpack.c.h.b16 %v200
    %v1204 = vunpack.c.l.b16 %v201
    %v1205 = vunpack.c.h.b16 %v201
    %v1206 = vunpack.c.l.b16 %v202
    %v1207 = vunpack.c.h.b16 %v202
    %v1208 = vunpack.c.l.b16 %v203
    %v1209 = vunpack.c.h.b16 %v203
    %v1210 = vunpack.c.l.b16 %v204
    %v1211 = vunpack.c.l.b16 %v205
    %v1212 = vunpack.c.h.b16 %v205
    %v1213 = vunpack.c.l.b16 %v206
    %v1214 = vunpack.c.h.b16 %v206
    %v1215 = vunpack.c.l.b16 %v207
    %v1216 = vunpack.c.h.b16 %v207
    %v1217 = vunpack.c.l.b16 %v208
    %v1218 = vunpack.c.h.b16 %v208
    %v1219 = vunpack.c.l.b16 %v209
    %v1220 = vunpack.c.l.b16 %v210
    %v1221 = vunpack.c.h.b16 %v210
    %v1222 = vunpack.c.l.b16 %v211
    %v1223 = vunpack.c.h.b16 %v211
    %v1224 = vunpack.c.l.b16 %v212
    %v1225 = vunpack.c.h.b16 %v212
    %v1226 = vunpack.c.l.b16 %v213
    %v1227 = vunpack.c.h.b16 %v213
    %v1228 = vunpack.c.l.b16 %v214
    %v1229 = vunpack.c.l.b16 %v215
    %v1230 = vunpack.c.h.b16 %v215
    %v1231 = vunpack.c.l.b16 %v216
    %v1232 = vunpack.c.h.b16 %v216
    %v1233 = vunpack.c.l.b16 %v217
    %v1234 = vunpack.c.h.b16 %v217
    %v1235 = vunpack.c.l.b16 %v218
    %v1236 = vunpack.c.h.b16 %v218
    %v1237 = vunpack.c.l.b16 %v219
    %v1238 = vunpack.c.l.b16 %v220
    %v1239 = vunpack.c.h.b16 %v220
    %v1240 = vunpack.c.l.b16 %v221
    %v1241 = vunpack.c.h.b16 %v221
    %v1242 = vunpack.c.l.b16 %v222
    %v1243 = vunpack.c.h.b16 %v222
    %v1244 = vunpack.c.l.b16 %v223
    %v1245 = vunpack.c.h.b16 %v223
    %v1246 = vunpack.c.l.b16 %v224
    %v1247 = vunpack.c.l.b16 %v225
    %v1248 = vunpack.c.h.b16 %v225
    %v1249 = vunpack.c.l.b16 %v226
    %v1250 = vunpack.c.h.b16 %v226
    %v1251 = vunpack.c.l.b16 %v227
    %v1252 = vunpack.c.h.b16 %v227
    %v1253 = vunpack.c.l.b16 %v228
    %v1254 = vunpack.c.h.b16 %v228
    %v1255 = vunpack.c.l.b16 %v229
    %v1256 = vunpack.c.l.b16 %v230
    %v1257 = vunpack.c.h.b16 %v230
    %v1258 = vunpack.c.l.b16 %v231
    %v1259 = vunpack.c.h.b16 %v231
    %v1260 = vunpack.c.l.b16 %v232
    %v1261 = vunpack.c.h.b16 %v232
    %v1262 = vunpack.c.l.b16 %v233
    %v1263 = vunpack.c.h.b16 %v233
    %v1264 = vunpack.c.l.b16 %v234
    %v1265 = vunpack.c.l.b16 %v235
    %v1266 = vunpack.c.h.b16 %v235
    %v1267 = vunpack.c.l.b16 %v236
    %v1268 = vunpack.c.h.b16 %v236
    %v1269 = vunpack.c.l.b16 %v237
    %v1270 = vunpack.c.h.b16 %v237
    %v1271 = vunpack.c.l.b16 %v238
    %v1272 = vunpack.c.h.b16 %v238
    %v1273 = vunpack.c.l.b16 %v239
    %v1274 = vunpack.c.l.b16 %v240
    %v1275 = vunpack.c.h.b16 %v240
    %v1276 = vunpack.c.l.b16 %v241
    %v1277 = vunpack.c.h.b16 %v241
    %v1278 = vunpack.c.l.b16 %v242
    %v1279 = vunpack.c.h.b16 %v242
    %v1280 = vunpack.c.l.b16 %v243
    %v1281 = vunpack.c.h.b16 %v243
    %v1282 = vunpack.c.l.b16 %v244
    %v1283 = vunpack.c.l.b16 %v245
    %v1284 = vunpack.c.h.b16 %v245
    %v1285 = vunpack.c.l.b16 %v246
    %v1286 = vunpack.c.h.b16 %v246
    %v1287 = vunpack.c.l.b16 %v247
    %v1288 = vunpack.c.h.b16 %v247
    %v1289 = vunpack.c.l.b16 %v248
    %v1290 = vunpack.c.h.b16 %v248
    %v1291 = vunpack.c.l.b16 %v249
    %v1292 = vunpack.c.l.b16 %v250
    %v1293 = vunpack.c.h.b16 %v250
    %v1294 = vunpack.c.l.b16 %v251
    %v1295 = vunpack.c.h.b16 %v251
    %v1296 = vunpack.c.l.b16 %v252
    %v1297 = vunpack.c.h.b16 %v252
    %v1298 = vunpack.c.l.b16 %v253
    %v1299 = vunpack.c.h.b16 %v253
    %v1300 = vunpack.c.l.b16 %v254
    %v1301 = vunpack.c.l.b16 %v255
    %v1302 = vunpack.c.h.b16 %v255
    %v1303 = vunpack.c.l.b16 %v256
    %v1304 = vunpack.c.h.b16 %v256
    %v1305 = vunpack.c.l.b16 %v257
    %v1306 = vunpack.c.h.b16 %v257
    %v1307 = vunpack.c.l.b16 %v258
    %v1308 = vunpack.c.h.b16 %v258
    %v1309 = vunpack.c.l.b16 %v259
    %v1310 = vunpack.c.l.b16 %v260
    %v1311 = vunpack.c.h.b16 %v260
    %v1312 = vunpack.c.l.b16 %v261
    %v1313 = vunpack.c.h.b16 %v261
    %v1314 = vunpack.c.l.b16 %v262
    %v1315 = vunpack.c.h.b16 %v262
    %v1316 = vunpack.c.l.b16 %v263
    %v1317 = vunpack.c.h.b16 %v263
    %v1318 = vunpack.c.l.b16 %v264
    %v1319 = vunpack.c.l.b16 %v265
    %v1320 = vunpack.c.h.b16 %v265
    %v1321 = vunpack.c.l.b16 %v266
    %v1322 = vunpack.c.h.b16 %v266
    %v1323 = vunpack.c.l.b16 %v267
    %v1324 = vunpack.c.h.b16 %v267
    %v1325 = vunpack.c.l.b16 %v268
    %v1326 = vunpack.c.h.b16 %v268
    %v1327 = vunpack.c.l.b16 %v269
    %v1328 = vunpack.c.l.b16 %v270
    %v1329 = vunpack.c.h.b16 %v270
    %v1330 = vunpack.c.l.b16 %v271
    %v1331 = vunpack.c.h.b16 %v271
    %v1332 = vunpack.c.l.b16 %v272
    %v1333 = vunpack.c.h.b16 %v272
    %v1334 = vunpack.c.l.b16 %v273
    %v1335 = vunpack.c.h.b16 %v273
    %v1336 = vunpack.c.l.b16 %v274
    %v1337 = vunpack.c.l.b16 %v275
    %v1338 = vunpack.c.h.b16 %v275
    %v1339 = vunpack.c.l.b16 %v276
    %v1340 = vunpack.c.h.b16 %v276
    %v1341 = vunpack.c.l.b16 %v277
    %v1342 = vunpack.c.h.b16 %v277
    %v1343 = vunpack.c.l.b16 %v278
    %v1344 = vunpack.c.h.b16 %v278
    %v1345 = vunpack.c.l.b16 %v279
    %v1346 = vunpack.c.l.b16 %v280
    %v1347 = vunpack.c.h.b16 %v280
    %v1348 = vunpack.c.l.b16 %v281
    %v1349 = vunpack.c.h.b16 %v281
    %v1350 = vunpack.c.l.b16 %v282
    %v1351 = vunpack.c.h.b16 %v282
    %v1352 = vunpack.c.l.b16 %v283
    %v1353 = vunpack.c.h.b16 %v283
    %v1354 = vunpack.c.l.b16 %v284
    %v1355 = vunpack.c.l.b16 %v285
    %v1356 = vunpack.c.h.b16 %v285
    %v1357 = vunpack.c.l.b16 %v286
    %v1358 = vunpack.c.h.b16 %v286
    %v1359 = vunpack.c.l.b16 %v287
    %v1360 = vunpack.c.h.b16 %v287
    %v1361 = vunpack.c.l.b16 %v288
    %v1362 = vunpack.c.h.b16 %v288
    %v1363 = vunpack.c.l.b16 %v289
    %v1364 = vunpack.c.l.b16 %v290
    %v1365 = vunpack.c.h.b16 %v290
    %v1366 = vunpack.c.l.b16 %v291
    %v1367 = vunpack.c.h.b16 %v291
    %v1368 = vunpack.c.l.b16 %v292
    %v1369 = vunpack.c.h.b16 %v292
    %v1370 = vunpack.c.l.b16 %v293
    %v1371 = vunpack.c.h.b16 %v293
    %v1372 = vunpack.c.l.b16 %v294
    %v1373 = vunpack.c.l.b16 %v295
    %v1374 = vunpack.c.h.b16 %v295
    %v1375 = vunpack.c.l.b16 %v296
    %v1376 = vunpack.c.h.b16 %v296
    %v1377 = vunpack.c.l.b16 %v297
    %v1378 = vunpack.c.h.b16 %v297
    %v1379 = vunpack.c.l.b16 %v298
    %v1380 = vunpack.c.h.b16 %v298
    %v1381 = vunpack.c.l.b16 %v299
    %v1382 = vunpack.c.l.b16 %v300
    %v1383 = vunpack.c.h.b16 %v300
    %v1384 = vunpack.c.l.b16 %v301
    %v1385 = vunpack.c.h.b16 %v301
    %v1386 = vunpack.c.l.b16 %v302
    %v1387 = vunpack.c.h.b16 %v302
    %v1388 = vunpack.c.l.b16 %v303
    %v1389 = vunpack.c.h.b16 %v303
    %v1390 = vunpack.c.l.b16 %v304
    %v1391 = vunpack.c.l.b16 %v305
    %v1392 = vunpack.c.h.b16 %v305
    %v1393 = vunpack.c.l.b16 %v306
    %v1394 = vunpack.c.h.b16 %v306
    %v1395 = vunpack.c.l.b16 %v307
    %v1396 = vunpack.c.h.b16 %v307
    %v1397 = vunpack.c.l.b16 %v308
    %v1398 = vunpack.c.h.b16 %v308
    %v1399 = vunpack.c.l.b16 %v309
    %v1400 = vunpack.c.l.b16 %v310
    %v1401 = vunpack.c.h.b16 %v310
    %v1402 = vunpack.c.l.b16 %v311
    %v1403 = vunpack.c.h.b16 %v311
    %v1404 = vunpack.c.l.b16 %v312
    %v1405 = vunpack.c.h.b16 %v312
    %v1406 = vunpack.c.l.b16 %v313
    %v1407 = vunpack.c.h.b16 %v313
    %v1408 = vunpack.c.l.b16 %v314
    %v1409 = vunpack.c.l.b16 %v315
    %v1410 = vunpack.c.h.b16 %v315
    %v1411 = vunpack.c.l.b16 %v316
    %v1412 = vunpack.c.h.b16 %v316
    %v1413 = vunpack.c.l.b16 %v317
    %v1414 = vunpack.c.h.b16 %v317
    %v1415 = vunpack.c.l.b16 %v318
    %v1416 = vunpack.c.h.b16 %v318
    %v1417 = vunpack.c.l.b16 %v319
    %v1418 = vunpack.c.l.b16 %v320
    %v1419 = vunpack.c.h.b16 %v320
    %v1420 = vunpack.c.l.b16 %v321
    %v1421 = vunpack.c.h.b16 %v321
    %v1422 = vunpack.c.l.b16 %v322
    %v1423 = vunpack.c.h.b16 %v322
    %v1424 = vunpack.c.l.b16 %v323
    %v1425 = vunpack.c.h.b16 %v323
    %v1426 = vunpack.c.l.b16 %v324
    %v1427 = vunpack.c.l.b16 %v325
    %v1428 = vunpack.c.h.b16 %v325
    %v1429 = vunpack.c.l.b16 %v326
    %v1430 = vunpack.c.h.b16 %v326
    %v1431 = vunpack.c.l.b16 %v327
    %v1432 = vunpack.c.h.b16 %v327
    %v1433 = vunpack.c.l.b16 %v328
    %v1434 = vunpack.c.h.b16 %v328
    %v1435 = vunpack.c.l.b16 %v329
    %v1436 = vunpack.c.l.b16 %v330
    %v1437 = vunpack.c.h.b16 %v330
    %v1438 = vunpack.c.l.b16 %v331
    %v1439 = vunpack.c.h.b16 %v331
    %v1440 = vunpack.c.l.b16 %v332
    %v1441 = vunpack.c.h.b16 %v332
    %v1442 = vunpack.c.l.b16 %v333
    %v1443 = vunpack.c.h.b16 %v333
    %v1444 = vunpack.c.l.b16 %v334
    %v1445 = vunpack.c.l.b16 %v335
    %v1446 = vunpack.c.h.b16 %v335
    %v1447 = vunpack.c.l.b16 %v336
    %v1448 = vunpack.c.h.b16 %v336
    %v1449 = vunpack.c.l.b16 %v337
    %v1450 = vunpack.c.h.b16 %v337
    %v1451 = vunpack.c.l.b16 %v338
    %v1452 = vunpack.c.h.b16 %v338
    %v1453 = vunpack.c.l.b16 %v339
    %v1454 = vunpack.c.l.b16 %v340
    %v1455 = vunpack.c.h.b16 %v340
    %v1456 = vunpack.c.l.b16 %v341
    %v1457 = vunpack.c.h.b16 %v341
    %v1458 = vunpack.c.l.b16 %v342
    %v1459 = vunpack.c.h.b16 %v342
    %v1460 = vunpack.c.l.b16 %v343
    %v1461 = vunpack.c.h.b16 %v343
    %v1462 = vunpack.c.l.b16 %v344
    %v1463 = vunpack.c.l.b16 %v345
    %v1464 = vunpack.c.h.b16 %v345
    %v1465 = vunpack.c.l.b16 %v346
    %v1466 = vunpack.c.h.b16 %v346
    %v1467 = vunpack.c.l.b16 %v347
    %v1468 = vunpack.c.h.b16 %v347
    %v1469 = vunpack.c.l.b16 %v348
    %v1470 = vunpack.c.h.b16 %v348
    %v1471 = vunpack.c.l.b16 %v349
    %v1472 = vunpack.c.l.b16 %v350
    %v1473 = vunpack.c.h.b16 %v350
    %v1474 = vunpack.c.l.b16 %v351
    %v1475 = vunpack.c.h.b16 %v351
    %v1476 = vunpack.c.l.b16 %v352
    %v1477 = vunpack.c.h.b16 %v352
    %v1478 = vunpack.c.l.b16 %v353
    %v1479 = vunpack.c.h.b16 %v353
    %v1480 = vunpack.c.l.b16 %v354
    %v1481 = vunpack.c.l.b16 %v355
    %v1482 = vunpack.c.h.b16 %v355
    %v1483 = vunpack.c.l.b16 %v356
    %v1484 = vunpack.c.h.b16 %v356
    %v1485 = vunpack.c.l.b16 %v357
    %v1486 = vunpack.c.h.b16 %v357
    %v1487 = vunpack.c.l.b16 %v358
    %v1488 = vunpack.c.h.b16 %v358
    %v1489 = vunpack.c.l.b16 %v359
    %v1490 = vunpack.c.l.b16 %v360
    %v1491 = vunpack.c.h.b16 %v360
    %v1492 = vunpack.c.l.b16 %v361
    %v1493 = vunpack.c.h.b16 %v361
    %v1494 = vunpack.c.l.b16 %v362
    %v1495 = vunpack.c.h.b16 %v362
    %v1496 = vunpack.c.l.b16 %v363
    %v1497 = vunpack.c.h.b16 %v363
    %v1498 = vunpack.c.l.b16 %v364
    %v1499 = vunpack.c.l.b16 %v365
    %v1500 = vunpack.c.h.b16 %v365
    %v1501 = vunpack.c.l.b16 %v366
    %v1502 = vunpack.c.h.b16 %v366
    %v1503 = vunpack.c.l.b16 %v367
    %v1504 = vunpack.c.h.b16 %v367
    %v1505 = vunpack.c.l.b16 %v368
    %v1506 = vunpack.c.h.b16 %v368
    %v1507 = vunpack.c.l.b16 %v369
    %v1508 = vunpack.c.l.b16 %v370
    %v1509 = vunpack.c.h.b16 %v370
    %v1510 = vunpack.c.l.b16 %v371
    %v1511 = vunpack.c.h.b16 %v371
    %v1512 = vunpack.c.l.b16 %v372
    %v1513 = vunpack.c.h.b16 %v372
    %v1514 = vunpack.c.l.b16 %v373
    %v1515 = vunpack.c.h.b16 %v373
    %v1516 = vunpack.c.l.b16 %v374
    %v1517 = vunpack.c.l.b16 %v375
    %v1518 = vunpack.c.h.b16 %v375
    %v1519 = vunpack.c.l.b16 %v376
    %v1520 = vunpack.c.h.b16 %v376
    %v1521 = vunpack.c.l.b16 %v377
    %v1522 = vunpack.c.h.b16 %v377
    %v1523 = vunpack.c.l.b16 %v378
    %v1524 = vunpack.c.h.b16 %v378
    %v1525 = vunpack.c.l.b16 %v379
    %v1526 = vunpack.c.l.b16 %v380
    %v1527 = vunpack.c.h.b16 %v380
    %v1528 = vunpack.c.l.b16 %v381
    %v1529 = vunpack.c.h.b16 %v381
    %v1530 = vunpack.c.l.b16 %v382
    %v1531 = vunpack.c.h.b16 %v382
    %v1532 = vunpack.c.l.b16 %v383
    %v1533 = vunpack.c.h.b16 %v383
    %v1534 = vunpack.c.l.b16 %v384
    %v1535 = vunpack.c.l.b16 %v385
    %v1536 = vunpack.c.h.b16 %v385
    %v1537 = vunpack.c.l.b16 %v386
    %v1538 = vunpack.c.h.b16 %v386
    %v1539 = vunpack.c.l.b16 %v387
    %v1540 = vunpack.c.h.b16 %v387
    %v1541 = vunpack.c.l.b16 %v388
    %v1542 = vunpack.c.h.b16 %v388
    %v1543 = vunpack.c.l.b16 %v389
    %v1544 = vunpack.c.l.b16 %v390
    %v1545 = vunpack.c.h.b16 %v390
    %v1546 = vunpack.c.l.b16 %v391
    %v1547 = vunpack.c.h.b16 %v391
    %v1548 = vunpack.c.l.b16 %v392
    %v1549 = vunpack.c.h.b16 %v392
    %v1550 = vunpack.c.l.b16 %v393
    %v1551 = vunpack.c.h.b16 %v393
    %v1552 = vunpack.c.l.b16 %v394
    %v1553 = vunpack.c.l.b16 %v395
    %v1554 = vunpack.c.h.b16 %v395
    %v1555 = vunpack.c.l.b16 %v396
    %v1556 = vunpack.c.h.b16 %v396
    %v1557 = vunpack.c.l.b16 %v397
    %v1558 = vunpack.c.h.b16 %v397
    %v1559 = vunpack.c.l.b16 %v398
    %v1560 = vunpack.c.h.b16 %v398
    %v1561 = vunpack.c.l.b16 %v399
    %v1562 = vunpack.c.l.b16 %v400
    %v1563 = vunpack.c.h.b16 %v400
    %v1564 = vunpack.c.l.b16 %v401
    %v1565 = vunpack.c.h.b16 %v401
    %v1566 = vunpack.c.l.b16 %v402
    %v1567 = vunpack.c.h.b16 %v402
    %v1568 = vunpack.c.l.b16 %v403
    %v1569 = vunpack.c.h.b16 %v403
    %v1570 = vunpack.c.l.b16 %v404
    %v1571 = vunpack.c.l.b16 %v405
    %v1572 = vunpack.c.h.b16 %v405
    %v1573 = vunpack.c.l.b16 %v406
    %v1574 = vunpack.c.h.b16 %v406
    %v1575 = vunpack.c.l.b16 %v407
    %v1576 = vunpack.c.h.b16 %v407
    %v1577 = vunpack.c.l.b16 %v408
    %v1578 = vunpack.c.h.b16 %v408
    %v1579 = vunpack.c.l.b16 %v409
    %v1580 = vunpack.c.l.b16 %v410
    %v1581 = vunpack.c.h.b16 %v410
    %v1582 = vunpack.c.l.b16 %v411
    %v1583 = vunpack.c.h.b16 %v411
    %v1584 = vunpack.c.l.b16 %v412
    %v1585 = vunpack.c.h.b16 %v412
    %v1586 = vunpack.c.l.b16 %v413
    %v1587 = vunpack.c.h.b16 %v413
    %v1588 = vunpack.c.l.b16 %v414
    %v1589 = vunpack.c.l.b16 %v415
    %v1590 = vunpack.c.h.b16 %v415
    %v1591 = vunpack.c.l.b16 %v416
    %v1592 = vunpack.c.h.b16 %v416
    %v1593 = vunpack.c.l.b16 %v417
    %v1594 = vunpack.c.h.b16 %v417
    %v1595 = vunpack.c.l.b16 %v418
    %v1596 = vunpack.c.h.b16 %v418
    %v1597 = vunpack.c.l.b16 %v419
    %v1598 = vunpack.c.l.b16 %v420
    %v1599 = vunpack.c.h.b16 %v420
    %v1600 = vunpack.c.l.b16 %v421
    %v1601 = vunpack.c.h.b16 %v421
    %v1602 = vunpack.c.l.b16 %v422
    %v1603 = vunpack.c.h.b16 %v422
    %v1604 = vunpack.c.l.b16 %v423
    %v1605 = vunpack.c.h.b16 %v423
    %v1606 = vunpack.c.l.b16 %v424
    %v1607 = vunpack.c.l.b16 %v425
    %v1608 = vunpack.c.h.b16 %v425
    %v1609 = vunpack.c.l.b16 %v426
    %v1610 = vunpack.c.h.b16 %v426
    %v1611 = vunpack.c.l.b16 %v427
    %v1612 = vunpack.c.h.b16 %v427
    %v1613 = vunpack.c.l.b16 %v428
    %v1614 = vunpack.c.h.b16 %v428
    %v1615 = vunpack.c.l.b16 %v429
    %v1616 = vunpack.c.l.b16 %v430
    %v1617 = vunpack.c.h.b16 %v430
    %v1618 = vunpack.c.l.b16 %v431
    %v1619 = vunpack.c.h.b16 %v431
    %v1620 = vunpack.c.l.b16 %v432
    %v1621 = vunpack.c.h.b16 %v432
    %v1622 = vunpack.c.l.b16 %v433
    %v1623 = vunpack.c.h.b16 %v433
    %v1624 = vunpack.c.l.b16 %v434
    %v1625 = vunpack.c.l.b16 %v435
    %v1626 = vunpack.c.h.b16 %v435
    %v1627 = vunpack.c.l.b16 %v436
    %v1628 = vunpack.c.h.b16 %v436
    %v1629 = vunpack.c.l.b16 %v437
    %v1630 = vunpack.c.h.b16 %v437
    %v1631 = vunpack.c.l.b16 %v438
    %v1632 = vunpack.c.h.b16 %v438
    %v1633 = vunpack.c.l.b16 %v439
    %v1634 = vunpack.c.l.b16 %v440
    %v1635 = vunpack.c.h.b16 %v440
    %v1636 = vunpack.c.l.b16 %v441
    %v1637 = vunpack.c.h.b16 %v441
    %v1638 = vunpack.c.l.b16 %v442
    %v1639 = vunpack.c.h.b16 %v442
    %v1640 = vunpack.c.l.b16 %v443
    %v1641 = vunpack.c.h.b16 %v443
    %v1642 = vunpack.c.l.b16 %v444
    %v1643 = vunpack.c.l.b16 %v445
    %v1644 = vunpack.c.h.b16 %v445
    %v1645 = vunpack.c.l.b16 %v446
    %v1646 = vunpack.c.h.b16 %v446
    %v1647 = vunpack.c.l.b16 %v447
    %v1648 = vunpack.c.h.b16 %v447
    %v1649 = vunpack.c.l.b16 %v448
    %v1650 = vunpack.c.h.b16 %v448
    %v1651 = vunpack.c.l.b16 %v449
    %v1652 = vunpack.c.l.b16 %v450
    %v1653 = vunpack.c.h.b16 %v450
    %v1654 = vunpack.c.l.b16 %v451
    %v1655 = vunpack.c.h.b16 %v451
    %v1656 = vunpack.c.l.b16 %v452
    %v1657 = vunpack.c.h.b16 %v452
    %v1658 = vunpack.c.l.b16 %v453
    %v1659 = vunpack.c.h.b16 %v453
    %v1660 = vunpack.c.l.b16 %v454
    %v1661 = vunpack.c.l.b16 %v455
    %v1662 = vunpack.c.h.b16 %v455
    %v1663 = vunpack.c.l.b16 %v456
    %v1664 = vunpack.c.h.b16 %v456
    %v1665 = vunpack.c.l.b16 %v457
    %v1666 = vunpack.c.h.b16 %v457
    %v1667 = vunpack.c.l.b16 %v458
    %v1668 = vunpack.c.h.b16 %v458
    %v1669 = vunpack.c.l.b16 %v459
    %v1670 = vunpack.c.l.b16 %v460
    %v1671 = vunpack.c.h.b16 %v460
    %v1672 = vunpack.c.l.b16 %v461
    %v1673 = vunpack.c.h.b16 %v461
    %v1674 = vunpack.c.l.b16 %v462
    %v1675 = vunpack.c.h.b16 %v462
    %v1676 = vunpack.c.l.b16 %v463
    %v1677 = vunpack.c.h.b16 %v463
    %v1678 = vunpack.c.l.b16 %v464
    %v1679 = vunpack.c.l.b16 %v465
    %v1680 = vunpack.c.h.b16 %v465
    %v1681 = vunpack.c.l.b16 %v466
    %v1682 = vunpack.c.h.b16 %v466
    %v1683 = vunpack.c.l.b16 %v467
    %v1684 = vunpack.c.h.b16 %v467
    %v1685 = vunpack.c.l.b16 %v468
    %v1686 = vunpack.c.h.b16 %v468
    %v1687 = vunpack.c.l.b16 %v469
    %v1688 = vunpack.c.l.b16 %v470
    %v1689 = vunpack.c.h.b16 %v470
    %v1690 = vunpack.c.l.b16 %v471
    %v1691 = vunpack.c.h.b16 %v471
    %v1692 = vunpack.c.l.b16 %v472
    %v1693 = vunpack.c.h.b16 %v472
    %v1694 = vunpack.c.l.b16 %v473
    %v1695 = vunpack.c.h.b16 %v473
    %v1696 = vunpack.c.l.b16 %v474
    %v1697 = vunpack.c.l.b16 %v475
    %v1698 = vunpack.c.h.b16 %v475
    %v1699 = vunpack.c.l.b16 %v476
    %v1700 = vunpack.c.h.b16 %v476
    %v1701 = vunpack.c.l.b16 %v477
    %v1702 = vunpack.c.h.b16 %v477
    %v1703 = vunpack.c.l.b16 %v478
    %v1704 = vunpack.c.h.b16 %v478
    %v1705 = vunpack.c.l.b16 %v479
    %v1706 = vunpack.c.l.b16 %v480
    %v1707 = vunpack.c.h.b16 %v480
    %v1708 = vunpack.c.l.b16 %v481
    %v1709 = vunpack.c.h.b16 %v481
    %v1710 = vunpack.c.l.b16 %v482
    %v1711 = vunpack.c.h.b16 %v482
    %v1712 = vunpack.c.l.b16 %v483
    %v1713 = vunpack.c.h.b16 %v483
    %v1714 = vunpack.c.l.b16 %v484
    %v1715 = vunpack.c.l.b16 %v485
    %v1716 = vunpack.c.h.b16 %v485
    %v1717 = vunpack.c.l.b16 %v486
    %v1718 = vunpack.c.h.b16 %v486
    %v1719 = vunpack.c.l.b16 %v487
    %v1720 = vunpack.c.h.b16 %v487
    %v1721 = vunpack.c.l.b16 %v488
    %v1722 = vunpack.c.h.b16 %v488
    %v1723 = vunpack.c.l.b16 %v489
    %v1724 = vunpack.c.l.b16 %v490
    %v1725 = vunpack.c.h.b16 %v490
    %v1726 = vunpack.c.l.b16 %v491
    %v1727 = vunpack.c.h.b16 %v491
    %v1728 = vunpack.c.l.b16 %v492
    %v1729 = vunpack.c.h.b16 %v492
    %v1730 = vunpack.c.l.b16 %v493
    %v1731 = vunpack.c.h.b16 %v493
    %v1732 = vunpack.c.l.b16 %v494
    %v1733 = vunpack.c.l.b16 %v495
    %v1734 = vunpack.c.h.b16 %v495
    %v1735 = vunpack.c.l.b16 %v496
    %v1736 = vunpack.c.h.b16 %v496
    %v1737 = vunpack.c.l.b16 %v497
    %v1738 = vunpack.c.h.b16 %v497
    %v1739 = vunpack.c.l.b16 %v498
    %v1740 = vunpack.c.h.b16 %v498
    %v1741 = vunpack.c.l.b16 %v499
    %v1742 = vunpack.c.l.b16 %v500
    %v1743 = vunpack.c.h.b16 %v500
    %v1744 = vunpack.c.l.b16 %v501
    %v1745 = vunpack.c.h.b16 %v501
    %v1746 = vunpack.c.l.b16 %v502
    %v1747 = vunpack.c.h.b16 %v502
    %v1748 = vunpack.c.l.b16 %v503
    %v1749 = vunpack.c.h.b16 %v503
    %v1750 = vunpack.c.l.b16 %v504
    %v1751 = vunpack.c.l.b16 %v505
    %v1752 = vunpack.c.h.b16 %v505
    %v1753 = vunpack.c.l.b16 %v506
    %v1754 = vunpack.c.h.b16 %v506
    %v1755 = vunpack.c.l.b16 %v507
    %v1756 = vunpack.c.h.b16 %v507
    %v1757 = vunpack.c.l.b16 %v508
    %v1758 = vunpack.c.h.b16 %v508
    %v1759 = vunpack.c.l.b16 %v509
    %v1760 = vunpack.c.l.b16 %v510
    %v1761 = vunpack.c.h.b16 %v510
    %v1762 = vunpack.c.l.b16 %v511
    %v1763 = vunpack.c.h.b16 %v511
    %v1764 = vunpack.c.l.b16 %v512
    %v1765 = vunpack.c.h.b16 %v512
    %v1766 = vunpack.c.l.b16 %v513
    %v1767 = vunpack.c.h.b16 %v513
    %v1768 = vunpack.c.l.b16 %v514
    %v1769 = vunpack.c.l.b16 %v515
    %v1770 = vunpack.c.h.b16 %v515
    %v1771 = vunpack.c.l.b16 %v516
    %v1772 = vunpack.c.h.b16 %v516
    %v1773 = vunpack.c.l.b16 %v517
    %v1774 = vunpack.c.h.b16 %v517
    %v1775 = vunpack.c.l.b16 %v518
    %v1776 = vunpack.c.h.b16 %v518
    %v1777 = vunpack.c.l.b16 %v519
    %v1778 = vunpack.c.l.b16 %v520
    %v1779 = vunpack.c.h.b16 %v520
    %v1780 = vunpack.c.l.b16 %v521
    %v1781 = vunpack.c.h.b16 %v521
    %v1782 = vunpack.c.l.b16 %v522
    %v1783 = vunpack.c.h.b16 %v522
    %v1784 = vunpack.c.l.b16 %v523
    %v1785 = vunpack.c.h.b16 %v523
    %v1786 = vunpack.c.l.b16 %v524
    %v1787 = vunpack.c.l.b16 %v525
    %v1788 = vunpack.c.h.b16 %v525
    %v1789 = vunpack.c.l.b16 %v526
    %v1790 = vunpack.c.h.b16 %v526
    %v1791 = vunpack.c.l.b16 %v527
    %v1792 = vunpack.c.h.b16 %v527
    %v1793 = vunpack.c.l.b16 %v528
    %v1794 = vunpack.c.h.b16 %v528
    %v1795 = vunpack.c.l.b16 %v529
    %v1796 = vunpack.c.l.b16 %v530
    %v1797 = vunpack.c.h.b16 %v530
    %v1798 = vunpack.c.l.b16 %v531
    %v1799 = vunpack.c.h.b16 %v531
    %v1800 = vunpack.c.l.b16 %v532
    %v1801 = vunpack.c.h.b16 %v532
    %v1802 = vunpack.c.l.b16 %v533
    %v1803 = vunpack.c.h.b16 %v533
    %v1804 = vunpack.c.l.b16 %v534
    %v1805 = vunpack.c.l.b16 %v535
    %v1806 = vunpack.c.h.b16 %v535
    %v1807 = vunpack.c.l.b16 %v536
    %v1808 = vunpack.c.h.b16 %v536
    %v1809 = vunpack.c.l.b16 %v537
    %v1810 = vunpack.c.h.b16 %v537
    %v1811 = vunpack.c.l.b16 %v538
    %v1812 = vunpack.c.h.b16 %v538
    %v1813 = vunpack.c.l.b16 %v539
    %v1814 = vunpack.c.l.b16 %v540
    %v1815 = vunpack.c.h.b16 %v540
    %v1816 = vunpack.c.l.b16 %v541
    %v1817 = vunpack.c.h.b16 %v541
    %v1818 = vunpack.c.l.b16 %v542
    %v1819 = vunpack.c.h.b16 %v542
    %v1820 = vunpack.c.l.b16 %v543
    %v1821 = vunpack.c.h.b16 %v543
    %v1822 = vunpack.c.l.b16 %v544
    %v1823 = vunpack.c.l.b16 %v545
    %v1824 = vunpack.c.h.b16 %v545
    %v1825 = vunpack.c.l.b16 %v546
    %v1826 = vunpack.c.h.b16 %v546
    %v1827 = vunpack.c.l.b16 %v547
    %v1828 = vunpack.c.h.b16 %v547
    %v1829 = vunpack.c.l.b16 %v548
    %v1830 = vunpack.c.h.b16 %v548
    %v1831 = vunpack.c.l.b16 %v549
    %v1832 = vunpack.c.l.b16 %v550
    %v1833 = vunpack.c.h.b16 %v550
    %v1834 = vunpack.c.l.b16 %v551
    %v1835 = vunpack.c.h.b16 %v551
    %v1836 = vunpack.c.l.b16 %v552
    %v1837 = vunpack.c.h.b16 %v552
    %v1838 = vunpack.c.l.b16 %v553
    %v1839 = vunpack.c.h.b16 %v553
    %v1840 = vunpack.c.l.b16 %v554
    %v1841 = vunpack.c.l.b16 %v555
    %v1842 = vunpack.c.h.b16 %v555
    %v1843 = vunpack.c.l.b16 %v556
    %v1844 = vunpack.c.h.b16 %v556
    %v1845 = vunpack.c.l.b16 %v557
    %v1846 = vunpack.c.h.b16 %v557
    %v1847 = vunpack.c.l.b16 %v558
    %v1848 = vunpack.c.h.b16 %v558
    %v1849 = vunpack.c.l.b16 %v559
    %v1850 = vunpack.c.l.b16 %v560
    %v1851 = vunpack.c.h.b16 %v560
    %v1852 = vunpack.c.l.b16 %v561
    %v1853 = vunpack.c.h.b16 %v561
    %v1854 = vunpack.c.l.b16 %v562
    %v1855 = vunpack.c.h.b16 %v562
    %v1856 = vunpack.c.l.b16 %v563
    %v1857 = vunpack.c.h.b16 %v563
    %v1858 = vunpack.c.l.b16 %v564
    %v1859 = vunpack.c.l.b16 %v565
    %v1860 = vunpack.c.h.b16 %v565
    %v1861 = vunpack.c.l.b16 %v566
    %v1862 = vunpack.c.h.b16 %v566
    %v1863 = vunpack.c.l.b16 %v567
    %v1864 = vunpack.c.h.b16 %v567
    %v1865 = vunpack.c.l.b16 %v568
    %v1866 = vunpack.c.h.b16 %v568
    %v1867 = vunpack.c.l.b16 %v569
    %v1868 = vunpack.c.l.b16 %v570
    %v1869 = vunpack.c.h.b16 %v570
    %v1870 = vunpack.c.l.b16 %v571
    %v1871 = vunpack.c.h.b16 %v571
    %v1872 = vunpack.c.l.b16 %v572
    %v1873 = vunpack.c.h.b16 %v572
    %v1874 = vunpack.c.l.b16 %v573
    %v1875 = vunpack.c.h.b16 %v573
    %v1876 = vunpack.c.l.b16 %v574
    %v1877 = vunpack.c.l.b16 %v575
    %v1878 = vunpack.c.h.b16 %v575
    %v1879 = vunpack.c.l.b16 %v576
    %v1880 = vunpack.c.h.b16 %v576
    %v1881 = vunpack.c.l.b16 %v577
    %v1882 = vunpack.c.h.b16 %v577
    %v1883 = vunpack.c.l.b16 %v578
    %v1884 = vunpack.c.h.b16 %v578
    %v1885 = vunpack.c.l.b16 %v579
    %v1886 = vunpack.c.l.b16 %v580
    %v1887 = vunpack.c.h.b16 %v580
    %v1888 = vunpack.c.l.b16 %v581
    %v1889 = vunpack.c.h.b16 %v581
    %v1890 = vunpack.c.l.b16 %v582
    %v1891 = vunpack.c.h.b16 %v582
    %v1892 = vunpack.c.l.b16 %v583
    %v1893 = vunpack.c.h.b16 %v583
    %v1894 = vunpack.c.l.b16 %v584
    %v1895 = vunpack.c.l.b16 %v585
    %v1896 = vunpack.c.h.b16 %v585
    %v1897 = vunpack.c.l.b16 %v586
    %v1898 = vunpack.c.h.b16 %v586
    %v1899 = vunpack.c.l.b16 %v587
    %v1900 = vunpack.c.h.b16 %v587
    %v1901 = vunpack.c.l.b16 %v588
    %v1902 = vunpack.c.h.b16 %v588
    %v1903 = vunpack.c.l.b16 %v589
    %v1904 = vunpack.c.l.b16 %v590
    %v1905 = vunpack.c.h.b16 %v590
    %v1906 = vunpack.c.l.b16 %v591
    %v1907 = vunpack.c.h.b16 %v591
    %v1908 = vunpack.c.l.b16 %v592
    %v1909 = vunpack.c.h.b16 %v592
    %v1910 = vunpack.c.l.b16 %v593
    %v1911 = vunpack.c.h.b16 %v593
    %v1912 = vunpack.c.l.b16 %v594
    %v1913 = vunpack.c.l.b16 %v595
    %v1914 = vunpack.c.h.b16 %v595
    %v1915 = vunpack.c.l.b16 %v596
    %v1916 = vunpack.c.h.b16 %v596
    %v1917 = vunpack.c.l.b16 %v597
    %v1918 = vunpack.c.h.b16 %v597
    %v1919 = vunpack.c.l.b16 %v598
    %v1920 = vunpack.c.h.b16 %v598
    %v1921 = vunpack.c.l.b16 %v599
    %v1922 = vunpack.c.l.b16 %v600
    %v1923 = vunpack.c.h.b16 %v600
    %v1924 = vunpack.c.l.b16 %v601
    %v1925 = vunpack.c.h.b16 %v601
    %v1926 = vunpack.c.l.b16 %v602
    %v1927 = vunpack.c.h.b16 %v602
    %v1928 = vunpack.c.l.b16 %v603
    %v1929 = vunpack.c.h.b16 %v603
    %v1930 = vunpack.c.l.b16 %v604
    %v1931 = vunpack.c.l.b16 %v605
    %v1932 = vunpack.c.h.b16 %v605
    %v1933 = vunpack.c.l.b16 %v606
    %v1934 = vunpack.c.h.b16 %v606
    %v1935 = vunpack.c.l.b16 %v607
    %v1936 = vunpack.c.h.b16 %v607
    %v1937 = vunpack.c.l.b16 %v608
    %v1938 = vunpack.c.h.b16 %v608
    %v1939 = vunpack.c.l.b16 %v609
    %v1940 = vunpack.c.l.b16 %v610
    %v1941 = vunpack.c.h.b16 %v610
    %v1942 = vunpack.c.l.b16 %v611
    %v1943 = vunpack.c.h.b16 %v611
    %v1944 = vunpack.c.l.b16 %v612
    %v1945 = vunpack.c.h.b16 %v612
    %v1946 = vunpack.c.l.b16 %v613
    %v1947 = vunpack.c.h.b16 %v613
    %v1948 = vunpack.c.l.b16 %v614
    %v1949 = vunpack.c.l.b16 %v615
    %v1950 = vunpack.c.h.b16 %v615
    %v1951 = vunpack.c.l.b16 %v616
    %v1952 = vunpack.c.h.b16 %v616
    %v1953 = vunpack.c.l.b16 %v617
    %v1954 = vunpack.c.h.b16 %v617
    %v1955 = vunpack.c.l.b16 %v618
    %v1956 = vunpack.c.h.b16 %v618
    %v1957 = vunpack.c.l.b16 %v619
    %v1958 = vunpack.c.l.b16 %v620
    %v1959 = vunpack.c.h.b16 %v620
    %v1960 = vunpack.c.l.b16 %v621
    %v1961 = vunpack.c.h.b16 %v621
    %v1962 = vunpack.c.l.b16 %v622
    %v1963 = vunpack.c.h.b16 %v622
    %v1964 = vunpack.c.l.b16 %v623
    %v1965 = vunpack.c.h.b16 %v623
    %v1966 = vunpack.c.l.b16 %v624
    %v1967 = vunpack.c.l.b16 %v625
    %v1968 = vunpack.c.h.b16 %v625
    %v1969 = vunpack.c.l.b16 %v626
    %v1970 = vunpack.c.h.b16 %v626
    %v1971 = vunpack.c.l.b16 %v627
    %v1972 = vunpack.c.h.b16 %v627
    %v1973 = vunpack.c.l.b16 %v628
    %v1974 = vunpack.c.h.b16 %v628
    %v1975 = vunpack.c.l.b16 %v629
    %v1976 = vunpack.c.l.b16 %v630
    %v1977 = vunpack.c.h.b16 %v630
    %v1978 = vunpack.c.l.b16 %v631
    %v1979 = vunpack.c.h.b16 %v631
    %v1980 = vunpack.c.l.b16 %v632
    %v1981 = vunpack.c.h.b16 %v632
    %v1982 = vunpack.c.l.b16 %v633
    %v1983 = vunpack.c.h.b16 %v633
    %v1984 = vunpack.c.l.b16 %v634
    %v1985 = vunpack.c.l.b16 %v635
    %v1986 = vunpack.c.h.b16 %v635
    %v1987 = vunpack.c.l.b16 %v636
    %v1988 = vunpack.c.h.b16 %v636
    %v1989 = vunpack.c.l.b16 %v637
    %v1990 = vunpack.c.h.b16 %v637
    %v1991 = vunpack.c.l.b16 %v638
    %v1992 = vunpack.c.h.b16 %v638
    %v1993 = vunpack.c.l.b16 %v639
    %v1994 = vunpack.c.l.b16 %v640
    %v1995 = vunpack.c.h.b16 %v640
    %v1996 = vunpack.c.l.b16 %v641
    %v1997 = vunpack.c.h.b16 %v641
    %v1998 = vunpack.c.l.b16 %v642
    %v1999 = vunpack.c.h.b16 %v642
    %v2000 = vunpack.c.l.b16 %v643
    %v2001 = vunpack.c.h.b16 %v643
    %v2002 = vunpack.c.l.b16 %v644
    %v2003 = vunpack.c.l.b16 %v645
    %v2004 = vunpack.c.h.b16 %v645
    %v2005 = vunpack.c.l.b16 %v646
    %v2006 = vunpack.c.h.b16 %v646
    %v2007 = vunpack.c.l.b16 %v647
    %v2008 = vunpack.c.h.b16 %v647
    %v2009 = vunpack.c.l.b16 %v648
    %v2010 = vunpack.c.h.b16 %v648
    %v2011 = vunpack.c.l.b16 %v649
    %v2012 = vunpack.c.l.b16 %v650
    %v2013 = vunpack.c.h.b16 %v650
    %v2014 = vunpack.c.l.b16 %v651
    %v2015 = vunpack.c.h.b16 %v651
    %v2016 = vunpack.c.l.b16 %v652
    %v2017 = vunpack.c.h.b16 %v652
    %v2018 = vunpack.c.l.b16 %v653
    %v2019 = vunpack.c.h.b16 %v653
    %v2020 = vunpack.c.l.b16 %v654
    %v2021 = vpack.c.b16 %v1166, %v1157
    %v2022 = vpack.c.b16 %v1167, %v1158
    %v2023 = vpack.c.b16 %v1168, %v1159
    %v2024 = vpack.c.b16 %v1169, %v1160
    %v2025 = vpack.c.b16 %v1170, %v1161
    %v2026 = vpack.c.b16 %v1171, %v1162
    %v2027 = vpack.c.b16 %v1172, %v1163
    %v2028 = vpack.c.b16 %v1173, %v1164
    %v2029 = vpack.c.b16 %v1174, %v1165
    %v2030 = vpack.c.b16 %v1184, %v1175
    %v2031 = vpack.c.b16 %v1185, %v1176
    %v2032 = vpack.c.b16 %v1186, %v1177
    %v2033 = vpack.c.b16 %v1187, %v1178
    %v2034 = vpack.c.b16 %v1188, %v1179
    %v2035 = vpack.c.b16 %v1189, %v1180
    %v2036 = vpack.c.b16 %v1190, %v1181
    %v2037 = vpack.c.b16 %v1191, %v1182
    %v2038 = vpack.c.b16 %v1192, %v1183
    %v2039 = vpack.c.b16 %v1202, %v1193
    %v2040 = vpack.c.b16 %v1203, %v1194
    %v2041 = vpack.c.b16 %v1204, %v1195
    %v2042 = vpack.c.b16 %v1205, %v1196
    %v2043 = vpack.c.b16 %v1206, %v1197
    %v2044 = vpack.c.b16 %v1207, %v1198
    %v2045 = vpack.c.b16 %v1208, %v1199
    %v2046 = vpack.c.b16 %v1209, %v1200
    %v2047 = vpack.c.b16 %v1210, %v1201
    %v2048 = vpack.c.b16 %v1220, %v1211
    %v2049 = vpack.c.b16 %v1221, %v1212
    %v2050 = vpack.c.b16 %v1222, %v1213
    %v2051 = vpack.c.b16 %v1223, %v1214
    %v2052 = vpack.c.b16 %v1224, %v1215
    %v2053 = vpack.c.b16 %v1225, %v1216
    %v2054 = vpack.c.b16 %v1226, %v1217
    %v2055 = vpack.c.b16 %v1227, %v1218
    %v2056 = vpack.c.b16 %v1228, %v1219
    %v2057 = vpack.c.b16 %v1238, %v1229
    %v2058 = vpack.c.b16 %v1239, %v1230
    %v2059 = vpack.c.b16 %v1240, %v1231
    %v2060 = vpack.c.b16 %v1241, %v1232
    %v2061 = vpack.c.b16 %v1242, %v1233
    %v2062 = vpack.c.b16 %v1243, %v1234
    %v2063 = vpack.c.b16 %v1244, %v1235
    %v2064 = vpack.c.b16 %v1245, %v1236
    %v2065 = vpack.c.b16 %v1246, %v1237
    %v2066 = vpack.c.b16 %v1256, %v1247
    %v2067 = vpack.c.b16 %v1257, %v1248
    %v2068 = vpack.c.b16 %v1258, %v1249
    %v2069 = vpack.c.b16 %v1259, %v1250
    %v2070 = vpack.c.b16 %v1260, %v1251
    %v2071 = vpack.c.b16 %v1261, %v1252
    %v2072 = vpack.c.b16 %v1262, %v1253
    %v2073 = vpack.c.b16 %v1263, %v1254
    %v2074 = vpack.c.b16 %v1264, %v1255
    %v2075 = vpack.c.b16 %v1274, %v1265
    %v2076 = vpack.c.b16 %v1275, %v1266
    %v2077 = vpack.c.b16 %v1276, %v1267
    %v2078 = vpack.c.b16 %v1277, %v1268
    %v2079 = vpack.c.b16 %v1278, %v1269
    %v2080 = vpack.c.b16 %v1279, %v1270
    %v2081 = vpack.c.b16 %v1280, %v1271
    %v2082 = vpack.c.b16 %v1281, %v1272
    %v2083 = vpack.c.b16 %v1282, %v1273
    %v2084 = vpack.c.b16 %v1292, %v1283
    %v2085 = vpack.c.b16 %v1293, %v1284
    %v2086 = vpack.c.b16 %v1294, %v1285
    %v2087 = vpack.c.b16 %v1295, %v1286
    %v2088 = vpack.c.b16 %v1296, %v1287
    %v2089 = vpack.c.b16 %v1297, %v1288
    %v2090 = vpack.c.b16 %v1298, %v1289
    %v2091 = vpack.c.b16 %v1299, %v1290
    %v2092 = vpack.c.b16 %v1300, %v1291
    %v2093 = vpack.c.b16 %v1310, %v1301
    %v2094 = vpack.c.b16 %v1311, %v1302
    %v2095 = vpack.c.b16 %v1312, %v1303
    %v2096 = vpack.c.b16 %v1313, %v1304
    %v2097 = vpack.c.b16 %v1314, %v1305
    %v2098 = vpack.c.b16 %v1315, %v1306
    %v2099 = vpack.c.b16 %v1316, %v1307
    %v2100 = vpack.c.b16 %v1317, %v1308
    %v2101 = vpack.c.b16 %v1318, %v1309
    %v2102 = vpack.c.b16 %v1328, %v1319
    %v2103 = vpack.c.b16 %v1329, %v1320
    %v2104 = vpack.c.b16 %v1330, %v1321
    %v2105 = vpack.c.b16 %v1331, %v1322
    %v2106 = vpack.c.b16 %v1332, %v1323
    %v2107 = vpack.c.b16 %v1333, %v1324
    %v2108 = vpack.c.b16 %v1334, %v1325
    %v2109 = vpack.c.b16 %v1335, %v1326
    %v2110 = vpack.c.b16 %v1336, %v1327
    %v2111 = vpack.c.b16 %v1346, %v1337
    %v2112 = vpack.c.b16 %v1347, %v1338
    %v2113 = vpack.c.b16 %v1348, %v1339
    %v2114 = vpack.c.b16 %v1349, %v1340
    %v2115 = vpack.c.b16 %v1350, %v1341
    %v2116 = vpack.c.b16 %v1351, %v1342
    %v2117 = vpack.c.b16 %v1352, %v1343
    %v2118 = vpack.c.b16 %v1353, %v1344
    %v2119 = vpack.c.b16 %v1354, %v1345
    %v2120 = vpack.c.b16 %v1364, %v1355
    %v2121 = vpack.c.b16 %v1365, %v1356
    %v2122 = vpack.c.b16 %v1366, %v1357
    %v2123 = vpack.c.b16 %v1367, %v1358
    %v2124 = vpack.c.b16 %v1368, %v1359
    %v2125 = vpack.c.b16 %v1369, %v1360
    %v2126 = vpack.c.b16 %v1370, %v1361
    %v2127 = vpack.c.b16 %v1371, %v1362
    %v2128 = vpack.c.b16 %v1372, %v1363
    %v2129 = vpack.c.b16 %v1382, %v1373
    %v2130 = vpack.c.b16 %v1383, %v1374
    %v2131 = vpack.c.b16 %v1384, %v1375
    %v2132 = vpack.c.b16 %v1385, %v1376
    %v2133 = vpack.c.b16 %v1386, %v1377
    %v2134 = vpack.c.b16 %v1387, %v1378
    %v2135 = vpack.c.b16 %v1388, %v1379
    %v2136 = vpack.c.b16 %v1389, %v1380
    %v2137 = vpack.c.b16 %v1390, %v1381
    %v2138 = vpack.c.b16 %v1400, %v1391
    %v2139 = vpack.c.b16 %v1401, %v1392
    %v2140 = vpack.c.b16 %v1402, %v1393
    %v2141 = vpack.c.b16 %v1403, %v1394
    %v2142 = vpack.c.b16 %v1404, %v1395
    %v2143 = vpack.c.b16 %v1405, %v1396
    %v2144 = vpack.c.b16 %v1406, %v1397
    %v2145 = vpack.c.b16 %v1407, %v1398
    %v2146 = vpack.c.b16 %v1408, %v1399
    %v2147 = vpack.c.b16 %v1418, %v1409
    %v2148 = vpack.c.b16 %v1419, %v1410
    %v2149 = vpack.c.b16 %v1420, %v1411
    %v2150 = vpack.c.b16 %v1421, %v1412
    %v2151 = vpack.c.b16 %v1422, %v1413
    %v2152 = vpack.c.b16 %v1423, %v1414
    %v2153 = vpack.c.b16 %v1424, %v1415
    %v2154 = vpack.c.b16 %v1425, %v1416
    %v2155 = vpack.c.b16 %v1426, %v1417
    %v2156 = vpack.c.b16 %v1436, %v1427
    %v2157 = vpack.c.b16 %v1437, %v1428
    %v2158 = vpack.c.b16 %v1438, %v1429
    %v2159 = vpack.c.b16 %v1439, %v1430
    %v2160 = vpack.c.b16 %v1440, %v1431
    %v2161 = vpack.c.b16 %v1441, %v1432
    %v2162 = vpack.c.b16 %v1442, %v1433
    %v2163 = vpack.c.b16 %v1443, %v1434
    %v2164 = vpack.c.b16 %v1444, %v1435
    %v2165 = vpack.c.b16 %v1454, %v1445
    %v2166 = vpack.c.b16 %v1455, %v1446
    %v2167 = vpack.c.b16 %v1456, %v1447
    %v2168 = vpack.c.b16 %v1457, %v1448
    %v2169 = vpack.c.b16 %v1458, %v1449
    %v2170 = vpack.c.b16 %v1459, %v1450
    %v2171 = vpack.c.b16 %v1460, %v1451
    %v2172 = vpack.c.b16 %v1461, %v1452
    %v2173 = vpack.c.b16 %v1462, %v1453
    %v2174 = vpack.c.b16 %v1472, %v1463
    %v2175 = vpack.c.b16 %v1473, %v1464
    %v2176 = vpack.c.b16 %v1474, %v1465
    %v2177 = vpack.c.b16 %v1475, %v1466
    %v2178 = vpack.c.b16 %v1476, %v1467
    %v2179 = vpack.c.b16 %v1477, %v1468
    %v2180 = vpack.c.b16 %v1478, %v1469
    %v2181 = vpack.c.b16 %v1479, %v1470
    %v2182 = vpack.c.b16 %v1480, %v1471
    %v2183 = vpack.c.b16 %v1490, %v1481
    %v2184 = vpack.c.b16 %v1491, %v1482
    %v2185 = vpack.c.b16 %v1492, %v1483
    %v2186 = vpack.c.b16 %v1493, %v1484
    %v2187 = vpack.c.b16 %v1494, %v1485
    %v2188 = vpack.c.b16 %v1495, %v1486
    %v2189 = vpack.c.b16 %v1496, %v1487
    %v2190 = vpack.c.b16 %v1497, %v1488
    %v2191 = vpack.c.b16 %v1498, %v1489
    %v2192 = vpack.c.b16 %v1508, %v1499
    %v2193 = vpack.c.b16 %v1509, %v1500
    %v2194 = vpack.c.b16 %v1510, %v1501
    %v2195 = vpack.c.b16 %v1511, %v1502
    %v2196 = vpack.c.b16 %v1512, %v1503
    %v2197 = vpack.c.b16 %v1513, %v1504
    %v2198 = vpack.c.b16 %v1514, %v1505
    %v2199 = vpack.c.b16 %v1515, %v1506
    %v2200 = vpack.c.b16 %v1516, %v1507
    %v2201 = vpack.c.b16 %v1526, %v1517
    %v2202 = vpack.c.b16 %v1527, %v1518
    %v2203 = vpack.c.b16 %v1528, %v1519
    %v2204 = vpack.c.b16 %v1529, %v1520
    %v2205 = vpack.c.b16 %v1530, %v1521
    %v2206 = vpack.c.b16 %v1531, %v1522
    %v2207 = vpack.c.b16 %v1532, %v1523
    %v2208 = vpack.c.b16 %v1533, %v1524
    %v2209 = vpack.c.b16 %v1534, %v1525
    %v2210 = vpack.c.b16 %v1544, %v1535
    %v2211 = vpack.c.b16 %v1545, %v1536
    %v2212 = vpack.c.b16 %v1546, %v1537
    %v2213 = vpack.c.b16 %v1547, %v1538
    %v2214 = vpack.c.b16 %v1548, %v1539
    %v2215 = vpack.c.b16 %v1549, %v1540
    %v2216 = vpack.c.b16 %v1550, %v1541
    %v2217 = vpack.c.b16 %v1551, %v1542
    %v2218 = vpack.c.b16 %v1552, %v1543
    %v2219 = vpack.c.b16 %v1562, %v1553
    %v2220 = vpack.c.b16 %v1563, %v1554
    %v2221 = vpack.c.b16 %v1564, %v1555
    %v2222 = vpack.c.b16 %v1565, %v1556
    %v2223 = vpack.c.b16 %v1566, %v1557
    %v2224 = vpack.c.b16 %v1567, %v1558
    %v2225 = vpack.c.b16 %v1568, %v1559
    %v2226 = vpack.c.b16 %v1569, %v1560
    %v2227 = vpack.c.b16 %v1570, %v1561
    %v2228 = vpack.c.b16 %v1580, %v1571
    %v2229 = vpack.c.b16 %v1581, %v1572
    %v2230 = vpack.c.b16 %v1582, %v1573
    %v2231 = vpack.c.b16 %v1583, %v1574
    %v2232 = vpack.c.b16 %v1584, %v1575
    %v2233 = vpack.c.b16 %v1585, %v1576
    %v2234 = vpack.c.b16 %v1586, %v1577
    %v2235 = vpack.c.b16 %v1587, %v1578
    %v2236 = vpack.c.b16 %v1588, %v1579
    %v2237 = vpack.c.b16 %v1598, %v1589
    %v2238 = vpack.c.b16 %v1599, %v1590
    %v2239 = vpack.c.b16 %v1600, %v1591
    %v2240 = vpack.c.b16 %v1601, %v1592
    %v2241 = vpack.c.b16 %v1602, %v1593
    %v2242 = vpack.c.b16 %v1603, %v1594
    %v2243 = vpack.c.b16 %v1604, %v1595
    %v2244 = vpack.c.b16 %v1605, %v1596
    %v2245 = vpack.c.b16 %v1606, %v1597
    %v2246 = vpack.c.b16 %v1616, %v1607
    %v2247 = vpack.c.b16 %v1617, %v1608
    %v2248 = vpack.c.b16 %v1618, %v1609
    %v2249 = vpack.c.b16 %v1619, %v1610
    %v2250 = vpack.c.b16 %v1620, %v1611
    %v2251 = vpack.c.b16 %v1621, %v1612
    %v2252 = vpack.c.b16 %v1622, %v1613
    %v2253 = vpack.c.b16 %v1623, %v1614
    %v2254 = vpack.c.b16 %v1624, %v1615
    %v2255 = vpack.c.b16 %v1634, %v1625
    %v2256 = vpack.c.b16 %v1635, %v1626
    %v2257 = vpack.c.b16 %v1636, %v1627
    %v2258 = vpack.c.b16 %v1637, %v1628
    %v2259 = vpack.c.b16 %v1638, %v1629
    %v2260 = vpack.c.b16 %v1639, %v1630
    %v2261 = vpack.c.b16 %v1640, %v1631
    %v2262 = vpack.c.b16 %v1641, %v1632
    %v2263 = vpack.c.b16 %v1642, %v1633
    %v2264 = vpack.c.b16 %v1652, %v1643
    %v2265 = vpack.c.b16 %v1653, %v1644
    %v2266 = vpack.c.b16 %v1654, %v1645
    %v2267 = vpack.c.b16 %v1655, %v1646
    %v2268 = vpack.c.b16 %v1656, %v1647
    %v2269 = vpack.c.b16 %v1657, %v1648
    %v2270 = vpack.c.b16 %v1658, %v1649
    %v2271 = vpack.c.b16 %v1659, %v1650
    %v2272 = vpack.c.b16 %v1660, %v1651
    %v2273 = vpack.c.b16 %v1670, %v1661
    %v2274 = vpack.c.b16 %v1671, %v1662
    %v2275 = vpack.c.b16 %v1672, %v1663
    %v2276 = vpack.c.b16 %v1673, %v1664
    %v2277 = vpack.c.b16 %v1674, %v1665
    %v2278 = vpack.c.b16 %v1675, %v1666
    %v2279 = vpack.c.b16 %v1676, %v1667
    %v2280 = vpack.c.b16 %v1677, %v1668
    %v2281 = vpack.c.b16 %v1678, %v1669
    %v2282 = vpack.c.b16 %v1688, %v1679
    %v2283 = vpack.c.b16 %v1689, %v1680
    %v2284 = vpack.c.b16 %v1690, %v1681
    %v2285 = vpack.c.b16 %v1691, %v1682
    %v2286 = vpack.c.b16 %v1692, %v1683
    %v2287 = vpack.c.b16 %v1693, %v1684
    %v2288 = vpack.c.b16 %v1694, %v1685
    %v2289 = vpack.c.b16 %v1695, %v1686
    %v2290 = vpack.c.b16 %v1696, %v1687
    %v2291 = vpack.c.b16 %v1706, %v1697
    %v2292 = vpack.c.b16 %v1707, %v1698
    %v2293 = vpack.c.b16 %v1708, %v1699
    %v2294 = vpack.c.b16 %v1709, %v1700
    %v2295 = vpack.c.b16 %v1710, %v1701
    %v2296 = vpack.c.b16 %v1711, %v1702
    %v2297 = vpack.c.b16 %v1712, %v1703
    %v2298 = vpack.c.b16 %v1713, %v1704
    %v2299 = vpack.c.b16 %v1714, %v1705
    %v2300 = vpack.c.b16 %v1724, %v1715
    %v2301 = vpack.c.b16 %v1725, %v1716
    %v2302 = vpack.c.b16 %v1726, %v1717
    %v2303 = vpack.c.b16 %v1727, %v1718
    %v2304 = vpack.c.b16 %v1728, %v1719
    %v2305 = vpack.c.b16 %v1729, %v1720
    %v2306 = vpack.c.b16 %v1730, %v1721
    %v2307 = vpack.c.b16 %v1731, %v1722
    %v2308 = vpack.c.b16 %v1732, %v1723
    %v2309 = vpack.c.b16 %v1742, %v1733
    %v2310 = vpack.c.b16 %v1743, %v1734
    %v2311 = vpack.c.b16 %v1744, %v1735
    %v2312 = vpack.c.b16 %v1745, %v1736
    %v2313 = vpack.c.b16 %v1746, %v1737
    %v2314 = vpack.c.b16 %v1747, %v1738
    %v2315 = vpack.c.b16 %v1748, %v1739
    %v2316 = vpack.c.b16 %v1749, %v1740
    %v2317 = vpack.c.b16 %v1750, %v1741
    %v2318 = vpack.c.b16 %v1760, %v1751
    %v2319 = vpack.c.b16 %v1761, %v1752
    %v2320 = vpack.c.b16 %v1762, %v1753
    %v2321 = vpack.c.b16 %v1763, %v1754
    %v2322 = vpack.c.b16 %v1764, %v1755
    %v2323 = vpack.c.b16 %v1765, %v1756
    %v2324 = vpack.c.b16 %v1766, %v1757
    %v2325 = vpack.c.b16 %v1767, %v1758
    %v2326 = vpack.c.b16 %v1768, %v1759
    %v2327 = vpack.c.b16 %v1778, %v1769
    %v2328 = vpack.c.b16 %v1779, %v1770
    %v2329 = vpack.c.b16 %v1780, %v1771
    %v2330 = vpack.c.b16 %v1781, %v1772
    %v2331 = vpack.c.b16 %v1782, %v1773
    %v2332 = vpack.c.b16 %v1783, %v1774
    %v2333 = vpack.c.b16 %v1784, %v1775
    %v2334 = vpack.c.b16 %v1785, %v1776
    %v2335 = vpack.c.b16 %v1786, %v1777
    %v2336 = vpack.c.b16 %v1796, %v1787
    %v2337 = vpack.c.b16 %v1797, %v1788
    %v2338 = vpack.c.b16 %v1798, %v1789
    %v2339 = vpack.c.b16 %v1799, %v1790
    %v2340 = vpack.c.b16 %v1800, %v1791
    %v2341 = vpack.c.b16 %v1801, %v1792
    %v2342 = vpack.c.b16 %v1802, %v1793
    %v2343 = vpack.c.b16 %v1803, %v1794
    %v2344 = vpack.c.b16 %v1804, %v1795
    %v2345 = vpack.c.b16 %v1814, %v1805
    %v2346 = vpack.c.b16 %v1815, %v1806
    %v2347 = vpack.c.b16 %v1816, %v1807
    %v2348 = vpack.c.b16 %v1817, %v1808
    %v2349 = vpack.c.b16 %v1818, %v1809
    %v2350 = vpack.c.b16 %v1819, %v1810
    %v2351 = vpack.c.b16 %v1820, %v1811
    %v2352 = vpack.c.b16 %v1821, %v1812
    %v2353 = vpack.c.b16 %v1822, %v1813
    %v2354 = vpack.c.b16 %v1832, %v1823
    %v2355 = vpack.c.b16 %v1833, %v1824
    %v2356 = vpack.c.b16 %v1834, %v1825
    %v2357 = vpack.c.b16 %v1835, %v1826
    %v2358 = vpack.c.b16 %v1836, %v1827
    %v2359 = vpack.c.b16 %v1837, %v1828
    %v2360 = vpack.c.b16 %v1838, %v1829
    %v2361 = vpack.c.b16 %v1839, %v1830
    %v2362 = vpack.c.b16 %v1840, %v1831
    %v2363 = vpack.c.b16 %v1850, %v1841
    %v2364 = vpack.c.b16 %v1851, %v1842
    %v2365 = vpack.c.b16 %v1852, %v1843
    %v2366 = vpack.c.b16 %v1853, %v1844
    %v2367 = vpack.c.b16 %v1854, %v1845
    %v2368 = vpack.c.b16 %v1855, %v1846
    %v2369 = vpack.c.b16 %v1856, %v1847
    %v2370 = vpack.c.b16 %v1857, %v1848
    %v2371 = vpack.c.b16 %v1858, %v1849
    %v2372 = vpack.c.b16 %v1868, %v1859
    %v2373 = vpack.c.b16 %v1869, %v1860
    %v2374 = vpack.c.b16 %v1870, %v1861
    %v2375 = vpack.c.b16 %v1871, %v1862
    %v2376 = vpack.c.b16 %v1872, %v1863
    %v2377 = vpack.c.b16 %v1873, %v1864
    %v2378 = vpack.c.b16 %v1874, %v1865
    %v2379 = vpack.c.b16 %v1875, %v1866
    %v2380 = vpack.c.b16 %v1876, %v1867
    %v2381 = vpack.c.b16 %v1886, %v1877
    %v2382 = vpack.c.b16 %v1887, %v1878
    %v2383 = vpack.c.b16 %v1888, %v1879
    %v2384 = vpack.c.b16 %v1889, %v1880
    %v2385 = vpack.c.b16 %v1890, %v1881
    %v2386 = vpack.c.b16 %v1891, %v1882
    %v2387 = vpack.c.b16 %v1892, %v1883
    %v2388 = vpack.c.b16 %v1893, %v1884
    %v2389 = vpack.c.b16 %v1894, %v1885
    %v2390 = vpack.c.b16 %v1904, %v1895
    %v2391 = vpack.c.b16 %v1905, %v1896
    %v2392 = vpack.c.b16 %v1906, %v1897
    %v2393 = vpack.c.b16 %v1907, %v1898
    %v2394 = vpack.c.b16 %v1908, %v1899
    %v2395 = vpack.c.b16 %v1909, %v1900
    %v2396 = vpack.c.b16 %v1910, %v1901
    %v2397 = vpack.c.b16 %v1911, %v1902
    %v2398 = vpack.c.b16 %v1912, %v1903
    %v2399 = vpack.c.b16 %v1922, %v1913
    %v2400 = vpack.c.b16 %v1923, %v1914
    %v2401 = vpack.c.b16 %v1924, %v1915
    %v2402 = vpack.c.b16 %v1925, %v1916
    %v2403 = vpack.c.b16 %v1926, %v1917
    %v2404 = vpack.c.b16 %v1927, %v1918
    %v2405 = vpack.c.b16 %v1928, %v1919
    %v2406 = vpack.c.b16 %v1929, %v1920
    %v2407 = vpack.c.b16 %v1930, %v1921
    %v2408 = vpack.c.b16 %v1940, %v1931
    %v2409 = vpack.c.b16 %v1941, %v1932
    %v2410 = vpack.c.b16 %v1942, %v1933
    %v2411 = vpack.c.b16 %v1943, %v1934
    %v2412 = vpack.c.b16 %v1944, %v1935
    %v2413 = vpack.c.b16 %v1945, %v1936
    %v2414 = vpack.c.b16 %v1946, %v1937
    %v2415 = vpack.c.b16 %v1947, %v1938
    %v2416 = vpack.c.b16 %v1948, %v1939
    %v2417 = vpack.c.b16 %v1958, %v1949
    %v2418 = vpack.c.b16 %v1959, %v1950
    %v2419 = vpack.c.b16 %v1960, %v1951
    %v2420 = vpack.c.b16 %v1961, %v1952
    %v2421 = vpack.c.b16 %v1962, %v1953
    %v2422 = vpack.c.b16 %v1963, %v1954
    %v2423 = vpack.c.b16 %v1964, %v1955
    %v2424 = vpack.c.b16 %v1965, %v1956
    %v2425 = vpack.c.b16 %v1966, %v1957
    %v2426 = vpack.c.b16 %v1976, %v1967
    %v2427 = vpack.c.b16 %v1977, %v1968
    %v2428 = vpack.c.b16 %v1978, %v1969
    %v2429 = vpack.c.b16 %v1979, %v1970
    %v2430 = vpack.c.b16 %v1980, %v1971
    %v2431 = vpack.c.b16 %v1981, %v1972
    %v2432 = vpack.c.b16 %v1982, %v1973
    %v2433 = vpack.c.b16 %v1983, %v1974
    %v2434 = vpack.c.b16 %v1984, %v1975
    %v2435 = vpack.c.b16 %v1994, %v1985
    %v2436 = vpack.c.b16 %v1995, %v1986
    %v2437 = vpack.c.b16 %v1996, %v1987
    %v2438 = vpack.c.b16 %v1997, %v1988
    %v2439 = vpack.c.b16 %v1998, %v1989
    %v2440 = vpack.c.b16 %v1999, %v1990
    %v2441 = vpack.c.b16 %v2000, %v1991
    %v2442 = vpack.c.b16 %v2001, %v1992
    %v2443 = vpack.c.b16 %v2002, %v1993
    %v2444 = vpack.c.b16 %v2012, %v2003
    %v2445 = vpack.c.b16 %v2013, %v2004
    %v2446 = vpack.c.b16 %v2014, %v2005
    %v2447 = vpack.c.b16 %v2015, %v2006
    %v2448 = vpack.c.b16 %v2016, %v2007
    %v2449 = vpack.c.b16 %v2017, %v2008
    %v2450 = vpack.c.b16 %v2018, %v2009
    %v2451 = vpack.c.b16 %v2019, %v2010
    %v2452 = vpack.c.b16 %v2020, %v2011
    %2885 = vmatpush.bf16.msra.mxu0 %v2084
    %2886 = vmatpush.bf16.msra.mxu0 %v2075
    %2887 = vmatpush.bf16.msra.mxu0 %v2066
    %2888 = vmatpush.bf16.msra.mxu0 %v2057
    %2889 = vmatpush.bf16.msra.mxu0 %v2048
    %2890 = vmatpush.bf16.msra.mxu0 %v2039
    %2891 = vmatpush.bf16.msra.mxu0 %v2030
    %2892 = vmatpush.bf16.msra.mxu0 %v2021
    %2893 = vmatmul.bf16.gmra.mxu0 %v169
    %v2894 = vpop.f32.mrf.mxu0
    %v2895 = vadd.f32 %v659, %v2894
    %v2896 = vpop.f32.mrf.mxu0
    %2897 = vdwg.mxu0
    %2898 = vmatpush.bf16.msra.mxu0 %v2156
    %2899 = vmatpush.bf16.msra.mxu0 %v2147
    %2900 = vmatpush.bf16.msra.mxu0 %v2138
    %2901 = vmatpush.bf16.msra.mxu0 %v2129
    %2902 = vmatpush.bf16.msra.mxu0 %v2120
    %2903 = vmatpush.bf16.msra.mxu0 %v2111
    %2904 = vmatpush.bf16.msra.mxu0 %v2102
    %2905 = vmatpush.bf16.msra.mxu0 %v2093
    %2906 = vmatmul.bf16.gmra.mxu0 %v170
    %v2907 = vpop.f32.mrf.mxu0
    %v2908 = vadd.f32 %v2895, %v2907
    %v2909 = vpop.f32.mrf.mxu0
    %2910 = vdwg.mxu0
    %2911 = vmatpush.bf16.msra.mxu0 %v2228
    %2912 = vmatpush.bf16.msra.mxu0 %v2219
    %2913 = vmatpush.bf16.msra.mxu0 %v2210
    %2914 = vmatpush.bf16.msra.mxu0 %v2201
    %2915 = vmatpush.bf16.msra.mxu0 %v2192
    %2916 = vmatpush.bf16.msra.mxu0 %v2183
    %2917 = vmatpush.bf16.msra.mxu0 %v2174
    %2918 = vmatpush.bf16.msra.mxu0 %v2165
    %2919 = vmatmul.bf16.gmra.mxu0 %v171
    %v2920 = vpop.f32.mrf.mxu0
    %v2921 = vadd.f32 %v2908, %v2920
    %v2922 = vpop.f32.mrf.mxu0
    %2923 = vdwg.mxu0
    %2924 = vmatpush.bf16.msra.mxu0 %v2300
    %2925 = vmatpush.bf16.msra.mxu0 %v2291
    %2926 = vmatpush.bf16.msra.mxu0 %v2282
    %2927 = vmatpush.bf16.msra.mxu0 %v2273
    %2928 = vmatpush.bf16.msra.mxu0 %v2264
    %2929 = vmatpush.bf16.msra.mxu0 %v2255
    %2930 = vmatpush.bf16.msra.mxu0 %v2246
    %2931 = vmatpush.bf16.msra.mxu0 %v2237
    %2932 = vmatmul.bf16.gmra.mxu0 %v172
    %v2933 = vpop.f32.mrf.mxu0
    %v2934 = vadd.f32 %v2921, %v2933
    %v2935 = vpop.f32.mrf.mxu0
    %2936 = vdwg.mxu0
    %2937 = vmatpush.bf16.msra.mxu0 %v2372
    %2938 = vmatpush.bf16.msra.mxu0 %v2363
    %2939 = vmatpush.bf16.msra.mxu0 %v2354
    %2940 = vmatpush.bf16.msra.mxu0 %v2345
    %2941 = vmatpush.bf16.msra.mxu0 %v2336
    %2942 = vmatpush.bf16.msra.mxu0 %v2327
    %2943 = vmatpush.bf16.msra.mxu0 %v2318
    %2944 = vmatpush.bf16.msra.mxu0 %v2309
    %2945 = vmatmul.bf16.gmra.mxu0 %v173
    %v2946 = vpop.f32.mrf.mxu0
    %v2947 = vadd.f32 %v2934, %v2946
    %v2948 = vpop.f32.mrf.mxu0
    %2949 = vdwg.mxu0
    %2950 = vmatpush.bf16.msra.mxu0 %v2444
    %2951 = vmatpush.bf16.msra.mxu0 %v2435
    %2952 = vmatpush.bf16.msra.mxu0 %v2426
    %2953 = vmatpush.bf16.msra.mxu0 %v2417
    %2954 = vmatpush.bf16.msra.mxu0 %v2408
    %2955 = vmatpush.bf16.msra.mxu0 %v2399
    %2956 = vmatpush.bf16.msra.mxu0 %v2390
    %2957 = vmatpush.bf16.msra.mxu0 %v2381
    %2958 = vmatmul.bf16.gmra.mxu0 %v174
    %v2959 = vpop.f32.mrf.mxu0
    %v2960 = vadd.f32 %v2947, %v2959
    %v2961 = vpop.f32.mrf.mxu0
    %2962 = vdwg.mxu0
    %2963 = vmatpush.bf16.msra.mxu0 %v2085
    %2964 = vmatpush.bf16.msra.mxu0 %v2076
    %2965 = vmatpush.bf16.msra.mxu0 %v2067
    %2966 = vmatpush.bf16.msra.mxu0 %v2058
    %2967 = vmatpush.bf16.msra.mxu0 %v2049
    %2968 = vmatpush.bf16.msra.mxu0 %v2040
    %2969 = vmatpush.bf16.msra.mxu0 %v2031
    %2970 = vmatpush.bf16.msra.mxu0 %v2022
    %2971 = vmatmul.bf16.gmra.mxu0 %v169
    %v2972 = vpop.f32.mrf.mxu0
    %v2973 = vadd.f32 %v660, %v2972
    %v2974 = vpop.f32.mrf.mxu0
    %2975 = vdwg.mxu0
    %2976 = vmatpush.bf16.msra.mxu0 %v2157
    %2977 = vmatpush.bf16.msra.mxu0 %v2148
    %2978 = vmatpush.bf16.msra.mxu0 %v2139
    %2979 = vmatpush.bf16.msra.mxu0 %v2130
    %2980 = vmatpush.bf16.msra.mxu0 %v2121
    %2981 = vmatpush.bf16.msra.mxu0 %v2112
    %2982 = vmatpush.bf16.msra.mxu0 %v2103
    %2983 = vmatpush.bf16.msra.mxu0 %v2094
    %2984 = vmatmul.bf16.gmra.mxu0 %v170
    %v2985 = vpop.f32.mrf.mxu0
    %v2986 = vadd.f32 %v2973, %v2985
    %v2987 = vpop.f32.mrf.mxu0
    %2988 = vdwg.mxu0
    %2989 = vmatpush.bf16.msra.mxu0 %v2229
    %2990 = vmatpush.bf16.msra.mxu0 %v2220
    %2991 = vmatpush.bf16.msra.mxu0 %v2211
    %2992 = vmatpush.bf16.msra.mxu0 %v2202
    %2993 = vmatpush.bf16.msra.mxu0 %v2193
    %2994 = vmatpush.bf16.msra.mxu0 %v2184
    %2995 = vmatpush.bf16.msra.mxu0 %v2175
    %2996 = vmatpush.bf16.msra.mxu0 %v2166
    %2997 = vmatmul.bf16.gmra.mxu0 %v171
    %v2998 = vpop.f32.mrf.mxu0
    %v2999 = vadd.f32 %v2986, %v2998
    %v3000 = vpop.f32.mrf.mxu0
    %3001 = vdwg.mxu0
    %3002 = vmatpush.bf16.msra.mxu0 %v2301
    %3003 = vmatpush.bf16.msra.mxu0 %v2292
    %3004 = vmatpush.bf16.msra.mxu0 %v2283
    %3005 = vmatpush.bf16.msra.mxu0 %v2274
    %3006 = vmatpush.bf16.msra.mxu0 %v2265
    %3007 = vmatpush.bf16.msra.mxu0 %v2256
    %3008 = vmatpush.bf16.msra.mxu0 %v2247
    %3009 = vmatpush.bf16.msra.mxu0 %v2238
    %3010 = vmatmul.bf16.gmra.mxu0 %v172
    %v3011 = vpop.f32.mrf.mxu0
    %v3012 = vadd.f32 %v2999, %v3011
    %v3013 = vpop.f32.mrf.mxu0
    %3014 = vdwg.mxu0
    %3015 = vmatpush.bf16.msra.mxu0 %v2373
    %3016 = vmatpush.bf16.msra.mxu0 %v2364
    %3017 = vmatpush.bf16.msra.mxu0 %v2355
    %3018 = vmatpush.bf16.msra.mxu0 %v2346
    %3019 = vmatpush.bf16.msra.mxu0 %v2337
    %3020 = vmatpush.bf16.msra.mxu0 %v2328
    %3021 = vmatpush.bf16.msra.mxu0 %v2319
    %3022 = vmatpush.bf16.msra.mxu0 %v2310
    %3023 = vmatmul.bf16.gmra.mxu0 %v173
    %v3024 = vpop.f32.mrf.mxu0
    %v3025 = vadd.f32 %v3012, %v3024
    %v3026 = vpop.f32.mrf.mxu0
    %3027 = vdwg.mxu0
    %3028 = vmatpush.bf16.msra.mxu0 %v2445
    %3029 = vmatpush.bf16.msra.mxu0 %v2436
    %3030 = vmatpush.bf16.msra.mxu0 %v2427
    %3031 = vmatpush.bf16.msra.mxu0 %v2418
    %3032 = vmatpush.bf16.msra.mxu0 %v2409
    %3033 = vmatpush.bf16.msra.mxu0 %v2400
    %3034 = vmatpush.bf16.msra.mxu0 %v2391
    %3035 = vmatpush.bf16.msra.mxu0 %v2382
    %3036 = vmatmul.bf16.gmra.mxu0 %v174
    %v3037 = vpop.f32.mrf.mxu0
    %v3038 = vadd.f32 %v3025, %v3037
    %v3039 = vpop.f32.mrf.mxu0
    %3040 = vdwg.mxu0
    %3041 = vmatpush.bf16.msra.mxu0 %v2086
    %3042 = vmatpush.bf16.msra.mxu0 %v2077
    %3043 = vmatpush.bf16.msra.mxu0 %v2068
    %3044 = vmatpush.bf16.msra.mxu0 %v2059
    %3045 = vmatpush.bf16.msra.mxu0 %v2050
    %3046 = vmatpush.bf16.msra.mxu0 %v2041
    %3047 = vmatpush.bf16.msra.mxu0 %v2032
    %3048 = vmatpush.bf16.msra.mxu0 %v2023
    %3049 = vmatmul.bf16.gmra.mxu0 %v169
    %v3050 = vpop.f32.mrf.mxu0
    %v3051 = vadd.f32 %v661, %v3050
    %v3052 = vpop.f32.mrf.mxu0
    %3053 = vdwg.mxu0
    %3054 = vmatpush.bf16.msra.mxu0 %v2158
    %3055 = vmatpush.bf16.msra.mxu0 %v2149
    %3056 = vmatpush.bf16.msra.mxu0 %v2140
    %3057 = vmatpush.bf16.msra.mxu0 %v2131
    %3058 = vmatpush.bf16.msra.mxu0 %v2122
    %3059 = vmatpush.bf16.msra.mxu0 %v2113
    %3060 = vmatpush.bf16.msra.mxu0 %v2104
    %3061 = vmatpush.bf16.msra.mxu0 %v2095
    %3062 = vmatmul.bf16.gmra.mxu0 %v170
    %v3063 = vpop.f32.mrf.mxu0
    %v3064 = vadd.f32 %v3051, %v3063
    %v3065 = vpop.f32.mrf.mxu0
    %3066 = vdwg.mxu0
    %3067 = vmatpush.bf16.msra.mxu0 %v2230
    %3068 = vmatpush.bf16.msra.mxu0 %v2221
    %3069 = vmatpush.bf16.msra.mxu0 %v2212
    %3070 = vmatpush.bf16.msra.mxu0 %v2203
    %3071 = vmatpush.bf16.msra.mxu0 %v2194
    %3072 = vmatpush.bf16.msra.mxu0 %v2185
    %3073 = vmatpush.bf16.msra.mxu0 %v2176
    %3074 = vmatpush.bf16.msra.mxu0 %v2167
    %3075 = vmatmul.bf16.gmra.mxu0 %v171
    %v3076 = vpop.f32.mrf.mxu0
    %v3077 = vadd.f32 %v3064, %v3076
    %v3078 = vpop.f32.mrf.mxu0
    %3079 = vdwg.mxu0
    %3080 = vmatpush.bf16.msra.mxu0 %v2302
    %3081 = vmatpush.bf16.msra.mxu0 %v2293
    %3082 = vmatpush.bf16.msra.mxu0 %v2284
    %3083 = vmatpush.bf16.msra.mxu0 %v2275
    %3084 = vmatpush.bf16.msra.mxu0 %v2266
    %3085 = vmatpush.bf16.msra.mxu0 %v2257
    %3086 = vmatpush.bf16.msra.mxu0 %v2248
    %3087 = vmatpush.bf16.msra.mxu0 %v2239
    %3088 = vmatmul.bf16.gmra.mxu0 %v172
    %v3089 = vpop.f32.mrf.mxu0
    %v3090 = vadd.f32 %v3077, %v3089
    %v3091 = vpop.f32.mrf.mxu0
    %3092 = vdwg.mxu0
    %3093 = vmatpush.bf16.msra.mxu0 %v2374
    %3094 = vmatpush.bf16.msra.mxu0 %v2365
    %3095 = vmatpush.bf16.msra.mxu0 %v2356
    %3096 = vmatpush.bf16.msra.mxu0 %v2347
    %3097 = vmatpush.bf16.msra.mxu0 %v2338
    %3098 = vmatpush.bf16.msra.mxu0 %v2329
    %3099 = vmatpush.bf16.msra.mxu0 %v2320
    %3100 = vmatpush.bf16.msra.mxu0 %v2311
    %3101 = vmatmul.bf16.gmra.mxu0 %v173
    %v3102 = vpop.f32.mrf.mxu0
    %v3103 = vadd.f32 %v3090, %v3102
    %v3104 = vpop.f32.mrf.mxu0
    %3105 = vdwg.mxu0
    %3106 = vmatpush.bf16.msra.mxu0 %v2446
    %3107 = vmatpush.bf16.msra.mxu0 %v2437
    %3108 = vmatpush.bf16.msra.mxu0 %v2428
    %3109 = vmatpush.bf16.msra.mxu0 %v2419
    %3110 = vmatpush.bf16.msra.mxu0 %v2410
    %3111 = vmatpush.bf16.msra.mxu0 %v2401
    %3112 = vmatpush.bf16.msra.mxu0 %v2392
    %3113 = vmatpush.bf16.msra.mxu0 %v2383
    %3114 = vmatmul.bf16.gmra.mxu0 %v174
    %v3115 = vpop.f32.mrf.mxu0
    %v3116 = vadd.f32 %v3103, %v3115
    %v3117 = vpop.f32.mrf.mxu0
    %3118 = vdwg.mxu0
    %3119 = vmatpush.bf16.msra.mxu0 %v2087
    %3120 = vmatpush.bf16.msra.mxu0 %v2078
    %3121 = vmatpush.bf16.msra.mxu0 %v2069
    %3122 = vmatpush.bf16.msra.mxu0 %v2060
    %3123 = vmatpush.bf16.msra.mxu0 %v2051
    %3124 = vmatpush.bf16.msra.mxu0 %v2042
    %3125 = vmatpush.bf16.msra.mxu0 %v2033
    %3126 = vmatpush.bf16.msra.mxu0 %v2024
    %3127 = vmatmul.bf16.gmra.mxu0 %v169
    %v3128 = vpop.f32.mrf.mxu0
    %v3129 = vadd.f32 %v662, %v3128
    %v3130 = vpop.f32.mrf.mxu0
    %3131 = vdwg.mxu0
    %3132 = vmatpush.bf16.msra.mxu0 %v2159
    %3133 = vmatpush.bf16.msra.mxu0 %v2150
    %3134 = vmatpush.bf16.msra.mxu0 %v2141
    %3135 = vmatpush.bf16.msra.mxu0 %v2132
    %3136 = vmatpush.bf16.msra.mxu0 %v2123
    %3137 = vmatpush.bf16.msra.mxu0 %v2114
    %3138 = vmatpush.bf16.msra.mxu0 %v2105
    %3139 = vmatpush.bf16.msra.mxu0 %v2096
    %3140 = vmatmul.bf16.gmra.mxu0 %v170
    %v3141 = vpop.f32.mrf.mxu0
    %v3142 = vadd.f32 %v3129, %v3141
    %v3143 = vpop.f32.mrf.mxu0
    %3144 = vdwg.mxu0
    %3145 = vmatpush.bf16.msra.mxu0 %v2231
    %3146 = vmatpush.bf16.msra.mxu0 %v2222
    %3147 = vmatpush.bf16.msra.mxu0 %v2213
    %3148 = vmatpush.bf16.msra.mxu0 %v2204
    %3149 = vmatpush.bf16.msra.mxu0 %v2195
    %3150 = vmatpush.bf16.msra.mxu0 %v2186
    %3151 = vmatpush.bf16.msra.mxu0 %v2177
    %3152 = vmatpush.bf16.msra.mxu0 %v2168
    %3153 = vmatmul.bf16.gmra.mxu0 %v171
    %v3154 = vpop.f32.mrf.mxu0
    %v3155 = vadd.f32 %v3142, %v3154
    %v3156 = vpop.f32.mrf.mxu0
    %3157 = vdwg.mxu0
    %3158 = vmatpush.bf16.msra.mxu0 %v2303
    %3159 = vmatpush.bf16.msra.mxu0 %v2294
    %3160 = vmatpush.bf16.msra.mxu0 %v2285
    %3161 = vmatpush.bf16.msra.mxu0 %v2276
    %3162 = vmatpush.bf16.msra.mxu0 %v2267
    %3163 = vmatpush.bf16.msra.mxu0 %v2258
    %3164 = vmatpush.bf16.msra.mxu0 %v2249
    %3165 = vmatpush.bf16.msra.mxu0 %v2240
    %3166 = vmatmul.bf16.gmra.mxu0 %v172
    %v3167 = vpop.f32.mrf.mxu0
    %v3168 = vadd.f32 %v3155, %v3167
    %v3169 = vpop.f32.mrf.mxu0
    %3170 = vdwg.mxu0
    %3171 = vmatpush.bf16.msra.mxu0 %v2375
    %3172 = vmatpush.bf16.msra.mxu0 %v2366
    %3173 = vmatpush.bf16.msra.mxu0 %v2357
    %3174 = vmatpush.bf16.msra.mxu0 %v2348
    %3175 = vmatpush.bf16.msra.mxu0 %v2339
    %3176 = vmatpush.bf16.msra.mxu0 %v2330
    %3177 = vmatpush.bf16.msra.mxu0 %v2321
    %3178 = vmatpush.bf16.msra.mxu0 %v2312
    %3179 = vmatmul.bf16.gmra.mxu0 %v173
    %v3180 = vpop.f32.mrf.mxu0
    %v3181 = vadd.f32 %v3168, %v3180
    %v3182 = vpop.f32.mrf.mxu0
    %3183 = vdwg.mxu0
    %3184 = vmatpush.bf16.msra.mxu0 %v2447
    %3185 = vmatpush.bf16.msra.mxu0 %v2438
    %3186 = vmatpush.bf16.msra.mxu0 %v2429
    %3187 = vmatpush.bf16.msra.mxu0 %v2420
    %3188 = vmatpush.bf16.msra.mxu0 %v2411
    %3189 = vmatpush.bf16.msra.mxu0 %v2402
    %3190 = vmatpush.bf16.msra.mxu0 %v2393
    %3191 = vmatpush.bf16.msra.mxu0 %v2384
    %3192 = vmatmul.bf16.gmra.mxu0 %v174
    %v3193 = vpop.f32.mrf.mxu0
    %v3194 = vadd.f32 %v3181, %v3193
    %v3195 = vpop.f32.mrf.mxu0
    %3196 = vdwg.mxu0
    %3197 = vmatpush.bf16.msra.mxu0 %v2088
    %3198 = vmatpush.bf16.msra.mxu0 %v2079
    %3199 = vmatpush.bf16.msra.mxu0 %v2070
    %3200 = vmatpush.bf16.msra.mxu0 %v2061
    %3201 = vmatpush.bf16.msra.mxu0 %v2052
    %3202 = vmatpush.bf16.msra.mxu0 %v2043
    %3203 = vmatpush.bf16.msra.mxu0 %v2034
    %3204 = vmatpush.bf16.msra.mxu0 %v2025
    %3205 = vmatmul.bf16.gmra.mxu0 %v169
    %v3206 = vpop.f32.mrf.mxu0
    %v3207 = vadd.f32 %v663, %v3206
    %v3208 = vpop.f32.mrf.mxu0
    %3209 = vdwg.mxu0
    %3210 = vmatpush.bf16.msra.mxu0 %v2160
    %3211 = vmatpush.bf16.msra.mxu0 %v2151
    %3212 = vmatpush.bf16.msra.mxu0 %v2142
    %3213 = vmatpush.bf16.msra.mxu0 %v2133
    %3214 = vmatpush.bf16.msra.mxu0 %v2124
    %3215 = vmatpush.bf16.msra.mxu0 %v2115
    %3216 = vmatpush.bf16.msra.mxu0 %v2106
    %3217 = vmatpush.bf16.msra.mxu0 %v2097
    %3218 = vmatmul.bf16.gmra.mxu0 %v170
    %v3219 = vpop.f32.mrf.mxu0
    %v3220 = vadd.f32 %v3207, %v3219
    %v3221 = vpop.f32.mrf.mxu0
    %3222 = vdwg.mxu0
    %3223 = vmatpush.bf16.msra.mxu0 %v2232
    %3224 = vmatpush.bf16.msra.mxu0 %v2223
    %3225 = vmatpush.bf16.msra.mxu0 %v2214
    %3226 = vmatpush.bf16.msra.mxu0 %v2205
    %3227 = vmatpush.bf16.msra.mxu0 %v2196
    %3228 = vmatpush.bf16.msra.mxu0 %v2187
    %3229 = vmatpush.bf16.msra.mxu0 %v2178
    %3230 = vmatpush.bf16.msra.mxu0 %v2169
    %3231 = vmatmul.bf16.gmra.mxu0 %v171
    %v3232 = vpop.f32.mrf.mxu0
    %v3233 = vadd.f32 %v3220, %v3232
    %v3234 = vpop.f32.mrf.mxu0
    %3235 = vdwg.mxu0
    %3236 = vmatpush.bf16.msra.mxu0 %v2304
    %3237 = vmatpush.bf16.msra.mxu0 %v2295
    %3238 = vmatpush.bf16.msra.mxu0 %v2286
    %3239 = vmatpush.bf16.msra.mxu0 %v2277
    %3240 = vmatpush.bf16.msra.mxu0 %v2268
    %3241 = vmatpush.bf16.msra.mxu0 %v2259
    %3242 = vmatpush.bf16.msra.mxu0 %v2250
    %3243 = vmatpush.bf16.msra.mxu0 %v2241
    %3244 = vmatmul.bf16.gmra.mxu0 %v172
    %v3245 = vpop.f32.mrf.mxu0
    %v3246 = vadd.f32 %v3233, %v3245
    %v3247 = vpop.f32.mrf.mxu0
    %3248 = vdwg.mxu0
    %3249 = vmatpush.bf16.msra.mxu0 %v2376
    %3250 = vmatpush.bf16.msra.mxu0 %v2367
    %3251 = vmatpush.bf16.msra.mxu0 %v2358
    %3252 = vmatpush.bf16.msra.mxu0 %v2349
    %3253 = vmatpush.bf16.msra.mxu0 %v2340
    %3254 = vmatpush.bf16.msra.mxu0 %v2331
    %3255 = vmatpush.bf16.msra.mxu0 %v2322
    %3256 = vmatpush.bf16.msra.mxu0 %v2313
    %3257 = vmatmul.bf16.gmra.mxu0 %v173
    %v3258 = vpop.f32.mrf.mxu0
    %v3259 = vadd.f32 %v3246, %v3258
    %v3260 = vpop.f32.mrf.mxu0
    %3261 = vdwg.mxu0
    %3262 = vmatpush.bf16.msra.mxu0 %v2448
    %3263 = vmatpush.bf16.msra.mxu0 %v2439
    %3264 = vmatpush.bf16.msra.mxu0 %v2430
    %3265 = vmatpush.bf16.msra.mxu0 %v2421
    %3266 = vmatpush.bf16.msra.mxu0 %v2412
    %3267 = vmatpush.bf16.msra.mxu0 %v2403
    %3268 = vmatpush.bf16.msra.mxu0 %v2394
    %3269 = vmatpush.bf16.msra.mxu0 %v2385
    %3270 = vmatmul.bf16.gmra.mxu0 %v174
    %v3271 = vpop.f32.mrf.mxu0
    %v3272 = vadd.f32 %v3259, %v3271
    %v3273 = vpop.f32.mrf.mxu0
    %3274 = vdwg.mxu0
    %3275 = vmatpush.bf16.msra.mxu0 %v2089
    %3276 = vmatpush.bf16.msra.mxu0 %v2080
    %3277 = vmatpush.bf16.msra.mxu0 %v2071
    %3278 = vmatpush.bf16.msra.mxu0 %v2062
    %3279 = vmatpush.bf16.msra.mxu0 %v2053
    %3280 = vmatpush.bf16.msra.mxu0 %v2044
    %3281 = vmatpush.bf16.msra.mxu0 %v2035
    %3282 = vmatpush.bf16.msra.mxu0 %v2026
    %3283 = vmatmul.bf16.gmra.mxu0 %v169
    %v3284 = vpop.f32.mrf.mxu0
    %v3285 = vadd.f32 %v664, %v3284
    %v3286 = vpop.f32.mrf.mxu0
    %3287 = vdwg.mxu0
    %3288 = vmatpush.bf16.msra.mxu0 %v2161
    %3289 = vmatpush.bf16.msra.mxu0 %v2152
    %3290 = vmatpush.bf16.msra.mxu0 %v2143
    %3291 = vmatpush.bf16.msra.mxu0 %v2134
    %3292 = vmatpush.bf16.msra.mxu0 %v2125
    %3293 = vmatpush.bf16.msra.mxu0 %v2116
    %3294 = vmatpush.bf16.msra.mxu0 %v2107
    %3295 = vmatpush.bf16.msra.mxu0 %v2098
    %3296 = vmatmul.bf16.gmra.mxu0 %v170
    %v3297 = vpop.f32.mrf.mxu0
    %v3298 = vadd.f32 %v3285, %v3297
    %v3299 = vpop.f32.mrf.mxu0
    %3300 = vdwg.mxu0
    %3301 = vmatpush.bf16.msra.mxu0 %v2233
    %3302 = vmatpush.bf16.msra.mxu0 %v2224
    %3303 = vmatpush.bf16.msra.mxu0 %v2215
    %3304 = vmatpush.bf16.msra.mxu0 %v2206
    %3305 = vmatpush.bf16.msra.mxu0 %v2197
    %3306 = vmatpush.bf16.msra.mxu0 %v2188
    %3307 = vmatpush.bf16.msra.mxu0 %v2179
    %3308 = vmatpush.bf16.msra.mxu0 %v2170
    %3309 = vmatmul.bf16.gmra.mxu0 %v171
    %v3310 = vpop.f32.mrf.mxu0
    %v3311 = vadd.f32 %v3298, %v3310
    %v3312 = vpop.f32.mrf.mxu0
    %3313 = vdwg.mxu0
    %3314 = vmatpush.bf16.msra.mxu0 %v2305
    %3315 = vmatpush.bf16.msra.mxu0 %v2296
    %3316 = vmatpush.bf16.msra.mxu0 %v2287
    %3317 = vmatpush.bf16.msra.mxu0 %v2278
    %3318 = vmatpush.bf16.msra.mxu0 %v2269
    %3319 = vmatpush.bf16.msra.mxu0 %v2260
    %3320 = vmatpush.bf16.msra.mxu0 %v2251
    %3321 = vmatpush.bf16.msra.mxu0 %v2242
    %3322 = vmatmul.bf16.gmra.mxu0 %v172
    %v3323 = vpop.f32.mrf.mxu0
    %v3324 = vadd.f32 %v3311, %v3323
    %v3325 = vpop.f32.mrf.mxu0
    %3326 = vdwg.mxu0
    %3327 = vmatpush.bf16.msra.mxu0 %v2377
    %3328 = vmatpush.bf16.msra.mxu0 %v2368
    %3329 = vmatpush.bf16.msra.mxu0 %v2359
    %3330 = vmatpush.bf16.msra.mxu0 %v2350
    %3331 = vmatpush.bf16.msra.mxu0 %v2341
    %3332 = vmatpush.bf16.msra.mxu0 %v2332
    %3333 = vmatpush.bf16.msra.mxu0 %v2323
    %3334 = vmatpush.bf16.msra.mxu0 %v2314
    %3335 = vmatmul.bf16.gmra.mxu0 %v173
    %v3336 = vpop.f32.mrf.mxu0
    %v3337 = vadd.f32 %v3324, %v3336
    %v3338 = vpop.f32.mrf.mxu0
    %3339 = vdwg.mxu0
    %3340 = vmatpush.bf16.msra.mxu0 %v2449
    %3341 = vmatpush.bf16.msra.mxu0 %v2440
    %3342 = vmatpush.bf16.msra.mxu0 %v2431
    %3343 = vmatpush.bf16.msra.mxu0 %v2422
    %3344 = vmatpush.bf16.msra.mxu0 %v2413
    %3345 = vmatpush.bf16.msra.mxu0 %v2404
    %3346 = vmatpush.bf16.msra.mxu0 %v2395
    %3347 = vmatpush.bf16.msra.mxu0 %v2386
    %3348 = vmatmul.bf16.gmra.mxu0 %v174
    %v3349 = vpop.f32.mrf.mxu0
    %v3350 = vadd.f32 %v3337, %v3349
    %v3351 = vpop.f32.mrf.mxu0
    %3352 = vdwg.mxu0
    %3353 = vmatpush.bf16.msra.mxu0 %v2090
    %3354 = vmatpush.bf16.msra.mxu0 %v2081
    %3355 = vmatpush.bf16.msra.mxu0 %v2072
    %3356 = vmatpush.bf16.msra.mxu0 %v2063
    %3357 = vmatpush.bf16.msra.mxu0 %v2054
    %3358 = vmatpush.bf16.msra.mxu0 %v2045
    %3359 = vmatpush.bf16.msra.mxu0 %v2036
    %3360 = vmatpush.bf16.msra.mxu0 %v2027
    %3361 = vmatmul.bf16.gmra.mxu0 %v169
    %v3362 = vpop.f32.mrf.mxu0
    %v3363 = vadd.f32 %v665, %v3362
    %v3364 = vpop.f32.mrf.mxu0
    %3365 = vdwg.mxu0
    %3366 = vmatpush.bf16.msra.mxu0 %v2162
    %3367 = vmatpush.bf16.msra.mxu0 %v2153
    %3368 = vmatpush.bf16.msra.mxu0 %v2144
    %3369 = vmatpush.bf16.msra.mxu0 %v2135
    %3370 = vmatpush.bf16.msra.mxu0 %v2126
    %3371 = vmatpush.bf16.msra.mxu0 %v2117
    %3372 = vmatpush.bf16.msra.mxu0 %v2108
    %3373 = vmatpush.bf16.msra.mxu0 %v2099
    %3374 = vmatmul.bf16.gmra.mxu0 %v170
    %v3375 = vpop.f32.mrf.mxu0
    %v3376 = vadd.f32 %v3363, %v3375
    %v3377 = vpop.f32.mrf.mxu0
    %3378 = vdwg.mxu0
    %3379 = vmatpush.bf16.msra.mxu0 %v2234
    %3380 = vmatpush.bf16.msra.mxu0 %v2225
    %3381 = vmatpush.bf16.msra.mxu0 %v2216
    %3382 = vmatpush.bf16.msra.mxu0 %v2207
    %3383 = vmatpush.bf16.msra.mxu0 %v2198
    %3384 = vmatpush.bf16.msra.mxu0 %v2189
    %3385 = vmatpush.bf16.msra.mxu0 %v2180
    %3386 = vmatpush.bf16.msra.mxu0 %v2171
    %3387 = vmatmul.bf16.gmra.mxu0 %v171
    %v3388 = vpop.f32.mrf.mxu0
    %v3389 = vadd.f32 %v3376, %v3388
    %v3390 = vpop.f32.mrf.mxu0
    %3391 = vdwg.mxu0
    %3392 = vmatpush.bf16.msra.mxu0 %v2306
    %3393 = vmatpush.bf16.msra.mxu0 %v2297
    %3394 = vmatpush.bf16.msra.mxu0 %v2288
    %3395 = vmatpush.bf16.msra.mxu0 %v2279
    %3396 = vmatpush.bf16.msra.mxu0 %v2270
    %3397 = vmatpush.bf16.msra.mxu0 %v2261
    %3398 = vmatpush.bf16.msra.mxu0 %v2252
    %3399 = vmatpush.bf16.msra.mxu0 %v2243
    %3400 = vmatmul.bf16.gmra.mxu0 %v172
    %v3401 = vpop.f32.mrf.mxu0
    %v3402 = vadd.f32 %v3389, %v3401
    %v3403 = vpop.f32.mrf.mxu0
    %3404 = vdwg.mxu0
    %3405 = vmatpush.bf16.msra.mxu0 %v2378
    %3406 = vmatpush.bf16.msra.mxu0 %v2369
    %3407 = vmatpush.bf16.msra.mxu0 %v2360
    %3408 = vmatpush.bf16.msra.mxu0 %v2351
    %3409 = vmatpush.bf16.msra.mxu0 %v2342
    %3410 = vmatpush.bf16.msra.mxu0 %v2333
    %3411 = vmatpush.bf16.msra.mxu0 %v2324
    %3412 = vmatpush.bf16.msra.mxu0 %v2315
    %3413 = vmatmul.bf16.gmra.mxu0 %v173
    %v3414 = vpop.f32.mrf.mxu0
    %v3415 = vadd.f32 %v3402, %v3414
    %v3416 = vpop.f32.mrf.mxu0
    %3417 = vdwg.mxu0
    %3418 = vmatpush.bf16.msra.mxu0 %v2450
    %3419 = vmatpush.bf16.msra.mxu0 %v2441
    %3420 = vmatpush.bf16.msra.mxu0 %v2432
    %3421 = vmatpush.bf16.msra.mxu0 %v2423
    %3422 = vmatpush.bf16.msra.mxu0 %v2414
    %3423 = vmatpush.bf16.msra.mxu0 %v2405
    %3424 = vmatpush.bf16.msra.mxu0 %v2396
    %3425 = vmatpush.bf16.msra.mxu0 %v2387
    %3426 = vmatmul.bf16.gmra.mxu0 %v174
    %v3427 = vpop.f32.mrf.mxu0
    %v3428 = vadd.f32 %v3415, %v3427
    %v3429 = vpop.f32.mrf.mxu0
    %3430 = vdwg.mxu0
    %3431 = vmatpush.bf16.msra.mxu0 %v2091
    %3432 = vmatpush.bf16.msra.mxu0 %v2082
    %3433 = vmatpush.bf16.msra.mxu0 %v2073
    %3434 = vmatpush.bf16.msra.mxu0 %v2064
    %3435 = vmatpush.bf16.msra.mxu0 %v2055
    %3436 = vmatpush.bf16.msra.mxu0 %v2046
    %3437 = vmatpush.bf16.msra.mxu0 %v2037
    %3438 = vmatpush.bf16.msra.mxu0 %v2028
    %3439 = vmatmul.bf16.gmra.mxu0 %v169
    %v3440 = vpop.f32.mrf.mxu0
    %v3441 = vadd.f32 %v666, %v3440
    %v3442 = vpop.f32.mrf.mxu0
    %3443 = vdwg.mxu0
    %3444 = vmatpush.bf16.msra.mxu0 %v2163
    %3445 = vmatpush.bf16.msra.mxu0 %v2154
    %3446 = vmatpush.bf16.msra.mxu0 %v2145
    %3447 = vmatpush.bf16.msra.mxu0 %v2136
    %3448 = vmatpush.bf16.msra.mxu0 %v2127
    %3449 = vmatpush.bf16.msra.mxu0 %v2118
    %3450 = vmatpush.bf16.msra.mxu0 %v2109
    %3451 = vmatpush.bf16.msra.mxu0 %v2100
    %3452 = vmatmul.bf16.gmra.mxu0 %v170
    %v3453 = vpop.f32.mrf.mxu0
    %v3454 = vadd.f32 %v3441, %v3453
    %v3455 = vpop.f32.mrf.mxu0
    %3456 = vdwg.mxu0
    %3457 = vmatpush.bf16.msra.mxu0 %v2235
    %3458 = vmatpush.bf16.msra.mxu0 %v2226
    %3459 = vmatpush.bf16.msra.mxu0 %v2217
    %3460 = vmatpush.bf16.msra.mxu0 %v2208
    %3461 = vmatpush.bf16.msra.mxu0 %v2199
    %3462 = vmatpush.bf16.msra.mxu0 %v2190
    %3463 = vmatpush.bf16.msra.mxu0 %v2181
    %3464 = vmatpush.bf16.msra.mxu0 %v2172
    %3465 = vmatmul.bf16.gmra.mxu0 %v171
    %v3466 = vpop.f32.mrf.mxu0
    %v3467 = vadd.f32 %v3454, %v3466
    %v3468 = vpop.f32.mrf.mxu0
    %3469 = vdwg.mxu0
    %3470 = vmatpush.bf16.msra.mxu0 %v2307
    %3471 = vmatpush.bf16.msra.mxu0 %v2298
    %3472 = vmatpush.bf16.msra.mxu0 %v2289
    %3473 = vmatpush.bf16.msra.mxu0 %v2280
    %3474 = vmatpush.bf16.msra.mxu0 %v2271
    %3475 = vmatpush.bf16.msra.mxu0 %v2262
    %3476 = vmatpush.bf16.msra.mxu0 %v2253
    %3477 = vmatpush.bf16.msra.mxu0 %v2244
    %3478 = vmatmul.bf16.gmra.mxu0 %v172
    %v3479 = vpop.f32.mrf.mxu0
    %v3480 = vadd.f32 %v3467, %v3479
    %v3481 = vpop.f32.mrf.mxu0
    %3482 = vdwg.mxu0
    %3483 = vmatpush.bf16.msra.mxu0 %v2379
    %3484 = vmatpush.bf16.msra.mxu0 %v2370
    %3485 = vmatpush.bf16.msra.mxu0 %v2361
    %3486 = vmatpush.bf16.msra.mxu0 %v2352
    %3487 = vmatpush.bf16.msra.mxu0 %v2343
    %3488 = vmatpush.bf16.msra.mxu0 %v2334
    %3489 = vmatpush.bf16.msra.mxu0 %v2325
    %3490 = vmatpush.bf16.msra.mxu0 %v2316
    %3491 = vmatmul.bf16.gmra.mxu0 %v173
    %v3492 = vpop.f32.mrf.mxu0
    %v3493 = vadd.f32 %v3480, %v3492
    %v3494 = vpop.f32.mrf.mxu0
    %3495 = vdwg.mxu0
    %3496 = vmatpush.bf16.msra.mxu0 %v2451
    %3497 = vmatpush.bf16.msra.mxu0 %v2442
    %3498 = vmatpush.bf16.msra.mxu0 %v2433
    %3499 = vmatpush.bf16.msra.mxu0 %v2424
    %3500 = vmatpush.bf16.msra.mxu0 %v2415
    %3501 = vmatpush.bf16.msra.mxu0 %v2406
    %3502 = vmatpush.bf16.msra.mxu0 %v2397
    %3503 = vmatpush.bf16.msra.mxu0 %v2388
    %3504 = vmatmul.bf16.gmra.mxu0 %v174
    %v3505 = vpop.f32.mrf.mxu0
    %v3506 = vadd.f32 %v3493, %v3505
    %v3507 = vpop.f32.mrf.mxu0
    %3508 = vdwg.mxu0
    %3509 = vmatpush.bf16.msra.mxu0 %v2092
    %3510 = vmatpush.bf16.msra.mxu0 %v2083
    %3511 = vmatpush.bf16.msra.mxu0 %v2074
    %3512 = vmatpush.bf16.msra.mxu0 %v2065
    %3513 = vmatpush.bf16.msra.mxu0 %v2056
    %3514 = vmatpush.bf16.msra.mxu0 %v2047
    %3515 = vmatpush.bf16.msra.mxu0 %v2038
    %3516 = vmatpush.bf16.msra.mxu0 %v2029
    %3517 = vmatmul.bf16.gmra.mxu0 %v169
    %v3518 = vpop.f32.mrf.mxu0
    %v3519 = vadd.f32 %v667, %v3518
    %v3520 = vpop.f32.mrf.mxu0
    %3521 = vdwg.mxu0
    %3522 = vmatpush.bf16.msra.mxu0 %v2164
    %3523 = vmatpush.bf16.msra.mxu0 %v2155
    %3524 = vmatpush.bf16.msra.mxu0 %v2146
    %3525 = vmatpush.bf16.msra.mxu0 %v2137
    %3526 = vmatpush.bf16.msra.mxu0 %v2128
    %3527 = vmatpush.bf16.msra.mxu0 %v2119
    %3528 = vmatpush.bf16.msra.mxu0 %v2110
    %3529 = vmatpush.bf16.msra.mxu0 %v2101
    %3530 = vmatmul.bf16.gmra.mxu0 %v170
    %v3531 = vpop.f32.mrf.mxu0
    %v3532 = vadd.f32 %v3519, %v3531
    %v3533 = vpop.f32.mrf.mxu0
    %3534 = vdwg.mxu0
    %3535 = vmatpush.bf16.msra.mxu0 %v2236
    %3536 = vmatpush.bf16.msra.mxu0 %v2227
    %3537 = vmatpush.bf16.msra.mxu0 %v2218
    %3538 = vmatpush.bf16.msra.mxu0 %v2209
    %3539 = vmatpush.bf16.msra.mxu0 %v2200
    %3540 = vmatpush.bf16.msra.mxu0 %v2191
    %3541 = vmatpush.bf16.msra.mxu0 %v2182
    %3542 = vmatpush.bf16.msra.mxu0 %v2173
    %3543 = vmatmul.bf16.gmra.mxu0 %v171
    %v3544 = vpop.f32.mrf.mxu0
    %v3545 = vadd.f32 %v3532, %v3544
    %v3546 = vpop.f32.mrf.mxu0
    %3547 = vdwg.mxu0
    %3548 = vmatpush.bf16.msra.mxu0 %v2308
    %3549 = vmatpush.bf16.msra.mxu0 %v2299
    %3550 = vmatpush.bf16.msra.mxu0 %v2290
    %3551 = vmatpush.bf16.msra.mxu0 %v2281
    %3552 = vmatpush.bf16.msra.mxu0 %v2272
    %3553 = vmatpush.bf16.msra.mxu0 %v2263
    %3554 = vmatpush.bf16.msra.mxu0 %v2254
    %3555 = vmatpush.bf16.msra.mxu0 %v2245
    %3556 = vmatmul.bf16.gmra.mxu0 %v172
    %v3557 = vpop.f32.mrf.mxu0
    %v3558 = vadd.f32 %v3545, %v3557
    %v3559 = vpop.f32.mrf.mxu0
    %3560 = vdwg.mxu0
    %3561 = vmatpush.bf16.msra.mxu0 %v2380
    %3562 = vmatpush.bf16.msra.mxu0 %v2371
    %3563 = vmatpush.bf16.msra.mxu0 %v2362
    %3564 = vmatpush.bf16.msra.mxu0 %v2353
    %3565 = vmatpush.bf16.msra.mxu0 %v2344
    %3566 = vmatpush.bf16.msra.mxu0 %v2335
    %3567 = vmatpush.bf16.msra.mxu0 %v2326
    %3568 = vmatpush.bf16.msra.mxu0 %v2317
    %3569 = vmatmul.bf16.gmra.mxu0 %v173
    %v3570 = vpop.f32.mrf.mxu0
    %v3571 = vadd.f32 %v3558, %v3570
    %v3572 = vpop.f32.mrf.mxu0
    %3573 = vdwg.mxu0
    %3574 = vmatpush.bf16.msra.mxu0 %v2452
    %3575 = vmatpush.bf16.msra.mxu0 %v2443
    %3576 = vmatpush.bf16.msra.mxu0 %v2434
    %3577 = vmatpush.bf16.msra.mxu0 %v2425
    %3578 = vmatpush.bf16.msra.mxu0 %v2416
    %3579 = vmatpush.bf16.msra.mxu0 %v2407
    %3580 = vmatpush.bf16.msra.mxu0 %v2398
    %3581 = vmatpush.bf16.msra.mxu0 %v2389
    %3582 = vmatmul.bf16.gmra.mxu0 %v174
    %v3583 = vpop.f32.mrf.mxu0
    %v3584 = vadd.f32 %v3571, %v3583
    %v3585 = vpop.f32.mrf.mxu0
    %3586 = vdwg.mxu0
    %v3587 = vmax.f32 %v2960, 0.0
    %v3588 = vmax.f32 %v3038, 0.0
    %v3589 = vmax.f32 %v3116, 0.0
    %v3590 = vmax.f32 %v3194, 0.0
    %v3591 = vmax.f32 %v3272, 0.0
    %v3592 = vmax.f32 %v3350, 0.0
    %v3593 = vmax.f32 %v3428, 0.0
    %v3594 = vmax.f32 %v3506, 0.0
    %v3595 = vmax.f32 %v3584, 0.0
    %v3596 = vpack.c.bf16 %v3587, %v3587
    %v3597 = vpack.c.bf16 %v3588, %v3588
    %v3598 = vpack.c.bf16 %v3589, %v3589
    %v3599 = vpack.c.bf16 %v3590, %v3590
    %v3600 = vpack.c.bf16 %v3591, %v3591
    %v3601 = vpack.c.bf16 %v3592, %v3592
    %v3602 = vpack.c.bf16 %v3593, %v3593
    %v3603 = vpack.c.bf16 %v3594, %v3594
    %v3604 = vpack.c.bf16 %v3595, %v3595
    %v3605 = vld [vmem:[#allocation8] sm:$0xff]
    %v3606 = vld [vmem:[#allocation8 + $0x8] sm:$0xff]
    %v3607 = vld [vmem:[#allocation8 + $0x10] sm:$0xff]
    %v3608 = vld [vmem:[#allocation8 + $0x18] sm:$0xff]
    %v3609 = vld [vmem:[#allocation8 + $0x20] sm:$0xff]
    %v3610 = vld [vmem:[#allocation8 + $0x28] sm:$0xff]
    %v3611 = vld [vmem:[#allocation8 + $0x30] sm:$0xff]
    %v3612 = vld [vmem:[#allocation8 + $0x38] sm:$0xff]
    %v3613 = vld [vmem:[#allocation8 + $0x40] sm:$0xff]
    %v3614 = vld [vmem:[#allocation8 + $0x48] sm:$0xff]
    %v3615 = vld [vmem:[#allocation8 + $0x50] sm:$0xff]
    %v3616 = vld [vmem:[#allocation8 + $0x58] sm:$0xff]
    %v3617 = vld [vmem:[#allocation8 + $0x60] sm:$0xff]
    %v3618 = vld [vmem:[#allocation8 + $0x68] sm:$0xff]
    %v3619 = vld [vmem:[#allocation8 + $0x70] sm:$0xff]
    %v3620 = vld [vmem:[#allocation8 + $0x78] sm:$0xff]
    %v3621 = vld [vmem:[#allocation8 + $0x80] sm:$0xff]
    %v3622 = vld [vmem:[#allocation8 + $0x88] sm:$0xff]
    %v3623 = vld [vmem:[#allocation8 + $0x90] sm:$0xff]
    %v3624 = vld [vmem:[#allocation8 + $0x98] sm:$0xff]
    %v3625 = vld [vmem:[#allocation8 + $0xa0] sm:$0xff]
    %v3626 = vld [vmem:[#allocation8 + $0xa8] sm:$0xff]
    %v3627 = vld [vmem:[#allocation8 + $0xb0] sm:$0xff]
    %v3628 = vld [vmem:[#allocation8 + $0xb8] sm:$0xff]
    %v3629 = vld [vmem:[#allocation8 + $0xc0] sm:$0xff]
    %v3630 = vld [vmem:[#allocation8 + $0xc8] sm:$0xff]
    %v3631 = vld [vmem:[#allocation8 + $0xd0] sm:$0xff]
    %v3632 = vld [vmem:[#allocation8 + $0xd8] sm:$0xff]
    %v3633 = vld [vmem:[#allocation8 + $0xe0] sm:$0xff]
    %v3634 = vld [vmem:[#allocation8 + $0xe8] sm:$0xff]
    %v3635 = vld [vmem:[#allocation8 + $0xf0] sm:$0xff]
    %v3636 = vld [vmem:[#allocation8 + $0xf8] sm:$0xff]
    %v3637 = vld [vmem:[#allocation8 + $0x100] sm:$0xff]
    %v3638 = vld [vmem:[#allocation8 + $0x108] sm:$0xff]
    %v3639 = vld [vmem:[#allocation8 + $0x110] sm:$0xff]
    %v3640 = vld [vmem:[#allocation8 + $0x118] sm:$0xff]
    %v3641 = vld [vmem:[#allocation8 + $0x120] sm:$0xff]
    %v3642 = vld [vmem:[#allocation8 + $0x128] sm:$0xff]
    %v3643 = vld [vmem:[#allocation8 + $0x130] sm:$0xff]
    %v3644 = vld [vmem:[#allocation8 + $0x138] sm:$0xff]
    %v3645 = vld [vmem:[#allocation8 + $0x140] sm:$0xff]
    %v3646 = vld [vmem:[#allocation8 + $0x148] sm:$0xff]
    %v3647 = vld [vmem:[#allocation8 + $0x150] sm:$0xff]
    %v3648 = vld [vmem:[#allocation8 + $0x158] sm:$0xff]
    %v3649 = vld [vmem:[#allocation8 + $0x160] sm:$0xff]
    %v3650 = vld [vmem:[#allocation8 + $0x168] sm:$0xff]
    %v3651 = vld [vmem:[#allocation8 + $0x170] sm:$0xff]
    %v3652 = vld [vmem:[#allocation8 + $0x178] sm:$0xff]
    %v3653 = vld [vmem:[#allocation8 + $0x180] sm:$0xff]
    %v3654 = vld [vmem:[#allocation8 + $0x188] sm:$0xff]
    %v3655 = vld [vmem:[#allocation8 + $0x190] sm:$0xff]
    %v3656 = vld [vmem:[#allocation8 + $0x198] sm:$0xff]
    %v3657 = vld [vmem:[#allocation8 + $0x1a0] sm:$0xff]
    %v3658 = vld [vmem:[#allocation8 + $0x1a8] sm:$0xff]
    %v3659 = vld [vmem:[#allocation8 + $0x1b0] sm:$0xff]
    %v3660 = vld [vmem:[#allocation8 + $0x1b8] sm:$0xff]
    %v3661 = vld [vmem:[#allocation8 + $0x1c0] sm:$0xff]
    %v3662 = vld [vmem:[#allocation8 + $0x1c8] sm:$0xff]
    %v3663 = vld [vmem:[#allocation8 + $0x1d0] sm:$0xff]
    %v3664 = vld [vmem:[#allocation8 + $0x1d8] sm:$0xff]
    %v3665 = vld [vmem:[#allocation8 + $0x1e0] sm:$0xff]
    %v3666 = vld [vmem:[#allocation8 + $0x1e8] sm:$0xff]
    %v3667 = vld [vmem:[#allocation8 + $0x1f0] sm:$0xff]
    %v3668 = vld [vmem:[#allocation8 + $0x1f8] sm:$0xff]
    %v3669 = vld [vmem:[#allocation8 + $0x200] sm:$0xff]
    %v3670 = vld [vmem:[#allocation8 + $0x208] sm:$0xff]
    %v3671 = vld [vmem:[#allocation8 + $0x210] sm:$0xff]
    %v3672 = vld [vmem:[#allocation8 + $0x218] sm:$0xff]
    %v3673 = vld [vmem:[#allocation8 + $0x220] sm:$0xff]
    %v3674 = vld [vmem:[#allocation8 + $0x228] sm:$0xff]
    %v3675 = vld [vmem:[#allocation8 + $0x230] sm:$0xff]
    %v3676 = vld [vmem:[#allocation8 + $0x238] sm:$0xff]
    %v3677 = vld [vmem:[#allocation8 + $0x240] sm:$0xff]
    %v3678 = vld [vmem:[#allocation8 + $0x248] sm:$0xff]
    %v3679 = vld [vmem:[#allocation8 + $0x250] sm:$0xff]
    %v3680 = vld [vmem:[#allocation8 + $0x258] sm:$0xff]
    %v3681 = vld [vmem:[#allocation8 + $0x260] sm:$0xff]
    %v3682 = vld [vmem:[#allocation8 + $0x268] sm:$0xff]
    %v3683 = vld [vmem:[#allocation8 + $0x270] sm:$0xff]
    %v3684 = vld [vmem:[#allocation8 + $0x278] sm:$0xff]
    %v3685 = vld [vmem:[#allocation8 + $0x280] sm:$0xff]
    %v3686 = vld [vmem:[#allocation8 + $0x288] sm:$0xff]
    %v3687 = vld [vmem:[#allocation8 + $0x290] sm:$0xff]
    %v3688 = vld [vmem:[#allocation8 + $0x298] sm:$0xff]
    %v3689 = vld [vmem:[#allocation8 + $0x2a0] sm:$0xff]
    %v3690 = vld [vmem:[#allocation8 + $0x2a8] sm:$0xff]
    %v3691 = vld [vmem:[#allocation8 + $0x2b0] sm:$0xff]
    %v3692 = vld [vmem:[#allocation8 + $0x2b8] sm:$0xff]
    %v3693 = vld [vmem:[#allocation8 + $0x2c0] sm:$0xff]
    %v3694 = vld [vmem:[#allocation8 + $0x2c8] sm:$0xff]
    %v3695 = vld [vmem:[#allocation8 + $0x2d0] sm:$0xff]
    %v3696 = vld [vmem:[#allocation8 + $0x2d8] sm:$0xff]
    %v3697 = vld [vmem:[#allocation8 + $0x2e0] sm:$0xff]
    %v3698 = vld [vmem:[#allocation8 + $0x2e8] sm:$0xff]
    %v3699 = vld [vmem:[#allocation8 + $0x2f0] sm:$0xff]
    %v3700 = vld [vmem:[#allocation8 + $0x2f8] sm:$0xff]
    %v3701 = vld [vmem:[#allocation8 + $0x300] sm:$0xff]
    %v3702 = vld [vmem:[#allocation8 + $0x308] sm:$0xff]
    %v3703 = vld [vmem:[#allocation8 + $0x310] sm:$0xff]
    %v3704 = vld [vmem:[#allocation8 + $0x318] sm:$0xff]
    %v3705 = vld [vmem:[#allocation8 + $0x320] sm:$0xff]
    %v3706 = vld [vmem:[#allocation8 + $0x328] sm:$0xff]
    %v3707 = vld [vmem:[#allocation8 + $0x330] sm:$0xff]
    %v3708 = vld [vmem:[#allocation8 + $0x338] sm:$0xff]
    %v3709 = vld [vmem:[#allocation8 + $0x340] sm:$0xff]
    %v3710 = vld [vmem:[#allocation8 + $0x348] sm:$0xff]
    %v3711 = vld [vmem:[#allocation8 + $0x350] sm:$0xff]
    %v3712 = vld [vmem:[#allocation8 + $0x358] sm:$0xff]
    %v3713 = vld [vmem:[#allocation8 + $0x360] sm:$0xff]
    %v3714 = vld [vmem:[#allocation8 + $0x368] sm:$0xff]
    %v3715 = vld [vmem:[#allocation8 + $0x370] sm:$0xff]
    %v3716 = vld [vmem:[#allocation8 + $0x378] sm:$0xff]
    %v3717 = vld [vmem:[#allocation8 + $0x380] sm:$0xff]
    %v3718 = vld [vmem:[#allocation8 + $0x388] sm:$0xff]
    %v3719 = vld [vmem:[#allocation8 + $0x390] sm:$0xff]
    %v3720 = vld [vmem:[#allocation8 + $0x398] sm:$0xff]
    %v3721 = vld [vmem:[#allocation8 + $0x3a0] sm:$0xff]
    %v3722 = vld [vmem:[#allocation8 + $0x3a8] sm:$0xff]
    %v3723 = vld [vmem:[#allocation8 + $0x3b0] sm:$0xff]
    %v3724 = vld [vmem:[#allocation8 + $0x3b8] sm:$0xff]
    %v3725 = vld [vmem:[#allocation8 + $0x3c0] sm:$0xff]
    %v3726 = vld [vmem:[#allocation8 + $0x3c8] sm:$0xff]
    %v3727 = vld [vmem:[#allocation8 + $0x3d0] sm:$0xff]
    %v3728 = vld [vmem:[#allocation8 + $0x3d8] sm:$0xff]
    %v3729 = vld [vmem:[#allocation8 + $0x3e0] sm:$0xff]
    %v3730 = vld [vmem:[#allocation8 + $0x3e8] sm:$0xff]
    %v3731 = vld [vmem:[#allocation8 + $0x3f0] sm:$0xff]
    %v3732 = vld [vmem:[#allocation8 + $0x3f8] sm:$0xff]
    %v3733 = vld [vmem:[#allocation8 + $0x400] sm:$0xff]
    %v3734 = vld [vmem:[#allocation8 + $0x408] sm:$0xff]
    %v3735 = vld [vmem:[#allocation8 + $0x410] sm:$0xff]
    %v3736 = vld [vmem:[#allocation8 + $0x418] sm:$0xff]
    %v3737 = vld [vmem:[#allocation8 + $0x420] sm:$0xff]
    %v3738 = vld [vmem:[#allocation8 + $0x428] sm:$0xff]
    %v3739 = vld [vmem:[#allocation8 + $0x430] sm:$0xff]
    %v3740 = vld [vmem:[#allocation8 + $0x438] sm:$0xff]
    %v3741 = vld [vmem:[#allocation8 + $0x440] sm:$0xff]
    %v3742 = vld [vmem:[#allocation8 + $0x448] sm:$0xff]
    %v3743 = vld [vmem:[#allocation8 + $0x450] sm:$0xff]
    %v3744 = vld [vmem:[#allocation8 + $0x458] sm:$0xff]
    %v3745 = vld [vmem:[#allocation8 + $0x460] sm:$0xff]
    %v3746 = vld [vmem:[#allocation8 + $0x468] sm:$0xff]
    %v3747 = vld [vmem:[#allocation8 + $0x470] sm:$0xff]
    %v3748 = vld [vmem:[#allocation8 + $0x478] sm:$0xff]
    %v3749 = vld [vmem:[#allocation8 + $0x480] sm:$0xff]
    %v3750 = vld [vmem:[#allocation8 + $0x488] sm:$0xff]
    %v3751 = vld [vmem:[#allocation8 + $0x490] sm:$0xff]
    %v3752 = vld [vmem:[#allocation8 + $0x498] sm:$0xff]
    %v3753 = vld [vmem:[#allocation8 + $0x4a0] sm:$0xff]
    %v3754 = vld [vmem:[#allocation8 + $0x4a8] sm:$0xff]
    %v3755 = vld [vmem:[#allocation8 + $0x4b0] sm:$0xff]
    %v3756 = vld [vmem:[#allocation8 + $0x4b8] sm:$0xff]
    %v3757 = vld [vmem:[#allocation8 + $0x4c0] sm:$0xff]
    %v3758 = vld [vmem:[#allocation8 + $0x4c8] sm:$0xff]
    %v3759 = vld [vmem:[#allocation8 + $0x4d0] sm:$0xff]
    %v3760 = vld [vmem:[#allocation8 + $0x4d8] sm:$0xff]
    %v3761 = vld [vmem:[#allocation8 + $0x4e0] sm:$0xff]
    %v3762 = vld [vmem:[#allocation8 + $0x4e8] sm:$0xff]
    %v3763 = vld [vmem:[#allocation8 + $0x4f0] sm:$0xff]
    %v3764 = vld [vmem:[#allocation8 + $0x4f8] sm:$0xff]
    %v3765 = vld [vmem:[#allocation8 + $0x500] sm:$0xff]
    %v3766 = vld [vmem:[#allocation8 + $0x508] sm:$0xff]
    %v3767 = vld [vmem:[#allocation8 + $0x510] sm:$0xff]
    %v3768 = vld [vmem:[#allocation8 + $0x518] sm:$0xff]
    %v3769 = vld [vmem:[#allocation8 + $0x520] sm:$0xff]
    %v3770 = vld [vmem:[#allocation8 + $0x528] sm:$0xff]
    %v3771 = vld [vmem:[#allocation8 + $0x530] sm:$0xff]
    %v3772 = vld [vmem:[#allocation8 + $0x538] sm:$0xff]
    %v3773 = vld [vmem:[#allocation8 + $0x540] sm:$0xff]
    %v3774 = vld [vmem:[#allocation8 + $0x548] sm:$0xff]
    %v3775 = vld [vmem:[#allocation8 + $0x550] sm:$0xff]
    %v3776 = vld [vmem:[#allocation8 + $0x558] sm:$0xff]
    %v3777 = vld [vmem:[#allocation8 + $0x560] sm:$0xff]
    %v3778 = vld [vmem:[#allocation8 + $0x568] sm:$0xff]
    %v3779 = vld [vmem:[#allocation8 + $0x570] sm:$0xff]
    %v3780 = vld [vmem:[#allocation8 + $0x578] sm:$0xff]
    %v3781 = vld [vmem:[#allocation8 + $0x580] sm:$0xff]
    %v3782 = vld [vmem:[#allocation8 + $0x588] sm:$0xff]
    %v3783 = vld [vmem:[#allocation8 + $0x590] sm:$0xff]
    %v3784 = vld [vmem:[#allocation8 + $0x598] sm:$0xff]
    %v3785 = vld [vmem:[#allocation8 + $0x5a0] sm:$0xff]
    %v3786 = vld [vmem:[#allocation8 + $0x5a8] sm:$0xff]
    %v3787 = vld [vmem:[#allocation8 + $0x5b0] sm:$0xff]
    %v3788 = vld [vmem:[#allocation8 + $0x5b8] sm:$0xff]
    %v3789 = vld [vmem:[#allocation8 + $0x5c0] sm:$0xff]
    %v3790 = vld [vmem:[#allocation8 + $0x5c8] sm:$0xff]
    %v3791 = vld [vmem:[#allocation8 + $0x5d0] sm:$0xff]
    %v3792 = vld [vmem:[#allocation8 + $0x5d8] sm:$0xff]
    %v3793 = vld [vmem:[#allocation8 + $0x5e0] sm:$0xff]
    %v3794 = vld [vmem:[#allocation8 + $0x5e8] sm:$0xff]
    %v3795 = vld [vmem:[#allocation8 + $0x5f0] sm:$0xff]
    %v3796 = vld [vmem:[#allocation8 + $0x5f8] sm:$0xff]
    %v3797 = vld [vmem:[#allocation8 + $0x600] sm:$0xff]
    %v3798 = vld [vmem:[#allocation8 + $0x608] sm:$0xff]
    %v3799 = vld [vmem:[#allocation8 + $0x610] sm:$0xff]
    %v3800 = vld [vmem:[#allocation8 + $0x618] sm:$0xff]
    %v3801 = vld [vmem:[#allocation8 + $0x620] sm:$0xff]
    %v3802 = vld [vmem:[#allocation8 + $0x628] sm:$0xff]
    %v3803 = vld [vmem:[#allocation8 + $0x630] sm:$0xff]
    %v3804 = vld [vmem:[#allocation8 + $0x638] sm:$0xff]
    %v3805 = vld [vmem:[#allocation8 + $0x640] sm:$0xff]
    %v3806 = vld [vmem:[#allocation8 + $0x648] sm:$0xff]
    %v3807 = vld [vmem:[#allocation8 + $0x650] sm:$0xff]
    %v3808 = vld [vmem:[#allocation8 + $0x658] sm:$0xff]
    %v3809 = vld [vmem:[#allocation8 + $0x660] sm:$0xff]
    %v3810 = vld [vmem:[#allocation8 + $0x668] sm:$0xff]
    %v3811 = vld [vmem:[#allocation8 + $0x670] sm:$0xff]
    %v3812 = vld [vmem:[#allocation8 + $0x678] sm:$0xff]
    %v3813 = vld [vmem:[#allocation8 + $0x680] sm:$0xff]
    %v3814 = vld [vmem:[#allocation8 + $0x688] sm:$0xff]
    %v3815 = vld [vmem:[#allocation8 + $0x690] sm:$0xff]
    %v3816 = vld [vmem:[#allocation8 + $0x698] sm:$0xff]
    %v3817 = vld [vmem:[#allocation8 + $0x6a0] sm:$0xff]
    %v3818 = vld [vmem:[#allocation8 + $0x6a8] sm:$0xff]
    %v3819 = vld [vmem:[#allocation8 + $0x6b0] sm:$0xff]
    %v3820 = vld [vmem:[#allocation8 + $0x6b8] sm:$0xff]
    %v3821 = vld [vmem:[#allocation8 + $0x6c0] sm:$0xff]
    %v3822 = vld [vmem:[#allocation8 + $0x6c8] sm:$0xff]
    %v3823 = vld [vmem:[#allocation8 + $0x6d0] sm:$0xff]
    %v3824 = vld [vmem:[#allocation8 + $0x6d8] sm:$0xff]
    %v3825 = vld [vmem:[#allocation8 + $0x6e0] sm:$0xff]
    %v3826 = vld [vmem:[#allocation8 + $0x6e8] sm:$0xff]
    %v3827 = vld [vmem:[#allocation8 + $0x6f0] sm:$0xff]
    %v3828 = vld [vmem:[#allocation8 + $0x6f8] sm:$0xff]
    %v3829 = vld [vmem:[#allocation8 + $0x700] sm:$0xff]
    %v3830 = vld [vmem:[#allocation8 + $0x708] sm:$0xff]
    %v3831 = vld [vmem:[#allocation8 + $0x710] sm:$0xff]
    %v3832 = vld [vmem:[#allocation8 + $0x718] sm:$0xff]
    %v3833 = vld [vmem:[#allocation8 + $0x720] sm:$0xff]
    %v3834 = vld [vmem:[#allocation8 + $0x728] sm:$0xff]
    %v3835 = vld [vmem:[#allocation8 + $0x730] sm:$0xff]
    %v3836 = vld [vmem:[#allocation8 + $0x738] sm:$0xff]
    %v3837 = vld [vmem:[#allocation8 + $0x740] sm:$0xff]
    %v3838 = vld [vmem:[#allocation8 + $0x748] sm:$0xff]
    %v3839 = vld [vmem:[#allocation8 + $0x750] sm:$0xff]
    %v3840 = vld [vmem:[#allocation8 + $0x758] sm:$0xff]
    %v3841 = vld [vmem:[#allocation8 + $0x760] sm:$0xff]
    %v3842 = vld [vmem:[#allocation8 + $0x768] sm:$0xff]
    %v3843 = vld [vmem:[#allocation8 + $0x770] sm:$0xff]
    %v3844 = vld [vmem:[#allocation8 + $0x778] sm:$0xff]
    %v3845 = vld [vmem:[#allocation8 + $0x780] sm:$0xff]
    %v3846 = vld [vmem:[#allocation8 + $0x788] sm:$0xff]
    %v3847 = vld [vmem:[#allocation8 + $0x790] sm:$0xff]
    %v3848 = vld [vmem:[#allocation8 + $0x798] sm:$0xff]
    %v3849 = vld [vmem:[#allocation8 + $0x7a0] sm:$0xff]
    %v3850 = vld [vmem:[#allocation8 + $0x7a8] sm:$0xff]
    %v3851 = vld [vmem:[#allocation8 + $0x7b0] sm:$0xff]
    %v3852 = vld [vmem:[#allocation8 + $0x7b8] sm:$0xff]
    %v3853 = vld [vmem:[#allocation8 + $0x7c0] sm:$0xff]
    %v3854 = vld [vmem:[#allocation8 + $0x7c8] sm:$0xff]
    %v3855 = vld [vmem:[#allocation8 + $0x7d0] sm:$0xff]
    %v3856 = vld [vmem:[#allocation8 + $0x7d8] sm:$0xff]
    %v3857 = vld [vmem:[#allocation8 + $0x7e0] sm:$0xff]
    %v3858 = vld [vmem:[#allocation8 + $0x7e8] sm:$0xff]
    %v3859 = vld [vmem:[#allocation8 + $0x7f0] sm:$0xff]
    %v3860 = vld [vmem:[#allocation8 + $0x7f8] sm:$0xff]
    %v3861 = vld [vmem:[#allocation8 + $0x800] sm:$0xff]
    %v3862 = vld [vmem:[#allocation8 + $0x808] sm:$0xff]
    %v3863 = vld [vmem:[#allocation8 + $0x810] sm:$0xff]
    %v3864 = vld [vmem:[#allocation8 + $0x818] sm:$0xff]
    %v3865 = vld [vmem:[#allocation8 + $0x820] sm:$0xff]
    %v3866 = vld [vmem:[#allocation8 + $0x828] sm:$0xff]
    %v3867 = vld [vmem:[#allocation8 + $0x830] sm:$0xff]
    %v3868 = vld [vmem:[#allocation8 + $0x838] sm:$0xff]
    %v3869 = vld [vmem:[#allocation8 + $0x840] sm:$0xff]
    %v3870 = vld [vmem:[#allocation8 + $0x848] sm:$0xff]
    %v3871 = vld [vmem:[#allocation8 + $0x850] sm:$0xff]
    %v3872 = vld [vmem:[#allocation8 + $0x858] sm:$0xff]
    %v3873 = vld [vmem:[#allocation8 + $0x860] sm:$0xff]
    %v3874 = vld [vmem:[#allocation8 + $0x868] sm:$0xff]
    %v3875 = vld [vmem:[#allocation8 + $0x870] sm:$0xff]
    %v3876 = vld [vmem:[#allocation8 + $0x878] sm:$0xff]
    %v3877 = vld [vmem:[#allocation8 + $0x880] sm:$0xff]
    %v3878 = vld [vmem:[#allocation8 + $0x888] sm:$0xff]
    %v3879 = vld [vmem:[#allocation8 + $0x890] sm:$0xff]
    %v3880 = vld [vmem:[#allocation8 + $0x898] sm:$0xff]
    %v3881 = vld [vmem:[#allocation8 + $0x8a0] sm:$0xff]
    %v3882 = vld [vmem:[#allocation8 + $0x8a8] sm:$0xff]
    %v3883 = vld [vmem:[#allocation8 + $0x8b0] sm:$0xff]
    %v3884 = vld [vmem:[#allocation8 + $0x8b8] sm:$0xff]
    %v3885 = vld [vmem:[#allocation8 + $0x8c0] sm:$0xff]
    %v3886 = vld [vmem:[#allocation8 + $0x8c8] sm:$0xff]
    %v3887 = vld [vmem:[#allocation8 + $0x8d0] sm:$0xff]
    %v3888 = vld [vmem:[#allocation8 + $0x8d8] sm:$0xff]
    %v3889 = vld [vmem:[#allocation8 + $0x8e0] sm:$0xff]
    %v3890 = vld [vmem:[#allocation8 + $0x8e8] sm:$0xff]
    %v3891 = vld [vmem:[#allocation8 + $0x8f0] sm:$0xff]
    %v3892 = vld [vmem:[#allocation8 + $0x8f8] sm:$0xff]
    %v3893 = vld [vmem:[#allocation10] sm:$0xf]
    %v3895 = vperm.slane %v3893, 0
    %v3896 = vperm.slane %v3893, 1
    %v3897 = vperm.slane %v3893, 2
    %v3898 = vperm.slane %v3893, 3
    %v4191 = vunpack.c.l.b16 %v3605
    %v4192 = vunpack.c.h.b16 %v3605
    %v4193 = vunpack.c.l.b16 %v3606
    %v4194 = vunpack.c.h.b16 %v3606
    %v4195 = vunpack.c.l.b16 %v3607
    %v4196 = vunpack.c.h.b16 %v3607
    %v4197 = vunpack.c.l.b16 %v3608
    %v4198 = vunpack.c.h.b16 %v3608
    %v4199 = vunpack.c.l.b16 %v3609
    %v4200 = vunpack.c.h.b16 %v3609
    %v4201 = vunpack.c.l.b16 %v3610
    %v4202 = vunpack.c.h.b16 %v3610
    %v4203 = vunpack.c.l.b16 %v3611
    %v4204 = vunpack.c.h.b16 %v3611
    %v4205 = vunpack.c.l.b16 %v3612
    %v4206 = vunpack.c.h.b16 %v3612
    %v4207 = vunpack.c.l.b16 %v3613
    %v4208 = vunpack.c.h.b16 %v3613
    %v4209 = vunpack.c.l.b16 %v3614
    %v4210 = vunpack.c.h.b16 %v3614
    %v4211 = vunpack.c.l.b16 %v3615
    %v4212 = vunpack.c.h.b16 %v3615
    %v4213 = vunpack.c.l.b16 %v3616
    %v4214 = vunpack.c.h.b16 %v3616
    %v4215 = vunpack.c.l.b16 %v3617
    %v4216 = vunpack.c.h.b16 %v3617
    %v4217 = vunpack.c.l.b16 %v3618
    %v4218 = vunpack.c.h.b16 %v3618
    %v4219 = vunpack.c.l.b16 %v3619
    %v4220 = vunpack.c.h.b16 %v3619
    %v4221 = vunpack.c.l.b16 %v3620
    %v4222 = vunpack.c.h.b16 %v3620
    %v4223 = vunpack.c.l.b16 %v3621
    %v4224 = vunpack.c.h.b16 %v3621
    %v4225 = vunpack.c.l.b16 %v3622
    %v4226 = vunpack.c.h.b16 %v3622
    %v4227 = vunpack.c.l.b16 %v3623
    %v4228 = vunpack.c.h.b16 %v3623
    %v4229 = vunpack.c.l.b16 %v3624
    %v4230 = vunpack.c.h.b16 %v3624
    %v4231 = vunpack.c.l.b16 %v3625
    %v4232 = vunpack.c.h.b16 %v3625
    %v4233 = vunpack.c.l.b16 %v3626
    %v4234 = vunpack.c.h.b16 %v3626
    %v4235 = vunpack.c.l.b16 %v3627
    %v4236 = vunpack.c.h.b16 %v3627
    %v4237 = vunpack.c.l.b16 %v3628
    %v4238 = vunpack.c.h.b16 %v3628
    %v4239 = vunpack.c.l.b16 %v3629
    %v4240 = vunpack.c.h.b16 %v3629
    %v4241 = vunpack.c.l.b16 %v3630
    %v4242 = vunpack.c.h.b16 %v3630
    %v4243 = vunpack.c.l.b16 %v3631
    %v4244 = vunpack.c.h.b16 %v3631
    %v4245 = vunpack.c.l.b16 %v3632
    %v4246 = vunpack.c.h.b16 %v3632
    %v4247 = vunpack.c.l.b16 %v3633
    %v4248 = vunpack.c.h.b16 %v3633
    %v4249 = vunpack.c.l.b16 %v3634
    %v4250 = vunpack.c.h.b16 %v3634
    %v4251 = vunpack.c.l.b16 %v3635
    %v4252 = vunpack.c.h.b16 %v3635
    %v4253 = vunpack.c.l.b16 %v3636
    %v4254 = vunpack.c.h.b16 %v3636
    %v4255 = vunpack.c.l.b16 %v3637
    %v4256 = vunpack.c.h.b16 %v3637
    %v4257 = vunpack.c.l.b16 %v3638
    %v4258 = vunpack.c.h.b16 %v3638
    %v4259 = vunpack.c.l.b16 %v3639
    %v4260 = vunpack.c.h.b16 %v3639
    %v4261 = vunpack.c.l.b16 %v3640
    %v4262 = vunpack.c.h.b16 %v3640
    %v4263 = vunpack.c.l.b16 %v3641
    %v4264 = vunpack.c.h.b16 %v3641
    %v4265 = vunpack.c.l.b16 %v3642
    %v4266 = vunpack.c.h.b16 %v3642
    %v4267 = vunpack.c.l.b16 %v3643
    %v4268 = vunpack.c.h.b16 %v3643
    %v4269 = vunpack.c.l.b16 %v3644
    %v4270 = vunpack.c.h.b16 %v3644
    %v4271 = vunpack.c.l.b16 %v3645
    %v4272 = vunpack.c.h.b16 %v3645
    %v4273 = vunpack.c.l.b16 %v3646
    %v4274 = vunpack.c.h.b16 %v3646
    %v4275 = vunpack.c.l.b16 %v3647
    %v4276 = vunpack.c.h.b16 %v3647
    %v4277 = vunpack.c.l.b16 %v3648
    %v4278 = vunpack.c.h.b16 %v3648
    %v4279 = vunpack.c.l.b16 %v3649
    %v4280 = vunpack.c.h.b16 %v3649
    %v4281 = vunpack.c.l.b16 %v3650
    %v4282 = vunpack.c.h.b16 %v3650
    %v4283 = vunpack.c.l.b16 %v3651
    %v4284 = vunpack.c.h.b16 %v3651
    %v4285 = vunpack.c.l.b16 %v3652
    %v4286 = vunpack.c.h.b16 %v3652
    %v4287 = vunpack.c.l.b16 %v3653
    %v4288 = vunpack.c.h.b16 %v3653
    %v4289 = vunpack.c.l.b16 %v3654
    %v4290 = vunpack.c.h.b16 %v3654
    %v4291 = vunpack.c.l.b16 %v3655
    %v4292 = vunpack.c.h.b16 %v3655
    %v4293 = vunpack.c.l.b16 %v3656
    %v4294 = vunpack.c.h.b16 %v3656
    %v4295 = vunpack.c.l.b16 %v3657
    %v4296 = vunpack.c.h.b16 %v3657
    %v4297 = vunpack.c.l.b16 %v3658
    %v4298 = vunpack.c.h.b16 %v3658
    %v4299 = vunpack.c.l.b16 %v3659
    %v4300 = vunpack.c.h.b16 %v3659
    %v4301 = vunpack.c.l.b16 %v3660
    %v4302 = vunpack.c.h.b16 %v3660
    %v4303 = vunpack.c.l.b16 %v3661
    %v4304 = vunpack.c.h.b16 %v3661
    %v4305 = vunpack.c.l.b16 %v3662
    %v4306 = vunpack.c.h.b16 %v3662
    %v4307 = vunpack.c.l.b16 %v3663
    %v4308 = vunpack.c.h.b16 %v3663
    %v4309 = vunpack.c.l.b16 %v3664
    %v4310 = vunpack.c.h.b16 %v3664
    %v4311 = vunpack.c.l.b16 %v3665
    %v4312 = vunpack.c.h.b16 %v3665
    %v4313 = vunpack.c.l.b16 %v3666
    %v4314 = vunpack.c.h.b16 %v3666
    %v4315 = vunpack.c.l.b16 %v3667
    %v4316 = vunpack.c.h.b16 %v3667
    %v4317 = vunpack.c.l.b16 %v3668
    %v4318 = vunpack.c.h.b16 %v3668
    %v4319 = vunpack.c.l.b16 %v3669
    %v4320 = vunpack.c.h.b16 %v3669
    %v4321 = vunpack.c.l.b16 %v3670
    %v4322 = vunpack.c.h.b16 %v3670
    %v4323 = vunpack.c.l.b16 %v3671
    %v4324 = vunpack.c.h.b16 %v3671
    %v4325 = vunpack.c.l.b16 %v3672
    %v4326 = vunpack.c.h.b16 %v3672
    %v4327 = vunpack.c.l.b16 %v3673
    %v4328 = vunpack.c.h.b16 %v3673
    %v4329 = vunpack.c.l.b16 %v3674
    %v4330 = vunpack.c.h.b16 %v3674
    %v4331 = vunpack.c.l.b16 %v3675
    %v4332 = vunpack.c.h.b16 %v3675
    %v4333 = vunpack.c.l.b16 %v3676
    %v4334 = vunpack.c.h.b16 %v3676
    %v4335 = vunpack.c.l.b16 %v3677
    %v4336 = vunpack.c.h.b16 %v3677
    %v4337 = vunpack.c.l.b16 %v3678
    %v4338 = vunpack.c.h.b16 %v3678
    %v4339 = vunpack.c.l.b16 %v3679
    %v4340 = vunpack.c.h.b16 %v3679
    %v4341 = vunpack.c.l.b16 %v3680
    %v4342 = vunpack.c.h.b16 %v3680
    %v4343 = vunpack.c.l.b16 %v3681
    %v4344 = vunpack.c.h.b16 %v3681
    %v4345 = vunpack.c.l.b16 %v3682
    %v4346 = vunpack.c.h.b16 %v3682
    %v4347 = vunpack.c.l.b16 %v3683
    %v4348 = vunpack.c.h.b16 %v3683
    %v4349 = vunpack.c.l.b16 %v3684
    %v4350 = vunpack.c.h.b16 %v3684
    %v4351 = vunpack.c.l.b16 %v3685
    %v4352 = vunpack.c.h.b16 %v3685
    %v4353 = vunpack.c.l.b16 %v3686
    %v4354 = vunpack.c.h.b16 %v3686
    %v4355 = vunpack.c.l.b16 %v3687
    %v4356 = vunpack.c.h.b16 %v3687
    %v4357 = vunpack.c.l.b16 %v3688
    %v4358 = vunpack.c.h.b16 %v3688
    %v4359 = vunpack.c.l.b16 %v3689
    %v4360 = vunpack.c.h.b16 %v3689
    %v4361 = vunpack.c.l.b16 %v3690
    %v4362 = vunpack.c.h.b16 %v3690
    %v4363 = vunpack.c.l.b16 %v3691
    %v4364 = vunpack.c.h.b16 %v3691
    %v4365 = vunpack.c.l.b16 %v3692
    %v4366 = vunpack.c.h.b16 %v3692
    %v4367 = vunpack.c.l.b16 %v3693
    %v4368 = vunpack.c.h.b16 %v3693
    %v4369 = vunpack.c.l.b16 %v3694
    %v4370 = vunpack.c.h.b16 %v3694
    %v4371 = vunpack.c.l.b16 %v3695
    %v4372 = vunpack.c.h.b16 %v3695
    %v4373 = vunpack.c.l.b16 %v3696
    %v4374 = vunpack.c.h.b16 %v3696
    %v4375 = vunpack.c.l.b16 %v3697
    %v4376 = vunpack.c.h.b16 %v3697
    %v4377 = vunpack.c.l.b16 %v3698
    %v4378 = vunpack.c.h.b16 %v3698
    %v4379 = vunpack.c.l.b16 %v3699
    %v4380 = vunpack.c.h.b16 %v3699
    %v4381 = vunpack.c.l.b16 %v3700
    %v4382 = vunpack.c.h.b16 %v3700
    %v4383 = vunpack.c.l.b16 %v3701
    %v4384 = vunpack.c.h.b16 %v3701
    %v4385 = vunpack.c.l.b16 %v3702
    %v4386 = vunpack.c.h.b16 %v3702
    %v4387 = vunpack.c.l.b16 %v3703
    %v4388 = vunpack.c.h.b16 %v3703
    %v4389 = vunpack.c.l.b16 %v3704
    %v4390 = vunpack.c.h.b16 %v3704
    %v4391 = vunpack.c.l.b16 %v3705
    %v4392 = vunpack.c.h.b16 %v3705
    %v4393 = vunpack.c.l.b16 %v3706
    %v4394 = vunpack.c.h.b16 %v3706
    %v4395 = vunpack.c.l.b16 %v3707
    %v4396 = vunpack.c.h.b16 %v3707
    %v4397 = vunpack.c.l.b16 %v3708
    %v4398 = vunpack.c.h.b16 %v3708
    %v4399 = vunpack.c.l.b16 %v3709
    %v4400 = vunpack.c.h.b16 %v3709
    %v4401 = vunpack.c.l.b16 %v3710
    %v4402 = vunpack.c.h.b16 %v3710
    %v4403 = vunpack.c.l.b16 %v3711
    %v4404 = vunpack.c.h.b16 %v3711
    %v4405 = vunpack.c.l.b16 %v3712
    %v4406 = vunpack.c.h.b16 %v3712
    %v4407 = vunpack.c.l.b16 %v3713
    %v4408 = vunpack.c.h.b16 %v3713
    %v4409 = vunpack.c.l.b16 %v3714
    %v4410 = vunpack.c.h.b16 %v3714
    %v4411 = vunpack.c.l.b16 %v3715
    %v4412 = vunpack.c.h.b16 %v3715
    %v4413 = vunpack.c.l.b16 %v3716
    %v4414 = vunpack.c.h.b16 %v3716
    %v4415 = vunpack.c.l.b16 %v3717
    %v4416 = vunpack.c.h.b16 %v3717
    %v4417 = vunpack.c.l.b16 %v3718
    %v4418 = vunpack.c.h.b16 %v3718
    %v4419 = vunpack.c.l.b16 %v3719
    %v4420 = vunpack.c.h.b16 %v3719
    %v4421 = vunpack.c.l.b16 %v3720
    %v4422 = vunpack.c.h.b16 %v3720
    %v4423 = vunpack.c.l.b16 %v3721
    %v4424 = vunpack.c.h.b16 %v3721
    %v4425 = vunpack.c.l.b16 %v3722
    %v4426 = vunpack.c.h.b16 %v3722
    %v4427 = vunpack.c.l.b16 %v3723
    %v4428 = vunpack.c.h.b16 %v3723
    %v4429 = vunpack.c.l.b16 %v3724
    %v4430 = vunpack.c.h.b16 %v3724
    %v4431 = vunpack.c.l.b16 %v3725
    %v4432 = vunpack.c.h.b16 %v3725
    %v4433 = vunpack.c.l.b16 %v3726
    %v4434 = vunpack.c.h.b16 %v3726
    %v4435 = vunpack.c.l.b16 %v3727
    %v4436 = vunpack.c.h.b16 %v3727
    %v4437 = vunpack.c.l.b16 %v3728
    %v4438 = vunpack.c.h.b16 %v3728
    %v4439 = vunpack.c.l.b16 %v3729
    %v4440 = vunpack.c.h.b16 %v3729
    %v4441 = vunpack.c.l.b16 %v3730
    %v4442 = vunpack.c.h.b16 %v3730
    %v4443 = vunpack.c.l.b16 %v3731
    %v4444 = vunpack.c.h.b16 %v3731
    %v4445 = vunpack.c.l.b16 %v3732
    %v4446 = vunpack.c.h.b16 %v3732
    %v4447 = vunpack.c.l.b16 %v3733
    %v4448 = vunpack.c.h.b16 %v3733
    %v4449 = vunpack.c.l.b16 %v3734
    %v4450 = vunpack.c.h.b16 %v3734
    %v4451 = vunpack.c.l.b16 %v3735
    %v4452 = vunpack.c.h.b16 %v3735
    %v4453 = vunpack.c.l.b16 %v3736
    %v4454 = vunpack.c.h.b16 %v3736
    %v4455 = vunpack.c.l.b16 %v3737
    %v4456 = vunpack.c.h.b16 %v3737
    %v4457 = vunpack.c.l.b16 %v3738
    %v4458 = vunpack.c.h.b16 %v3738
    %v4459 = vunpack.c.l.b16 %v3739
    %v4460 = vunpack.c.h.b16 %v3739
    %v4461 = vunpack.c.l.b16 %v3740
    %v4462 = vunpack.c.h.b16 %v3740
    %v4463 = vunpack.c.l.b16 %v3741
    %v4464 = vunpack.c.h.b16 %v3741
    %v4465 = vunpack.c.l.b16 %v3742
    %v4466 = vunpack.c.h.b16 %v3742
    %v4467 = vunpack.c.l.b16 %v3743
    %v4468 = vunpack.c.h.b16 %v3743
    %v4469 = vunpack.c.l.b16 %v3744
    %v4470 = vunpack.c.h.b16 %v3744
    %v4471 = vunpack.c.l.b16 %v3745
    %v4472 = vunpack.c.h.b16 %v3745
    %v4473 = vunpack.c.l.b16 %v3746
    %v4474 = vunpack.c.h.b16 %v3746
    %v4475 = vunpack.c.l.b16 %v3747
    %v4476 = vunpack.c.h.b16 %v3747
    %v4477 = vunpack.c.l.b16 %v3748
    %v4478 = vunpack.c.h.b16 %v3748
    %v4479 = vunpack.c.l.b16 %v3749
    %v4480 = vunpack.c.h.b16 %v3749
    %v4481 = vunpack.c.l.b16 %v3750
    %v4482 = vunpack.c.h.b16 %v3750
    %v4483 = vunpack.c.l.b16 %v3751
    %v4484 = vunpack.c.h.b16 %v3751
    %v4485 = vunpack.c.l.b16 %v3752
    %v4486 = vunpack.c.h.b16 %v3752
    %v4487 = vunpack.c.l.b16 %v3753
    %v4488 = vunpack.c.h.b16 %v3753
    %v4489 = vunpack.c.l.b16 %v3754
    %v4490 = vunpack.c.h.b16 %v3754
    %v4491 = vunpack.c.l.b16 %v3755
    %v4492 = vunpack.c.h.b16 %v3755
    %v4493 = vunpack.c.l.b16 %v3756
    %v4494 = vunpack.c.h.b16 %v3756
    %v4495 = vunpack.c.l.b16 %v3757
    %v4496 = vunpack.c.h.b16 %v3757
    %v4497 = vunpack.c.l.b16 %v3758
    %v4498 = vunpack.c.h.b16 %v3758
    %v4499 = vunpack.c.l.b16 %v3759
    %v4500 = vunpack.c.h.b16 %v3759
    %v4501 = vunpack.c.l.b16 %v3760
    %v4502 = vunpack.c.h.b16 %v3760
    %v4503 = vunpack.c.l.b16 %v3761
    %v4504 = vunpack.c.h.b16 %v3761
    %v4505 = vunpack.c.l.b16 %v3762
    %v4506 = vunpack.c.h.b16 %v3762
    %v4507 = vunpack.c.l.b16 %v3763
    %v4508 = vunpack.c.h.b16 %v3763
    %v4509 = vunpack.c.l.b16 %v3764
    %v4510 = vunpack.c.h.b16 %v3764
    %v4511 = vunpack.c.l.b16 %v3765
    %v4512 = vunpack.c.h.b16 %v3765
    %v4513 = vunpack.c.l.b16 %v3766
    %v4514 = vunpack.c.h.b16 %v3766
    %v4515 = vunpack.c.l.b16 %v3767
    %v4516 = vunpack.c.h.b16 %v3767
    %v4517 = vunpack.c.l.b16 %v3768
    %v4518 = vunpack.c.h.b16 %v3768
    %v4519 = vunpack.c.l.b16 %v3769
    %v4520 = vunpack.c.h.b16 %v3769
    %v4521 = vunpack.c.l.b16 %v3770
    %v4522 = vunpack.c.h.b16 %v3770
    %v4523 = vunpack.c.l.b16 %v3771
    %v4524 = vunpack.c.h.b16 %v3771
    %v4525 = vunpack.c.l.b16 %v3772
    %v4526 = vunpack.c.h.b16 %v3772
    %v4527 = vunpack.c.l.b16 %v3773
    %v4528 = vunpack.c.h.b16 %v3773
    %v4529 = vunpack.c.l.b16 %v3774
    %v4530 = vunpack.c.h.b16 %v3774
    %v4531 = vunpack.c.l.b16 %v3775
    %v4532 = vunpack.c.h.b16 %v3775
    %v4533 = vunpack.c.l.b16 %v3776
    %v4534 = vunpack.c.h.b16 %v3776
    %v4535 = vunpack.c.l.b16 %v3777
    %v4536 = vunpack.c.h.b16 %v3777
    %v4537 = vunpack.c.l.b16 %v3778
    %v4538 = vunpack.c.h.b16 %v3778
    %v4539 = vunpack.c.l.b16 %v3779
    %v4540 = vunpack.c.h.b16 %v3779
    %v4541 = vunpack.c.l.b16 %v3780
    %v4542 = vunpack.c.h.b16 %v3780
    %v4543 = vunpack.c.l.b16 %v3781
    %v4544 = vunpack.c.h.b16 %v3781
    %v4545 = vunpack.c.l.b16 %v3782
    %v4546 = vunpack.c.h.b16 %v3782
    %v4547 = vunpack.c.l.b16 %v3783
    %v4548 = vunpack.c.h.b16 %v3783
    %v4549 = vunpack.c.l.b16 %v3784
    %v4550 = vunpack.c.h.b16 %v3784
    %v4551 = vunpack.c.l.b16 %v3785
    %v4552 = vunpack.c.h.b16 %v3785
    %v4553 = vunpack.c.l.b16 %v3786
    %v4554 = vunpack.c.h.b16 %v3786
    %v4555 = vunpack.c.l.b16 %v3787
    %v4556 = vunpack.c.h.b16 %v3787
    %v4557 = vunpack.c.l.b16 %v3788
    %v4558 = vunpack.c.h.b16 %v3788
    %v4559 = vunpack.c.l.b16 %v3789
    %v4560 = vunpack.c.h.b16 %v3789
    %v4561 = vunpack.c.l.b16 %v3790
    %v4562 = vunpack.c.h.b16 %v3790
    %v4563 = vunpack.c.l.b16 %v3791
    %v4564 = vunpack.c.h.b16 %v3791
    %v4565 = vunpack.c.l.b16 %v3792
    %v4566 = vunpack.c.h.b16 %v3792
    %v4567 = vunpack.c.l.b16 %v3793
    %v4568 = vunpack.c.h.b16 %v3793
    %v4569 = vunpack.c.l.b16 %v3794
    %v4570 = vunpack.c.h.b16 %v3794
    %v4571 = vunpack.c.l.b16 %v3795
    %v4572 = vunpack.c.h.b16 %v3795
    %v4573 = vunpack.c.l.b16 %v3796
    %v4574 = vunpack.c.h.b16 %v3796
    %v4575 = vunpack.c.l.b16 %v3797
    %v4576 = vunpack.c.h.b16 %v3797
    %v4577 = vunpack.c.l.b16 %v3798
    %v4578 = vunpack.c.h.b16 %v3798
    %v4579 = vunpack.c.l.b16 %v3799
    %v4580 = vunpack.c.h.b16 %v3799
    %v4581 = vunpack.c.l.b16 %v3800
    %v4582 = vunpack.c.h.b16 %v3800
    %v4583 = vunpack.c.l.b16 %v3801
    %v4584 = vunpack.c.h.b16 %v3801
    %v4585 = vunpack.c.l.b16 %v3802
    %v4586 = vunpack.c.h.b16 %v3802
    %v4587 = vunpack.c.l.b16 %v3803
    %v4588 = vunpack.c.h.b16 %v3803
    %v4589 = vunpack.c.l.b16 %v3804
    %v4590 = vunpack.c.h.b16 %v3804
    %v4591 = vunpack.c.l.b16 %v3805
    %v4592 = vunpack.c.h.b16 %v3805
    %v4593 = vunpack.c.l.b16 %v3806
    %v4594 = vunpack.c.h.b16 %v3806
    %v4595 = vunpack.c.l.b16 %v3807
    %v4596 = vunpack.c.h.b16 %v3807
    %v4597 = vunpack.c.l.b16 %v3808
    %v4598 = vunpack.c.h.b16 %v3808
    %v4599 = vunpack.c.l.b16 %v3809
    %v4600 = vunpack.c.h.b16 %v3809
    %v4601 = vunpack.c.l.b16 %v3810
    %v4602 = vunpack.c.h.b16 %v3810
    %v4603 = vunpack.c.l.b16 %v3811
    %v4604 = vunpack.c.h.b16 %v3811
    %v4605 = vunpack.c.l.b16 %v3812
    %v4606 = vunpack.c.h.b16 %v3812
    %v4607 = vunpack.c.l.b16 %v3813
    %v4608 = vunpack.c.h.b16 %v3813
    %v4609 = vunpack.c.l.b16 %v3814
    %v4610 = vunpack.c.h.b16 %v3814
    %v4611 = vunpack.c.l.b16 %v3815
    %v4612 = vunpack.c.h.b16 %v3815
    %v4613 = vunpack.c.l.b16 %v3816
    %v4614 = vunpack.c.h.b16 %v3816
    %v4615 = vunpack.c.l.b16 %v3817
    %v4616 = vunpack.c.h.b16 %v3817
    %v4617 = vunpack.c.l.b16 %v3818
    %v4618 = vunpack.c.h.b16 %v3818
    %v4619 = vunpack.c.l.b16 %v3819
    %v4620 = vunpack.c.h.b16 %v3819
    %v4621 = vunpack.c.l.b16 %v3820
    %v4622 = vunpack.c.h.b16 %v3820
    %v4623 = vunpack.c.l.b16 %v3821
    %v4624 = vunpack.c.h.b16 %v3821
    %v4625 = vunpack.c.l.b16 %v3822
    %v4626 = vunpack.c.h.b16 %v3822
    %v4627 = vunpack.c.l.b16 %v3823
    %v4628 = vunpack.c.h.b16 %v3823
    %v4629 = vunpack.c.l.b16 %v3824
    %v4630 = vunpack.c.h.b16 %v3824
    %v4631 = vunpack.c.l.b16 %v3825
    %v4632 = vunpack.c.h.b16 %v3825
    %v4633 = vunpack.c.l.b16 %v3826
    %v4634 = vunpack.c.h.b16 %v3826
    %v4635 = vunpack.c.l.b16 %v3827
    %v4636 = vunpack.c.h.b16 %v3827
    %v4637 = vunpack.c.l.b16 %v3828
    %v4638 = vunpack.c.h.b16 %v3828
    %v4639 = vunpack.c.l.b16 %v3829
    %v4640 = vunpack.c.h.b16 %v3829
    %v4641 = vunpack.c.l.b16 %v3830
    %v4642 = vunpack.c.h.b16 %v3830
    %v4643 = vunpack.c.l.b16 %v3831
    %v4644 = vunpack.c.h.b16 %v3831
    %v4645 = vunpack.c.l.b16 %v3832
    %v4646 = vunpack.c.h.b16 %v3832
    %v4647 = vunpack.c.l.b16 %v3833
    %v4648 = vunpack.c.h.b16 %v3833
    %v4649 = vunpack.c.l.b16 %v3834
    %v4650 = vunpack.c.h.b16 %v3834
    %v4651 = vunpack.c.l.b16 %v3835
    %v4652 = vunpack.c.h.b16 %v3835
    %v4653 = vunpack.c.l.b16 %v3836
    %v4654 = vunpack.c.h.b16 %v3836
    %v4655 = vunpack.c.l.b16 %v3837
    %v4656 = vunpack.c.h.b16 %v3837
    %v4657 = vunpack.c.l.b16 %v3838
    %v4658 = vunpack.c.h.b16 %v3838
    %v4659 = vunpack.c.l.b16 %v3839
    %v4660 = vunpack.c.h.b16 %v3839
    %v4661 = vunpack.c.l.b16 %v3840
    %v4662 = vunpack.c.h.b16 %v3840
    %v4663 = vunpack.c.l.b16 %v3841
    %v4664 = vunpack.c.h.b16 %v3841
    %v4665 = vunpack.c.l.b16 %v3842
    %v4666 = vunpack.c.h.b16 %v3842
    %v4667 = vunpack.c.l.b16 %v3843
    %v4668 = vunpack.c.h.b16 %v3843
    %v4669 = vunpack.c.l.b16 %v3844
    %v4670 = vunpack.c.h.b16 %v3844
    %v4671 = vunpack.c.l.b16 %v3845
    %v4672 = vunpack.c.h.b16 %v3845
    %v4673 = vunpack.c.l.b16 %v3846
    %v4674 = vunpack.c.h.b16 %v3846
    %v4675 = vunpack.c.l.b16 %v3847
    %v4676 = vunpack.c.h.b16 %v3847
    %v4677 = vunpack.c.l.b16 %v3848
    %v4678 = vunpack.c.h.b16 %v3848
    %v4679 = vunpack.c.l.b16 %v3849
    %v4680 = vunpack.c.h.b16 %v3849
    %v4681 = vunpack.c.l.b16 %v3850
    %v4682 = vunpack.c.h.b16 %v3850
    %v4683 = vunpack.c.l.b16 %v3851
    %v4684 = vunpack.c.h.b16 %v3851
    %v4685 = vunpack.c.l.b16 %v3852
    %v4686 = vunpack.c.h.b16 %v3852
    %v4687 = vunpack.c.l.b16 %v3853
    %v4688 = vunpack.c.h.b16 %v3853
    %v4689 = vunpack.c.l.b16 %v3854
    %v4690 = vunpack.c.h.b16 %v3854
    %v4691 = vunpack.c.l.b16 %v3855
    %v4692 = vunpack.c.h.b16 %v3855
    %v4693 = vunpack.c.l.b16 %v3856
    %v4694 = vunpack.c.h.b16 %v3856
    %v4695 = vunpack.c.l.b16 %v3857
    %v4696 = vunpack.c.h.b16 %v3857
    %v4697 = vunpack.c.l.b16 %v3858
    %v4698 = vunpack.c.h.b16 %v3858
    %v4699 = vunpack.c.l.b16 %v3859
    %v4700 = vunpack.c.h.b16 %v3859
    %v4701 = vunpack.c.l.b16 %v3860
    %v4702 = vunpack.c.h.b16 %v3860
    %v4703 = vunpack.c.l.b16 %v3861
    %v4704 = vunpack.c.h.b16 %v3861
    %v4705 = vunpack.c.l.b16 %v3862
    %v4706 = vunpack.c.h.b16 %v3862
    %v4707 = vunpack.c.l.b16 %v3863
    %v4708 = vunpack.c.h.b16 %v3863
    %v4709 = vunpack.c.l.b16 %v3864
    %v4710 = vunpack.c.h.b16 %v3864
    %v4711 = vunpack.c.l.b16 %v3865
    %v4712 = vunpack.c.h.b16 %v3865
    %v4713 = vunpack.c.l.b16 %v3866
    %v4714 = vunpack.c.h.b16 %v3866
    %v4715 = vunpack.c.l.b16 %v3867
    %v4716 = vunpack.c.h.b16 %v3867
    %v4717 = vunpack.c.l.b16 %v3868
    %v4718 = vunpack.c.h.b16 %v3868
    %v4719 = vunpack.c.l.b16 %v3869
    %v4720 = vunpack.c.h.b16 %v3869
    %v4721 = vunpack.c.l.b16 %v3870
    %v4722 = vunpack.c.h.b16 %v3870
    %v4723 = vunpack.c.l.b16 %v3871
    %v4724 = vunpack.c.h.b16 %v3871
    %v4725 = vunpack.c.l.b16 %v3872
    %v4726 = vunpack.c.h.b16 %v3872
    %v4727 = vunpack.c.l.b16 %v3873
    %v4728 = vunpack.c.h.b16 %v3873
    %v4729 = vunpack.c.l.b16 %v3874
    %v4730 = vunpack.c.h.b16 %v3874
    %v4731 = vunpack.c.l.b16 %v3875
    %v4732 = vunpack.c.h.b16 %v3875
    %v4733 = vunpack.c.l.b16 %v3876
    %v4734 = vunpack.c.h.b16 %v3876
    %v4735 = vunpack.c.l.b16 %v3877
    %v4736 = vunpack.c.h.b16 %v3877
    %v4737 = vunpack.c.l.b16 %v3878
    %v4738 = vunpack.c.h.b16 %v3878
    %v4739 = vunpack.c.l.b16 %v3879
    %v4740 = vunpack.c.h.b16 %v3879
    %v4741 = vunpack.c.l.b16 %v3880
    %v4742 = vunpack.c.h.b16 %v3880
    %v4743 = vunpack.c.l.b16 %v3881
    %v4744 = vunpack.c.h.b16 %v3881
    %v4745 = vunpack.c.l.b16 %v3882
    %v4746 = vunpack.c.h.b16 %v3882
    %v4747 = vunpack.c.l.b16 %v3883
    %v4748 = vunpack.c.h.b16 %v3883
    %v4749 = vunpack.c.l.b16 %v3884
    %v4750 = vunpack.c.h.b16 %v3884
    %v4751 = vunpack.c.l.b16 %v3885
    %v4752 = vunpack.c.h.b16 %v3885
    %v4753 = vunpack.c.l.b16 %v3886
    %v4754 = vunpack.c.h.b16 %v3886
    %v4755 = vunpack.c.l.b16 %v3887
    %v4756 = vunpack.c.h.b16 %v3887
    %v4757 = vunpack.c.l.b16 %v3888
    %v4758 = vunpack.c.h.b16 %v3888
    %v4759 = vunpack.c.l.b16 %v3889
    %v4760 = vunpack.c.h.b16 %v3889
    %v4761 = vunpack.c.l.b16 %v3890
    %v4762 = vunpack.c.h.b16 %v3890
    %v4763 = vunpack.c.l.b16 %v3891
    %v4764 = vunpack.c.h.b16 %v3891
    %v4765 = vunpack.c.l.b16 %v3892
    %v4766 = vunpack.c.h.b16 %v3892
    %v4767 = vpack.c.b16 %v4195, %v4191
    %v4768 = vpack.c.b16 %v4196, %v4192
    %v4769 = vpack.c.b16 %v4197, %v4193
    %v4770 = vpack.c.b16 %v4198, %v4194
    %v4771 = vpack.c.b16 %v4203, %v4199
    %v4772 = vpack.c.b16 %v4204, %v4200
    %v4773 = vpack.c.b16 %v4205, %v4201
    %v4774 = vpack.c.b16 %v4206, %v4202
    %v4775 = vpack.c.b16 %v4211, %v4207
    %v4776 = vpack.c.b16 %v4212, %v4208
    %v4777 = vpack.c.b16 %v4213, %v4209
    %v4778 = vpack.c.b16 %v4214, %v4210
    %v4779 = vpack.c.b16 %v4219, %v4215
    %v4780 = vpack.c.b16 %v4220, %v4216
    %v4781 = vpack.c.b16 %v4221, %v4217
    %v4782 = vpack.c.b16 %v4222, %v4218
    %v4783 = vpack.c.b16 %v4227, %v4223
    %v4784 = vpack.c.b16 %v4228, %v4224
    %v4785 = vpack.c.b16 %v4229, %v4225
    %v4786 = vpack.c.b16 %v4230, %v4226
    %v4787 = vpack.c.b16 %v4235, %v4231
    %v4788 = vpack.c.b16 %v4236, %v4232
    %v4789 = vpack.c.b16 %v4237, %v4233
    %v4790 = vpack.c.b16 %v4238, %v4234
    %v4791 = vpack.c.b16 %v4243, %v4239
    %v4792 = vpack.c.b16 %v4244, %v4240
    %v4793 = vpack.c.b16 %v4245, %v4241
    %v4794 = vpack.c.b16 %v4246, %v4242
    %v4795 = vpack.c.b16 %v4251, %v4247
    %v4796 = vpack.c.b16 %v4252, %v4248
    %v4797 = vpack.c.b16 %v4253, %v4249
    %v4798 = vpack.c.b16 %v4254, %v4250
    %v4799 = vpack.c.b16 %v4259, %v4255
    %v4800 = vpack.c.b16 %v4260, %v4256
    %v4801 = vpack.c.b16 %v4261, %v4257
    %v4802 = vpack.c.b16 %v4262, %v4258
    %v4803 = vpack.c.b16 %v4267, %v4263
    %v4804 = vpack.c.b16 %v4268, %v4264
    %v4805 = vpack.c.b16 %v4269, %v4265
    %v4806 = vpack.c.b16 %v4270, %v4266
    %v4807 = vpack.c.b16 %v4275, %v4271
    %v4808 = vpack.c.b16 %v4276, %v4272
    %v4809 = vpack.c.b16 %v4277, %v4273
    %v4810 = vpack.c.b16 %v4278, %v4274
    %v4811 = vpack.c.b16 %v4283, %v4279
    %v4812 = vpack.c.b16 %v4284, %v4280
    %v4813 = vpack.c.b16 %v4285, %v4281
    %v4814 = vpack.c.b16 %v4286, %v4282
    %v4815 = vpack.c.b16 %v4291, %v4287
    %v4816 = vpack.c.b16 %v4292, %v4288
    %v4817 = vpack.c.b16 %v4293, %v4289
    %v4818 = vpack.c.b16 %v4294, %v4290
    %v4819 = vpack.c.b16 %v4299, %v4295
    %v4820 = vpack.c.b16 %v4300, %v4296
    %v4821 = vpack.c.b16 %v4301, %v4297
    %v4822 = vpack.c.b16 %v4302, %v4298
    %v4823 = vpack.c.b16 %v4307, %v4303
    %v4824 = vpack.c.b16 %v4308, %v4304
    %v4825 = vpack.c.b16 %v4309, %v4305
    %v4826 = vpack.c.b16 %v4310, %v4306
    %v4827 = vpack.c.b16 %v4315, %v4311
    %v4828 = vpack.c.b16 %v4316, %v4312
    %v4829 = vpack.c.b16 %v4317, %v4313
    %v4830 = vpack.c.b16 %v4318, %v4314
    %v4831 = vpack.c.b16 %v4323, %v4319
    %v4832 = vpack.c.b16 %v4324, %v4320
    %v4833 = vpack.c.b16 %v4325, %v4321
    %v4834 = vpack.c.b16 %v4326, %v4322
    %v4835 = vpack.c.b16 %v4331, %v4327
    %v4836 = vpack.c.b16 %v4332, %v4328
    %v4837 = vpack.c.b16 %v4333, %v4329
    %v4838 = vpack.c.b16 %v4334, %v4330
    %v4839 = vpack.c.b16 %v4339, %v4335
    %v4840 = vpack.c.b16 %v4340, %v4336
    %v4841 = vpack.c.b16 %v4341, %v4337
    %v4842 = vpack.c.b16 %v4342, %v4338
    %v4843 = vpack.c.b16 %v4347, %v4343
    %v4844 = vpack.c.b16 %v4348, %v4344
    %v4845 = vpack.c.b16 %v4349, %v4345
    %v4846 = vpack.c.b16 %v4350, %v4346
    %v4847 = vpack.c.b16 %v4355, %v4351
    %v4848 = vpack.c.b16 %v4356, %v4352
    %v4849 = vpack.c.b16 %v4357, %v4353
    %v4850 = vpack.c.b16 %v4358, %v4354
    %v4851 = vpack.c.b16 %v4363, %v4359
    %v4852 = vpack.c.b16 %v4364, %v4360
    %v4853 = vpack.c.b16 %v4365, %v4361
    %v4854 = vpack.c.b16 %v4366, %v4362
    %v4855 = vpack.c.b16 %v4371, %v4367
    %v4856 = vpack.c.b16 %v4372, %v4368
    %v4857 = vpack.c.b16 %v4373, %v4369
    %v4858 = vpack.c.b16 %v4374, %v4370
    %v4859 = vpack.c.b16 %v4379, %v4375
    %v4860 = vpack.c.b16 %v4380, %v4376
    %v4861 = vpack.c.b16 %v4381, %v4377
    %v4862 = vpack.c.b16 %v4382, %v4378
    %v4863 = vpack.c.b16 %v4387, %v4383
    %v4864 = vpack.c.b16 %v4388, %v4384
    %v4865 = vpack.c.b16 %v4389, %v4385
    %v4866 = vpack.c.b16 %v4390, %v4386
    %v4867 = vpack.c.b16 %v4395, %v4391
    %v4868 = vpack.c.b16 %v4396, %v4392
    %v4869 = vpack.c.b16 %v4397, %v4393
    %v4870 = vpack.c.b16 %v4398, %v4394
    %v4871 = vpack.c.b16 %v4403, %v4399
    %v4872 = vpack.c.b16 %v4404, %v4400
    %v4873 = vpack.c.b16 %v4405, %v4401
    %v4874 = vpack.c.b16 %v4406, %v4402
    %v4875 = vpack.c.b16 %v4411, %v4407
    %v4876 = vpack.c.b16 %v4412, %v4408
    %v4877 = vpack.c.b16 %v4413, %v4409
    %v4878 = vpack.c.b16 %v4414, %v4410
    %v4879 = vpack.c.b16 %v4419, %v4415
    %v4880 = vpack.c.b16 %v4420, %v4416
    %v4881 = vpack.c.b16 %v4421, %v4417
    %v4882 = vpack.c.b16 %v4422, %v4418
    %v4883 = vpack.c.b16 %v4427, %v4423
    %v4884 = vpack.c.b16 %v4428, %v4424
    %v4885 = vpack.c.b16 %v4429, %v4425
    %v4886 = vpack.c.b16 %v4430, %v4426
    %v4887 = vpack.c.b16 %v4435, %v4431
    %v4888 = vpack.c.b16 %v4436, %v4432
    %v4889 = vpack.c.b16 %v4437, %v4433
    %v4890 = vpack.c.b16 %v4438, %v4434
    %v4891 = vpack.c.b16 %v4443, %v4439
    %v4892 = vpack.c.b16 %v4444, %v4440
    %v4893 = vpack.c.b16 %v4445, %v4441
    %v4894 = vpack.c.b16 %v4446, %v4442
    %v4895 = vpack.c.b16 %v4451, %v4447
    %v4896 = vpack.c.b16 %v4452, %v4448
    %v4897 = vpack.c.b16 %v4453, %v4449
    %v4898 = vpack.c.b16 %v4454, %v4450
    %v4899 = vpack.c.b16 %v4459, %v4455
    %v4900 = vpack.c.b16 %v4460, %v4456
    %v4901 = vpack.c.b16 %v4461, %v4457
    %v4902 = vpack.c.b16 %v4462, %v4458
    %v4903 = vpack.c.b16 %v4467, %v4463
    %v4904 = vpack.c.b16 %v4468, %v4464
    %v4905 = vpack.c.b16 %v4469, %v4465
    %v4906 = vpack.c.b16 %v4470, %v4466
    %v4907 = vpack.c.b16 %v4475, %v4471
    %v4908 = vpack.c.b16 %v4476, %v4472
    %v4909 = vpack.c.b16 %v4477, %v4473
    %v4910 = vpack.c.b16 %v4478, %v4474
    %v4911 = vpack.c.b16 %v4483, %v4479
    %v4912 = vpack.c.b16 %v4484, %v4480
    %v4913 = vpack.c.b16 %v4485, %v4481
    %v4914 = vpack.c.b16 %v4486, %v4482
    %v4915 = vpack.c.b16 %v4491, %v4487
    %v4916 = vpack.c.b16 %v4492, %v4488
    %v4917 = vpack.c.b16 %v4493, %v4489
    %v4918 = vpack.c.b16 %v4494, %v4490
    %v4919 = vpack.c.b16 %v4499, %v4495
    %v4920 = vpack.c.b16 %v4500, %v4496
    %v4921 = vpack.c.b16 %v4501, %v4497
    %v4922 = vpack.c.b16 %v4502, %v4498
    %v4923 = vpack.c.b16 %v4507, %v4503
    %v4924 = vpack.c.b16 %v4508, %v4504
    %v4925 = vpack.c.b16 %v4509, %v4505
    %v4926 = vpack.c.b16 %v4510, %v4506
    %v4927 = vpack.c.b16 %v4515, %v4511
    %v4928 = vpack.c.b16 %v4516, %v4512
    %v4929 = vpack.c.b16 %v4517, %v4513
    %v4930 = vpack.c.b16 %v4518, %v4514
    %v4931 = vpack.c.b16 %v4523, %v4519
    %v4932 = vpack.c.b16 %v4524, %v4520
    %v4933 = vpack.c.b16 %v4525, %v4521
    %v4934 = vpack.c.b16 %v4526, %v4522
    %v4935 = vpack.c.b16 %v4531, %v4527
    %v4936 = vpack.c.b16 %v4532, %v4528
    %v4937 = vpack.c.b16 %v4533, %v4529
    %v4938 = vpack.c.b16 %v4534, %v4530
    %v4939 = vpack.c.b16 %v4539, %v4535
    %v4940 = vpack.c.b16 %v4540, %v4536
    %v4941 = vpack.c.b16 %v4541, %v4537
    %v4942 = vpack.c.b16 %v4542, %v4538
    %v4943 = vpack.c.b16 %v4547, %v4543
    %v4944 = vpack.c.b16 %v4548, %v4544
    %v4945 = vpack.c.b16 %v4549, %v4545
    %v4946 = vpack.c.b16 %v4550, %v4546
    %v4947 = vpack.c.b16 %v4555, %v4551
    %v4948 = vpack.c.b16 %v4556, %v4552
    %v4949 = vpack.c.b16 %v4557, %v4553
    %v4950 = vpack.c.b16 %v4558, %v4554
    %v4951 = vpack.c.b16 %v4563, %v4559
    %v4952 = vpack.c.b16 %v4564, %v4560
    %v4953 = vpack.c.b16 %v4565, %v4561
    %v4954 = vpack.c.b16 %v4566, %v4562
    %v4955 = vpack.c.b16 %v4571, %v4567
    %v4956 = vpack.c.b16 %v4572, %v4568
    %v4957 = vpack.c.b16 %v4573, %v4569
    %v4958 = vpack.c.b16 %v4574, %v4570
    %v4959 = vpack.c.b16 %v4579, %v4575
    %v4960 = vpack.c.b16 %v4580, %v4576
    %v4961 = vpack.c.b16 %v4581, %v4577
    %v4962 = vpack.c.b16 %v4582, %v4578
    %v4963 = vpack.c.b16 %v4587, %v4583
    %v4964 = vpack.c.b16 %v4588, %v4584
    %v4965 = vpack.c.b16 %v4589, %v4585
    %v4966 = vpack.c.b16 %v4590, %v4586
    %v4967 = vpack.c.b16 %v4595, %v4591
    %v4968 = vpack.c.b16 %v4596, %v4592
    %v4969 = vpack.c.b16 %v4597, %v4593
    %v4970 = vpack.c.b16 %v4598, %v4594
    %v4971 = vpack.c.b16 %v4603, %v4599
    %v4972 = vpack.c.b16 %v4604, %v4600
    %v4973 = vpack.c.b16 %v4605, %v4601
    %v4974 = vpack.c.b16 %v4606, %v4602
    %v4975 = vpack.c.b16 %v4611, %v4607
    %v4976 = vpack.c.b16 %v4612, %v4608
    %v4977 = vpack.c.b16 %v4613, %v4609
    %v4978 = vpack.c.b16 %v4614, %v4610
    %v4979 = vpack.c.b16 %v4619, %v4615
    %v4980 = vpack.c.b16 %v4620, %v4616
    %v4981 = vpack.c.b16 %v4621, %v4617
    %v4982 = vpack.c.b16 %v4622, %v4618
    %v4983 = vpack.c.b16 %v4627, %v4623
    %v4984 = vpack.c.b16 %v4628, %v4624
    %v4985 = vpack.c.b16 %v4629, %v4625
    %v4986 = vpack.c.b16 %v4630, %v4626
    %v4987 = vpack.c.b16 %v4635, %v4631
    %v4988 = vpack.c.b16 %v4636, %v4632
    %v4989 = vpack.c.b16 %v4637, %v4633
    %v4990 = vpack.c.b16 %v4638, %v4634
    %v4991 = vpack.c.b16 %v4643, %v4639
    %v4992 = vpack.c.b16 %v4644, %v4640
    %v4993 = vpack.c.b16 %v4645, %v4641
    %v4994 = vpack.c.b16 %v4646, %v4642
    %v4995 = vpack.c.b16 %v4651, %v4647
    %v4996 = vpack.c.b16 %v4652, %v4648
    %v4997 = vpack.c.b16 %v4653, %v4649
    %v4998 = vpack.c.b16 %v4654, %v4650
    %v4999 = vpack.c.b16 %v4659, %v4655
    %v5000 = vpack.c.b16 %v4660, %v4656
    %v5001 = vpack.c.b16 %v4661, %v4657
    %v5002 = vpack.c.b16 %v4662, %v4658
    %v5003 = vpack.c.b16 %v4667, %v4663
    %v5004 = vpack.c.b16 %v4668, %v4664
    %v5005 = vpack.c.b16 %v4669, %v4665
    %v5006 = vpack.c.b16 %v4670, %v4666
    %v5007 = vpack.c.b16 %v4675, %v4671
    %v5008 = vpack.c.b16 %v4676, %v4672
    %v5009 = vpack.c.b16 %v4677, %v4673
    %v5010 = vpack.c.b16 %v4678, %v4674
    %v5011 = vpack.c.b16 %v4683, %v4679
    %v5012 = vpack.c.b16 %v4684, %v4680
    %v5013 = vpack.c.b16 %v4685, %v4681
    %v5014 = vpack.c.b16 %v4686, %v4682
    %v5015 = vpack.c.b16 %v4691, %v4687
    %v5016 = vpack.c.b16 %v4692, %v4688
    %v5017 = vpack.c.b16 %v4693, %v4689
    %v5018 = vpack.c.b16 %v4694, %v4690
    %v5019 = vpack.c.b16 %v4699, %v4695
    %v5020 = vpack.c.b16 %v4700, %v4696
    %v5021 = vpack.c.b16 %v4701, %v4697
    %v5022 = vpack.c.b16 %v4702, %v4698
    %v5023 = vpack.c.b16 %v4707, %v4703
    %v5024 = vpack.c.b16 %v4708, %v4704
    %v5025 = vpack.c.b16 %v4709, %v4705
    %v5026 = vpack.c.b16 %v4710, %v4706
    %v5027 = vpack.c.b16 %v4715, %v4711
    %v5028 = vpack.c.b16 %v4716, %v4712
    %v5029 = vpack.c.b16 %v4717, %v4713
    %v5030 = vpack.c.b16 %v4718, %v4714
    %v5031 = vpack.c.b16 %v4723, %v4719
    %v5032 = vpack.c.b16 %v4724, %v4720
    %v5033 = vpack.c.b16 %v4725, %v4721
    %v5034 = vpack.c.b16 %v4726, %v4722
    %v5035 = vpack.c.b16 %v4731, %v4727
    %v5036 = vpack.c.b16 %v4732, %v4728
    %v5037 = vpack.c.b16 %v4733, %v4729
    %v5038 = vpack.c.b16 %v4734, %v4730
    %v5039 = vpack.c.b16 %v4739, %v4735
    %v5040 = vpack.c.b16 %v4740, %v4736
    %v5041 = vpack.c.b16 %v4741, %v4737
    %v5042 = vpack.c.b16 %v4742, %v4738
    %v5043 = vpack.c.b16 %v4747, %v4743
    %v5044 = vpack.c.b16 %v4748, %v4744
    %v5045 = vpack.c.b16 %v4749, %v4745
    %v5046 = vpack.c.b16 %v4750, %v4746
    %v5047 = vpack.c.b16 %v4755, %v4751
    %v5048 = vpack.c.b16 %v4756, %v4752
    %v5049 = vpack.c.b16 %v4757, %v4753
    %v5050 = vpack.c.b16 %v4758, %v4754
    %v5051 = vpack.c.b16 %v4763, %v4759
    %v5052 = vpack.c.b16 %v4764, %v4760
    %v5053 = vpack.c.b16 %v4765, %v4761
    %v5054 = vpack.c.b16 %v4766, %v4762
    %5343 = vmatpush.bf16.msra.mxu0 %v4795
    %5344 = vmatpush.bf16.msra.mxu0 %v4791
    %5345 = vmatpush.bf16.msra.mxu0 %v4787
    %5346 = vmatpush.bf16.msra.mxu0 %v4783
    %5347 = vmatpush.bf16.msra.mxu0 %v4779
    %5348 = vmatpush.bf16.msra.mxu0 %v4775
    %5349 = vmatpush.bf16.msra.mxu0 %v4771
    %5350 = vmatpush.bf16.msra.mxu0 %v4767
    %5351 = vmatmul.bf16.gmra.mxu0 %v3596
    %v5352 = vpop.f32.mrf.mxu0
    %v5353 = vadd.f32 %v3895, %v5352
    %v5354 = vpop.f32.mrf.mxu0
    %5355 = vdwg.mxu0
    %5356 = vmatpush.bf16.msra.mxu0 %v4827
    %5357 = vmatpush.bf16.msra.mxu0 %v4823
    %5358 = vmatpush.bf16.msra.mxu0 %v4819
    %5359 = vmatpush.bf16.msra.mxu0 %v4815
    %5360 = vmatpush.bf16.msra.mxu0 %v4811
    %5361 = vmatpush.bf16.msra.mxu0 %v4807
    %5362 = vmatpush.bf16.msra.mxu0 %v4803
    %5363 = vmatpush.bf16.msra.mxu0 %v4799
    %5364 = vmatmul.bf16.gmra.mxu0 %v3597
    %v5365 = vpop.f32.mrf.mxu0
    %v5366 = vadd.f32 %v5353, %v5365
    %v5367 = vpop.f32.mrf.mxu0
    %5368 = vdwg.mxu0
    %5369 = vmatpush.bf16.msra.mxu0 %v4859
    %5370 = vmatpush.bf16.msra.mxu0 %v4855
    %5371 = vmatpush.bf16.msra.mxu0 %v4851
    %5372 = vmatpush.bf16.msra.mxu0 %v4847
    %5373 = vmatpush.bf16.msra.mxu0 %v4843
    %5374 = vmatpush.bf16.msra.mxu0 %v4839
    %5375 = vmatpush.bf16.msra.mxu0 %v4835
    %5376 = vmatpush.bf16.msra.mxu0 %v4831
    %5377 = vmatmul.bf16.gmra.mxu0 %v3598
    %v5378 = vpop.f32.mrf.mxu0
    %v5379 = vadd.f32 %v5366, %v5378
    %v5380 = vpop.f32.mrf.mxu0
    %5381 = vdwg.mxu0
    %5382 = vmatpush.bf16.msra.mxu0 %v4891
    %5383 = vmatpush.bf16.msra.mxu0 %v4887
    %5384 = vmatpush.bf16.msra.mxu0 %v4883
    %5385 = vmatpush.bf16.msra.mxu0 %v4879
    %5386 = vmatpush.bf16.msra.mxu0 %v4875
    %5387 = vmatpush.bf16.msra.mxu0 %v4871
    %5388 = vmatpush.bf16.msra.mxu0 %v4867
    %5389 = vmatpush.bf16.msra.mxu0 %v4863
    %5390 = vmatmul.bf16.gmra.mxu0 %v3599
    %v5391 = vpop.f32.mrf.mxu0
    %v5392 = vadd.f32 %v5379, %v5391
    %v5393 = vpop.f32.mrf.mxu0
    %5394 = vdwg.mxu0
    %5395 = vmatpush.bf16.msra.mxu0 %v4923
    %5396 = vmatpush.bf16.msra.mxu0 %v4919
    %5397 = vmatpush.bf16.msra.mxu0 %v4915
    %5398 = vmatpush.bf16.msra.mxu0 %v4911
    %5399 = vmatpush.bf16.msra.mxu0 %v4907
    %5400 = vmatpush.bf16.msra.mxu0 %v4903
    %5401 = vmatpush.bf16.msra.mxu0 %v4899
    %5402 = vmatpush.bf16.msra.mxu0 %v4895
    %5403 = vmatmul.bf16.gmra.mxu0 %v3600
    %v5404 = vpop.f32.mrf.mxu0
    %v5405 = vadd.f32 %v5392, %v5404
    %v5406 = vpop.f32.mrf.mxu0
    %5407 = vdwg.mxu0
    %5408 = vmatpush.bf16.msra.mxu0 %v4955
    %5409 = vmatpush.bf16.msra.mxu0 %v4951
    %5410 = vmatpush.bf16.msra.mxu0 %v4947
    %5411 = vmatpush.bf16.msra.mxu0 %v4943
    %5412 = vmatpush.bf16.msra.mxu0 %v4939
    %5413 = vmatpush.bf16.msra.mxu0 %v4935
    %5414 = vmatpush.bf16.msra.mxu0 %v4931
    %5415 = vmatpush.bf16.msra.mxu0 %v4927
    %5416 = vmatmul.bf16.gmra.mxu0 %v3601
    %v5417 = vpop.f32.mrf.mxu0
    %v5418 = vadd.f32 %v5405, %v5417
    %v5419 = vpop.f32.mrf.mxu0
    %5420 = vdwg.mxu0
    %5421 = vmatpush.bf16.msra.mxu0 %v4987
    %5422 = vmatpush.bf16.msra.mxu0 %v4983
    %5423 = vmatpush.bf16.msra.mxu0 %v4979
    %5424 = vmatpush.bf16.msra.mxu0 %v4975
    %5425 = vmatpush.bf16.msra.mxu0 %v4971
    %5426 = vmatpush.bf16.msra.mxu0 %v4967
    %5427 = vmatpush.bf16.msra.mxu0 %v4963
    %5428 = vmatpush.bf16.msra.mxu0 %v4959
    %5429 = vmatmul.bf16.gmra.mxu0 %v3602
    %v5430 = vpop.f32.mrf.mxu0
    %v5431 = vadd.f32 %v5418, %v5430
    %v5432 = vpop.f32.mrf.mxu0
    %5433 = vdwg.mxu0
    %5434 = vmatpush.bf16.msra.mxu0 %v5019
    %5435 = vmatpush.bf16.msra.mxu0 %v5015
    %5436 = vmatpush.bf16.msra.mxu0 %v5011
    %5437 = vmatpush.bf16.msra.mxu0 %v5007
    %5438 = vmatpush.bf16.msra.mxu0 %v5003
    %5439 = vmatpush.bf16.msra.mxu0 %v4999
    %5440 = vmatpush.bf16.msra.mxu0 %v4995
    %5441 = vmatpush.bf16.msra.mxu0 %v4991
    %5442 = vmatmul.bf16.gmra.mxu0 %v3603
    %v5443 = vpop.f32.mrf.mxu0
    %v5444 = vadd.f32 %v5431, %v5443
    %v5445 = vpop.f32.mrf.mxu0
    %5446 = vdwg.mxu0
    %5447 = vmatpush.bf16.msra.mxu0 %v5051
    %5448 = vmatpush.bf16.msra.mxu0 %v5047
    %5449 = vmatpush.bf16.msra.mxu0 %v5043
    %5450 = vmatpush.bf16.msra.mxu0 %v5039
    %5451 = vmatpush.bf16.msra.mxu0 %v5035
    %5452 = vmatpush.bf16.msra.mxu0 %v5031
    %5453 = vmatpush.bf16.msra.mxu0 %v5027
    %5454 = vmatpush.bf16.msra.mxu0 %v5023
    %5455 = vmatmul.bf16.gmra.mxu0 %v3604
    %v5456 = vpop.f32.mrf.mxu0
    %v5457 = vadd.f32 %v5444, %v5456
    %v5458 = vpop.f32.mrf.mxu0
    %5459 = vdwg.mxu0
    %5460 = vmatpush.bf16.msra.mxu0 %v4796
    %5461 = vmatpush.bf16.msra.mxu0 %v4792
    %5462 = vmatpush.bf16.msra.mxu0 %v4788
    %5463 = vmatpush.bf16.msra.mxu0 %v4784
    %5464 = vmatpush.bf16.msra.mxu0 %v4780
    %5465 = vmatpush.bf16.msra.mxu0 %v4776
    %5466 = vmatpush.bf16.msra.mxu0 %v4772
    %5467 = vmatpush.bf16.msra.mxu0 %v4768
    %5468 = vmatmul.bf16.gmra.mxu0 %v3596
    %v5469 = vpop.f32.mrf.mxu0
    %v5470 = vadd.f32 %v3896, %v5469
    %v5471 = vpop.f32.mrf.mxu0
    %5472 = vdwg.mxu0
    %5473 = vmatpush.bf16.msra.mxu0 %v4828
    %5474 = vmatpush.bf16.msra.mxu0 %v4824
    %5475 = vmatpush.bf16.msra.mxu0 %v4820
    %5476 = vmatpush.bf16.msra.mxu0 %v4816
    %5477 = vmatpush.bf16.msra.mxu0 %v4812
    %5478 = vmatpush.bf16.msra.mxu0 %v4808
    %5479 = vmatpush.bf16.msra.mxu0 %v4804
    %5480 = vmatpush.bf16.msra.mxu0 %v4800
    %5481 = vmatmul.bf16.gmra.mxu0 %v3597
    %v5482 = vpop.f32.mrf.mxu0
    %v5483 = vadd.f32 %v5470, %v5482
    %v5484 = vpop.f32.mrf.mxu0
    %5485 = vdwg.mxu0
    %5486 = vmatpush.bf16.msra.mxu0 %v4860
    %5487 = vmatpush.bf16.msra.mxu0 %v4856
    %5488 = vmatpush.bf16.msra.mxu0 %v4852
    %5489 = vmatpush.bf16.msra.mxu0 %v4848
    %5490 = vmatpush.bf16.msra.mxu0 %v4844
    %5491 = vmatpush.bf16.msra.mxu0 %v4840
    %5492 = vmatpush.bf16.msra.mxu0 %v4836
    %5493 = vmatpush.bf16.msra.mxu0 %v4832
    %5494 = vmatmul.bf16.gmra.mxu0 %v3598
    %v5495 = vpop.f32.mrf.mxu0
    %v5496 = vadd.f32 %v5483, %v5495
    %v5497 = vpop.f32.mrf.mxu0
    %5498 = vdwg.mxu0
    %5499 = vmatpush.bf16.msra.mxu0 %v4892
    %5500 = vmatpush.bf16.msra.mxu0 %v4888
    %5501 = vmatpush.bf16.msra.mxu0 %v4884
    %5502 = vmatpush.bf16.msra.mxu0 %v4880
    %5503 = vmatpush.bf16.msra.mxu0 %v4876
    %5504 = vmatpush.bf16.msra.mxu0 %v4872
    %5505 = vmatpush.bf16.msra.mxu0 %v4868
    %5506 = vmatpush.bf16.msra.mxu0 %v4864
    %5507 = vmatmul.bf16.gmra.mxu0 %v3599
    %v5508 = vpop.f32.mrf.mxu0
    %v5509 = vadd.f32 %v5496, %v5508
    %v5510 = vpop.f32.mrf.mxu0
    %5511 = vdwg.mxu0
    %5512 = vmatpush.bf16.msra.mxu0 %v4924
    %5513 = vmatpush.bf16.msra.mxu0 %v4920
    %5514 = vmatpush.bf16.msra.mxu0 %v4916
    %5515 = vmatpush.bf16.msra.mxu0 %v4912
    %5516 = vmatpush.bf16.msra.mxu0 %v4908
    %5517 = vmatpush.bf16.msra.mxu0 %v4904
    %5518 = vmatpush.bf16.msra.mxu0 %v4900
    %5519 = vmatpush.bf16.msra.mxu0 %v4896
    %5520 = vmatmul.bf16.gmra.mxu0 %v3600
    %v5521 = vpop.f32.mrf.mxu0
    %v5522 = vadd.f32 %v5509, %v5521
    %v5523 = vpop.f32.mrf.mxu0
    %5524 = vdwg.mxu0
    %5525 = vmatpush.bf16.msra.mxu0 %v4956
    %5526 = vmatpush.bf16.msra.mxu0 %v4952
    %5527 = vmatpush.bf16.msra.mxu0 %v4948
    %5528 = vmatpush.bf16.msra.mxu0 %v4944
    %5529 = vmatpush.bf16.msra.mxu0 %v4940
    %5530 = vmatpush.bf16.msra.mxu0 %v4936
    %5531 = vmatpush.bf16.msra.mxu0 %v4932
    %5532 = vmatpush.bf16.msra.mxu0 %v4928
    %5533 = vmatmul.bf16.gmra.mxu0 %v3601
    %v5534 = vpop.f32.mrf.mxu0
    %v5535 = vadd.f32 %v5522, %v5534
    %v5536 = vpop.f32.mrf.mxu0
    %5537 = vdwg.mxu0
    %5538 = vmatpush.bf16.msra.mxu0 %v4988
    %5539 = vmatpush.bf16.msra.mxu0 %v4984
    %5540 = vmatpush.bf16.msra.mxu0 %v4980
    %5541 = vmatpush.bf16.msra.mxu0 %v4976
    %5542 = vmatpush.bf16.msra.mxu0 %v4972
    %5543 = vmatpush.bf16.msra.mxu0 %v4968
    %5544 = vmatpush.bf16.msra.mxu0 %v4964
    %5545 = vmatpush.bf16.msra.mxu0 %v4960
    %5546 = vmatmul.bf16.gmra.mxu0 %v3602
    %v5547 = vpop.f32.mrf.mxu0
    %v5548 = vadd.f32 %v5535, %v5547
    %v5549 = vpop.f32.mrf.mxu0
    %5550 = vdwg.mxu0
    %5551 = vmatpush.bf16.msra.mxu0 %v5020
    %5552 = vmatpush.bf16.msra.mxu0 %v5016
    %5553 = vmatpush.bf16.msra.mxu0 %v5012
    %5554 = vmatpush.bf16.msra.mxu0 %v5008
    %5555 = vmatpush.bf16.msra.mxu0 %v5004
    %5556 = vmatpush.bf16.msra.mxu0 %v5000
    %5557 = vmatpush.bf16.msra.mxu0 %v4996
    %5558 = vmatpush.bf16.msra.mxu0 %v4992
    %5559 = vmatmul.bf16.gmra.mxu0 %v3603
    %v5560 = vpop.f32.mrf.mxu0
    %v5561 = vadd.f32 %v5548, %v5560
    %v5562 = vpop.f32.mrf.mxu0
    %5563 = vdwg.mxu0
    %5564 = vmatpush.bf16.msra.mxu0 %v5052
    %5565 = vmatpush.bf16.msra.mxu0 %v5048
    %5566 = vmatpush.bf16.msra.mxu0 %v5044
    %5567 = vmatpush.bf16.msra.mxu0 %v5040
    %5568 = vmatpush.bf16.msra.mxu0 %v5036
    %5569 = vmatpush.bf16.msra.mxu0 %v5032
    %5570 = vmatpush.bf16.msra.mxu0 %v5028
    %5571 = vmatpush.bf16.msra.mxu0 %v5024
    %5572 = vmatmul.bf16.gmra.mxu0 %v3604
    %v5573 = vpop.f32.mrf.mxu0
    %v5574 = vadd.f32 %v5561, %v5573
    %v5575 = vpop.f32.mrf.mxu0
    %5576 = vdwg.mxu0
    %5577 = vmatpush.bf16.msra.mxu0 %v4797
    %5578 = vmatpush.bf16.msra.mxu0 %v4793
    %5579 = vmatpush.bf16.msra.mxu0 %v4789
    %5580 = vmatpush.bf16.msra.mxu0 %v4785
    %5581 = vmatpush.bf16.msra.mxu0 %v4781
    %5582 = vmatpush.bf16.msra.mxu0 %v4777
    %5583 = vmatpush.bf16.msra.mxu0 %v4773
    %5584 = vmatpush.bf16.msra.mxu0 %v4769
    %5585 = vmatmul.bf16.gmra.mxu0 %v3596
    %v5586 = vpop.f32.mrf.mxu0
    %v5587 = vadd.f32 %v3897, %v5586
    %v5588 = vpop.f32.mrf.mxu0
    %5589 = vdwg.mxu0
    %5590 = vmatpush.bf16.msra.mxu0 %v4829
    %5591 = vmatpush.bf16.msra.mxu0 %v4825
    %5592 = vmatpush.bf16.msra.mxu0 %v4821
    %5593 = vmatpush.bf16.msra.mxu0 %v4817
    %5594 = vmatpush.bf16.msra.mxu0 %v4813
    %5595 = vmatpush.bf16.msra.mxu0 %v4809
    %5596 = vmatpush.bf16.msra.mxu0 %v4805
    %5597 = vmatpush.bf16.msra.mxu0 %v4801
    %5598 = vmatmul.bf16.gmra.mxu0 %v3597
    %v5599 = vpop.f32.mrf.mxu0
    %v5600 = vadd.f32 %v5587, %v5599
    %v5601 = vpop.f32.mrf.mxu0
    %5602 = vdwg.mxu0
    %5603 = vmatpush.bf16.msra.mxu0 %v4861
    %5604 = vmatpush.bf16.msra.mxu0 %v4857
    %5605 = vmatpush.bf16.msra.mxu0 %v4853
    %5606 = vmatpush.bf16.msra.mxu0 %v4849
    %5607 = vmatpush.bf16.msra.mxu0 %v4845
    %5608 = vmatpush.bf16.msra.mxu0 %v4841
    %5609 = vmatpush.bf16.msra.mxu0 %v4837
    %5610 = vmatpush.bf16.msra.mxu0 %v4833
    %5611 = vmatmul.bf16.gmra.mxu0 %v3598
    %v5612 = vpop.f32.mrf.mxu0
    %v5613 = vadd.f32 %v5600, %v5612
    %v5614 = vpop.f32.mrf.mxu0
    %5615 = vdwg.mxu0
    %5616 = vmatpush.bf16.msra.mxu0 %v4893
    %5617 = vmatpush.bf16.msra.mxu0 %v4889
    %5618 = vmatpush.bf16.msra.mxu0 %v4885
    %5619 = vmatpush.bf16.msra.mxu0 %v4881
    %5620 = vmatpush.bf16.msra.mxu0 %v4877
    %5621 = vmatpush.bf16.msra.mxu0 %v4873
    %5622 = vmatpush.bf16.msra.mxu0 %v4869
    %5623 = vmatpush.bf16.msra.mxu0 %v4865
    %5624 = vmatmul.bf16.gmra.mxu0 %v3599
    %v5625 = vpop.f32.mrf.mxu0
    %v5626 = vadd.f32 %v5613, %v5625
    %v5627 = vpop.f32.mrf.mxu0
    %5628 = vdwg.mxu0
    %5629 = vmatpush.bf16.msra.mxu0 %v4925
    %5630 = vmatpush.bf16.msra.mxu0 %v4921
    %5631 = vmatpush.bf16.msra.mxu0 %v4917
    %5632 = vmatpush.bf16.msra.mxu0 %v4913
    %5633 = vmatpush.bf16.msra.mxu0 %v4909
    %5634 = vmatpush.bf16.msra.mxu0 %v4905
    %5635 = vmatpush.bf16.msra.mxu0 %v4901
    %5636 = vmatpush.bf16.msra.mxu0 %v4897
    %5637 = vmatmul.bf16.gmra.mxu0 %v3600
    %v5638 = vpop.f32.mrf.mxu0
    %v5639 = vadd.f32 %v5626, %v5638
    %v5640 = vpop.f32.mrf.mxu0
    %5641 = vdwg.mxu0
    %5642 = vmatpush.bf16.msra.mxu0 %v4957
    %5643 = vmatpush.bf16.msra.mxu0 %v4953
    %5644 = vmatpush.bf16.msra.mxu0 %v4949
    %5645 = vmatpush.bf16.msra.mxu0 %v4945
    %5646 = vmatpush.bf16.msra.mxu0 %v4941
    %5647 = vmatpush.bf16.msra.mxu0 %v4937
    %5648 = vmatpush.bf16.msra.mxu0 %v4933
    %5649 = vmatpush.bf16.msra.mxu0 %v4929
    %5650 = vmatmul.bf16.gmra.mxu0 %v3601
    %v5651 = vpop.f32.mrf.mxu0
    %v5652 = vadd.f32 %v5639, %v5651
    %v5653 = vpop.f32.mrf.mxu0
    %5654 = vdwg.mxu0
    %5655 = vmatpush.bf16.msra.mxu0 %v4989
    %5656 = vmatpush.bf16.msra.mxu0 %v4985
    %5657 = vmatpush.bf16.msra.mxu0 %v4981
    %5658 = vmatpush.bf16.msra.mxu0 %v4977
    %5659 = vmatpush.bf16.msra.mxu0 %v4973
    %5660 = vmatpush.bf16.msra.mxu0 %v4969
    %5661 = vmatpush.bf16.msra.mxu0 %v4965
    %5662 = vmatpush.bf16.msra.mxu0 %v4961
    %5663 = vmatmul.bf16.gmra.mxu0 %v3602
    %v5664 = vpop.f32.mrf.mxu0
    %v5665 = vadd.f32 %v5652, %v5664
    %v5666 = vpop.f32.mrf.mxu0
    %5667 = vdwg.mxu0
    %5668 = vmatpush.bf16.msra.mxu0 %v5021
    %5669 = vmatpush.bf16.msra.mxu0 %v5017
    %5670 = vmatpush.bf16.msra.mxu0 %v5013
    %5671 = vmatpush.bf16.msra.mxu0 %v5009
    %5672 = vmatpush.bf16.msra.mxu0 %v5005
    %5673 = vmatpush.bf16.msra.mxu0 %v5001
    %5674 = vmatpush.bf16.msra.mxu0 %v4997
    %5675 = vmatpush.bf16.msra.mxu0 %v4993
    %5676 = vmatmul.bf16.gmra.mxu0 %v3603
    %v5677 = vpop.f32.mrf.mxu0
    %v5678 = vadd.f32 %v5665, %v5677
    %v5679 = vpop.f32.mrf.mxu0
    %5680 = vdwg.mxu0
    %5681 = vmatpush.bf16.msra.mxu0 %v5053
    %5682 = vmatpush.bf16.msra.mxu0 %v5049
    %5683 = vmatpush.bf16.msra.mxu0 %v5045
    %5684 = vmatpush.bf16.msra.mxu0 %v5041
    %5685 = vmatpush.bf16.msra.mxu0 %v5037
    %5686 = vmatpush.bf16.msra.mxu0 %v5033
    %5687 = vmatpush.bf16.msra.mxu0 %v5029
    %5688 = vmatpush.bf16.msra.mxu0 %v5025
    %5689 = vmatmul.bf16.gmra.mxu0 %v3604
    %v5690 = vpop.f32.mrf.mxu0
    %v5691 = vadd.f32 %v5678, %v5690
    %v5692 = vpop.f32.mrf.mxu0
    %5693 = vdwg.mxu0
    %5694 = vmatpush.bf16.msra.mxu0 %v4798
    %5695 = vmatpush.bf16.msra.mxu0 %v4794
    %5696 = vmatpush.bf16.msra.mxu0 %v4790
    %5697 = vmatpush.bf16.msra.mxu0 %v4786
    %5698 = vmatpush.bf16.msra.mxu0 %v4782
    %5699 = vmatpush.bf16.msra.mxu0 %v4778
    %5700 = vmatpush.bf16.msra.mxu0 %v4774
    %5701 = vmatpush.bf16.msra.mxu0 %v4770
    %5702 = vmatmul.bf16.gmra.mxu0 %v3596
    %v5703 = vpop.f32.mrf.mxu0
    %v5704 = vadd.f32 %v3898, %v5703
    %v5705 = vpop.f32.mrf.mxu0
    %5706 = vdwg.mxu0
    %5707 = vmatpush.bf16.msra.mxu0 %v4830
    %5708 = vmatpush.bf16.msra.mxu0 %v4826
    %5709 = vmatpush.bf16.msra.mxu0 %v4822
    %5710 = vmatpush.bf16.msra.mxu0 %v4818
    %5711 = vmatpush.bf16.msra.mxu0 %v4814
    %5712 = vmatpush.bf16.msra.mxu0 %v4810
    %5713 = vmatpush.bf16.msra.mxu0 %v4806
    %5714 = vmatpush.bf16.msra.mxu0 %v4802
    %5715 = vmatmul.bf16.gmra.mxu0 %v3597
    %v5716 = vpop.f32.mrf.mxu0
    %v5717 = vadd.f32 %v5704, %v5716
    %v5718 = vpop.f32.mrf.mxu0
    %5719 = vdwg.mxu0
    %5720 = vmatpush.bf16.msra.mxu0 %v4862
    %5721 = vmatpush.bf16.msra.mxu0 %v4858
    %5722 = vmatpush.bf16.msra.mxu0 %v4854
    %5723 = vmatpush.bf16.msra.mxu0 %v4850
    %5724 = vmatpush.bf16.msra.mxu0 %v4846
    %5725 = vmatpush.bf16.msra.mxu0 %v4842
    %5726 = vmatpush.bf16.msra.mxu0 %v4838
    %5727 = vmatpush.bf16.msra.mxu0 %v4834
    %5728 = vmatmul.bf16.gmra.mxu0 %v3598
    %v5729 = vpop.f32.mrf.mxu0
    %v5730 = vadd.f32 %v5717, %v5729
    %v5731 = vpop.f32.mrf.mxu0
    %5732 = vdwg.mxu0
    %5733 = vmatpush.bf16.msra.mxu0 %v4894
    %5734 = vmatpush.bf16.msra.mxu0 %v4890
    %5735 = vmatpush.bf16.msra.mxu0 %v4886
    %5736 = vmatpush.bf16.msra.mxu0 %v4882
    %5737 = vmatpush.bf16.msra.mxu0 %v4878
    %5738 = vmatpush.bf16.msra.mxu0 %v4874
    %5739 = vmatpush.bf16.msra.mxu0 %v4870
    %5740 = vmatpush.bf16.msra.mxu0 %v4866
    %5741 = vmatmul.bf16.gmra.mxu0 %v3599
    %v5742 = vpop.f32.mrf.mxu0
    %v5743 = vadd.f32 %v5730, %v5742
    %v5744 = vpop.f32.mrf.mxu0
    %5745 = vdwg.mxu0
    %5746 = vmatpush.bf16.msra.mxu0 %v4926
    %5747 = vmatpush.bf16.msra.mxu0 %v4922
    %5748 = vmatpush.bf16.msra.mxu0 %v4918
    %5749 = vmatpush.bf16.msra.mxu0 %v4914
    %5750 = vmatpush.bf16.msra.mxu0 %v4910
    %5751 = vmatpush.bf16.msra.mxu0 %v4906
    %5752 = vmatpush.bf16.msra.mxu0 %v4902
    %5753 = vmatpush.bf16.msra.mxu0 %v4898
    %5754 = vmatmul.bf16.gmra.mxu0 %v3600
    %v5755 = vpop.f32.mrf.mxu0
    %v5756 = vadd.f32 %v5743, %v5755
    %v5757 = vpop.f32.mrf.mxu0
    %5758 = vdwg.mxu0
    %5759 = vmatpush.bf16.msra.mxu0 %v4958
    %5760 = vmatpush.bf16.msra.mxu0 %v4954
    %5761 = vmatpush.bf16.msra.mxu0 %v4950
    %5762 = vmatpush.bf16.msra.mxu0 %v4946
    %5763 = vmatpush.bf16.msra.mxu0 %v4942
    %5764 = vmatpush.bf16.msra.mxu0 %v4938
    %5765 = vmatpush.bf16.msra.mxu0 %v4934
    %5766 = vmatpush.bf16.msra.mxu0 %v4930
    %5767 = vmatmul.bf16.gmra.mxu0 %v3601
    %v5768 = vpop.f32.mrf.mxu0
    %v5769 = vadd.f32 %v5756, %v5768
    %v5770 = vpop.f32.mrf.mxu0
    %5771 = vdwg.mxu0
    %5772 = vmatpush.bf16.msra.mxu0 %v4990
    %5773 = vmatpush.bf16.msra.mxu0 %v4986
    %5774 = vmatpush.bf16.msra.mxu0 %v4982
    %5775 = vmatpush.bf16.msra.mxu0 %v4978
    %5776 = vmatpush.bf16.msra.mxu0 %v4974
    %5777 = vmatpush.bf16.msra.mxu0 %v4970
    %5778 = vmatpush.bf16.msra.mxu0 %v4966
    %5779 = vmatpush.bf16.msra.mxu0 %v4962
    %5780 = vmatmul.bf16.gmra.mxu0 %v3602
    %v5781 = vpop.f32.mrf.mxu0
    %v5782 = vadd.f32 %v5769, %v5781
    %v5783 = vpop.f32.mrf.mxu0
    %5784 = vdwg.mxu0
    %5785 = vmatpush.bf16.msra.mxu0 %v5022
    %5786 = vmatpush.bf16.msra.mxu0 %v5018
    %5787 = vmatpush.bf16.msra.mxu0 %v5014
    %5788 = vmatpush.bf16.msra.mxu0 %v5010
    %5789 = vmatpush.bf16.msra.mxu0 %v5006
    %5790 = vmatpush.bf16.msra.mxu0 %v5002
    %5791 = vmatpush.bf16.msra.mxu0 %v4998
    %5792 = vmatpush.bf16.msra.mxu0 %v4994
    %5793 = vmatmul.bf16.gmra.mxu0 %v3603
    %v5794 = vpop.f32.mrf.mxu0
    %v5795 = vadd.f32 %v5782, %v5794
    %v5796 = vpop.f32.mrf.mxu0
    %5797 = vdwg.mxu0
    %5798 = vmatpush.bf16.msra.mxu0 %v5054
    %5799 = vmatpush.bf16.msra.mxu0 %v5050
    %5800 = vmatpush.bf16.msra.mxu0 %v5046
    %5801 = vmatpush.bf16.msra.mxu0 %v5042
    %5802 = vmatpush.bf16.msra.mxu0 %v5038
    %5803 = vmatpush.bf16.msra.mxu0 %v5034
    %5804 = vmatpush.bf16.msra.mxu0 %v5030
    %5805 = vmatpush.bf16.msra.mxu0 %v5026
    %5806 = vmatmul.bf16.gmra.mxu0 %v3604
    %v5807 = vpop.f32.mrf.mxu0
    %v5808 = vadd.f32 %v5795, %v5807
    %v5809 = vpop.f32.mrf.mxu0
    %5810 = vdwg.mxu0
    %v5811 = vmax.f32 %v5457, 0.0
    %v5812 = vmax.f32 %v5574, 0.0
    %v5813 = vmax.f32 %v5691, 0.0
    %v5814 = vmax.f32 %v5808, 0.0
    %v5815 = vpack.c.bf16 %v5811, %v5811
    %v5816 = vpack.c.bf16 %v5812, %v5812
    %v5817 = vpack.c.bf16 %v5813, %v5813
    %v5818 = vpack.c.bf16 %v5814, %v5814
    %v5819 = vld [vmem:[#allocation11] sm:$0xf]
    %v5820 = vld [vmem:[#allocation11 + $0x4] sm:$0xf]
    %v5821 = vld [vmem:[#allocation11 + $0x8] sm:$0xf]
    %v5822 = vld [vmem:[#allocation11 + $0xc] sm:$0xf]
    %v5823 = vld [vmem:[#allocation11 + $0x10] sm:$0xf]
    %v5824 = vld [vmem:[#allocation11 + $0x14] sm:$0xf]
    %v5825 = vld [vmem:[#allocation11 + $0x18] sm:$0xf]
    %v5826 = vld [vmem:[#allocation11 + $0x1c] sm:$0xf]
    %v5827 = vld [vmem:[#allocation11 + $0x20] sm:$0xf]
    %v5828 = vld [vmem:[#allocation11 + $0x24] sm:$0xf]
    %v5829 = vld [vmem:[#allocation11 + $0x28] sm:$0xf]
    %v5830 = vld [vmem:[#allocation11 + $0x2c] sm:$0xf]
    %v5831 = vld [vmem:[#allocation11 + $0x30] sm:$0xf]
    %v5832 = vld [vmem:[#allocation11 + $0x34] sm:$0xf]
    %v5833 = vld [vmem:[#allocation11 + $0x38] sm:$0xf]
    %v5834 = vld [vmem:[#allocation11 + $0x3c] sm:$0xf]
    %v5835 = vld [vmem:[#allocation11 + $0x40] sm:$0xf]
    %v5836 = vld [vmem:[#allocation11 + $0x44] sm:$0xf]
    %v5837 = vld [vmem:[#allocation11 + $0x48] sm:$0xf]
    %v5838 = vld [vmem:[#allocation11 + $0x4c] sm:$0xf]
    %v5839 = vld [vmem:[#allocation11 + $0x50] sm:$0xf]
    %v5840 = vld [vmem:[#allocation11 + $0x54] sm:$0xf]
    %v5841 = vld [vmem:[#allocation11 + $0x58] sm:$0xf]
    %v5842 = vld [vmem:[#allocation11 + $0x5c] sm:$0xf]
    %v5843 = vld [vmem:[#allocation11 + $0x60] sm:$0xf]
    %v5844 = vld [vmem:[#allocation11 + $0x64] sm:$0xf]
    %v5845 = vld [vmem:[#allocation11 + $0x68] sm:$0xf]
    %v5846 = vld [vmem:[#allocation11 + $0x6c] sm:$0xf]
    %v5847 = vld [vmem:[#allocation11 + $0x70] sm:$0xf]
    %v5848 = vld [vmem:[#allocation11 + $0x74] sm:$0xf]
    %v5849 = vld [vmem:[#allocation11 + $0x78] sm:$0xf]
    %v5850 = vld [vmem:[#allocation11 + $0x7c] sm:$0xf]
    %v5851 = vld [vmem:[#allocation11 + $0x80] sm:$0xf]
    %v5852 = vld [vmem:[#allocation11 + $0x84] sm:$0xf]
    %v5853 = vld [vmem:[#allocation11 + $0x88] sm:$0xf]
    %v5854 = vld [vmem:[#allocation11 + $0x8c] sm:$0xf]
    %v5855 = vld [vmem:[#allocation11 + $0x90] sm:$0xf]
    %v5856 = vld [vmem:[#allocation11 + $0x94] sm:$0xf]
    %v5857 = vld [vmem:[#allocation11 + $0x98] sm:$0xf]
    %v5858 = vld [vmem:[#allocation11 + $0x9c] sm:$0xf]
    %v5859 = vld [vmem:[#allocation11 + $0xa0] sm:$0xf]
    %v5860 = vld [vmem:[#allocation11 + $0xa4] sm:$0xf]
    %v5861 = vld [vmem:[#allocation11 + $0xa8] sm:$0xf]
    %v5862 = vld [vmem:[#allocation11 + $0xac] sm:$0xf]
    %v5863 = vld [vmem:[#allocation11 + $0xb0] sm:$0xf]
    %v5864 = vld [vmem:[#allocation11 + $0xb4] sm:$0xf]
    %v5865 = vld [vmem:[#allocation11 + $0xb8] sm:$0xf]
    %v5866 = vld [vmem:[#allocation11 + $0xbc] sm:$0xf]
    %v5867 = vld [vmem:[#allocation11 + $0xc0] sm:$0xf]
    %v5868 = vld [vmem:[#allocation11 + $0xc4] sm:$0xf]
    %v5869 = vld [vmem:[#allocation11 + $0xc8] sm:$0xf]
    %v5870 = vld [vmem:[#allocation11 + $0xcc] sm:$0xf]
    %v5871 = vld [vmem:[#allocation11 + $0xd0] sm:$0xf]
    %v5872 = vld [vmem:[#allocation11 + $0xd4] sm:$0xf]
    %v5873 = vld [vmem:[#allocation11 + $0xd8] sm:$0xf]
    %v5874 = vld [vmem:[#allocation11 + $0xdc] sm:$0xf]
    %v5875 = vld [vmem:[#allocation11 + $0xe0] sm:$0xf]
    %v5876 = vld [vmem:[#allocation11 + $0xe4] sm:$0xf]
    %v5877 = vld [vmem:[#allocation11 + $0xe8] sm:$0xf]
    %v5878 = vld [vmem:[#allocation11 + $0xec] sm:$0xf]
    %v5879 = vld [vmem:[#allocation11 + $0xf0] sm:$0xf]
    %v5880 = vld [vmem:[#allocation11 + $0xf4] sm:$0xf]
    %v5881 = vld [vmem:[#allocation11 + $0xf8] sm:$0xf]
    %v5882 = vld [vmem:[#allocation11 + $0xfc] sm:$0xf]
    %v5883 = vld [vmem:[#allocation13] sm:$0x1]
    %v5885 = vperm.slane %v5883, 0
    %v5951 = vunpack.c.l.b16 %v5819
    %v5952 = vunpack.c.l.b16 %v5820
    %v5953 = vunpack.c.l.b16 %v5821
    %v5954 = vunpack.c.l.b16 %v5822
    %v5955 = vunpack.c.l.b16 %v5823
    %v5956 = vunpack.c.l.b16 %v5824
    %v5957 = vunpack.c.l.b16 %v5825
    %v5958 = vunpack.c.l.b16 %v5826
    %v5959 = vunpack.c.l.b16 %v5827
    %v5960 = vunpack.c.l.b16 %v5828
    %v5961 = vunpack.c.l.b16 %v5829
    %v5962 = vunpack.c.l.b16 %v5830
    %v5963 = vunpack.c.l.b16 %v5831
    %v5964 = vunpack.c.l.b16 %v5832
    %v5965 = vunpack.c.l.b16 %v5833
    %v5966 = vunpack.c.l.b16 %v5834
    %v5967 = vunpack.c.l.b16 %v5835
    %v5968 = vunpack.c.l.b16 %v5836
    %v5969 = vunpack.c.l.b16 %v5837
    %v5970 = vunpack.c.l.b16 %v5838
    %v5971 = vunpack.c.l.b16 %v5839
    %v5972 = vunpack.c.l.b16 %v5840
    %v5973 = vunpack.c.l.b16 %v5841
    %v5974 = vunpack.c.l.b16 %v5842
    %v5975 = vunpack.c.l.b16 %v5843
    %v5976 = vunpack.c.l.b16 %v5844
    %v5977 = vunpack.c.l.b16 %v5845
    %v5978 = vunpack.c.l.b16 %v5846
    %v5979 = vunpack.c.l.b16 %v5847
    %v5980 = vunpack.c.l.b16 %v5848
    %v5981 = vunpack.c.l.b16 %v5849
    %v5982 = vunpack.c.l.b16 %v5850
    %v5983 = vunpack.c.l.b16 %v5851
    %v5984 = vunpack.c.l.b16 %v5852
    %v5985 = vunpack.c.l.b16 %v5853
    %v5986 = vunpack.c.l.b16 %v5854
    %v5987 = vunpack.c.l.b16 %v5855
    %v5988 = vunpack.c.l.b16 %v5856
    %v5989 = vunpack.c.l.b16 %v5857
    %v5990 = vunpack.c.l.b16 %v5858
    %v5991 = vunpack.c.l.b16 %v5859
    %v5992 = vunpack.c.l.b16 %v5860
    %v5993 = vunpack.c.l.b16 %v5861
    %v5994 = vunpack.c.l.b16 %v5862
    %v5995 = vunpack.c.l.b16 %v5863
    %v5996 = vunpack.c.l.b16 %v5864
    %v5997 = vunpack.c.l.b16 %v5865
    %v5998 = vunpack.c.l.b16 %v5866
    %v5999 = vunpack.c.l.b16 %v5867
    %v6000 = vunpack.c.l.b16 %v5868
    %v6001 = vunpack.c.l.b16 %v5869
    %v6002 = vunpack.c.l.b16 %v5870
    %v6003 = vunpack.c.l.b16 %v5871
    %v6004 = vunpack.c.l.b16 %v5872
    %v6005 = vunpack.c.l.b16 %v5873
    %v6006 = vunpack.c.l.b16 %v5874
    %v6007 = vunpack.c.l.b16 %v5875
    %v6008 = vunpack.c.l.b16 %v5876
    %v6009 = vunpack.c.l.b16 %v5877
    %v6010 = vunpack.c.l.b16 %v5878
    %v6011 = vunpack.c.l.b16 %v5879
    %v6012 = vunpack.c.l.b16 %v5880
    %v6013 = vunpack.c.l.b16 %v5881
    %v6014 = vunpack.c.l.b16 %v5882
    %v6015 = vpack.c.b16 %v5952, %v5951
    %v6016 = vpack.c.b16 %v5954, %v5953
    %v6017 = vpack.c.b16 %v5956, %v5955
    %v6018 = vpack.c.b16 %v5958, %v5957
    %v6019 = vpack.c.b16 %v5960, %v5959
    %v6020 = vpack.c.b16 %v5962, %v5961
    %v6021 = vpack.c.b16 %v5964, %v5963
    %v6022 = vpack.c.b16 %v5966, %v5965
    %v6023 = vpack.c.b16 %v5968, %v5967
    %v6024 = vpack.c.b16 %v5970, %v5969
    %v6025 = vpack.c.b16 %v5972, %v5971
    %v6026 = vpack.c.b16 %v5974, %v5973
    %v6027 = vpack.c.b16 %v5976, %v5975
    %v6028 = vpack.c.b16 %v5978, %v5977
    %v6029 = vpack.c.b16 %v5980, %v5979
    %v6030 = vpack.c.b16 %v5982, %v5981
    %v6031 = vpack.c.b16 %v5984, %v5983
    %v6032 = vpack.c.b16 %v5986, %v5985
    %v6033 = vpack.c.b16 %v5988, %v5987
    %v6034 = vpack.c.b16 %v5990, %v5989
    %v6035 = vpack.c.b16 %v5992, %v5991
    %v6036 = vpack.c.b16 %v5994, %v5993
    %v6037 = vpack.c.b16 %v5996, %v5995
    %v6038 = vpack.c.b16 %v5998, %v5997
    %v6039 = vpack.c.b16 %v6000, %v5999
    %v6040 = vpack.c.b16 %v6002, %v6001
    %v6041 = vpack.c.b16 %v6004, %v6003
    %v6042 = vpack.c.b16 %v6006, %v6005
    %v6043 = vpack.c.b16 %v6008, %v6007
    %v6044 = vpack.c.b16 %v6010, %v6009
    %v6045 = vpack.c.b16 %v6012, %v6011
    %v6046 = vpack.c.b16 %v6014, %v6013
    %6079 = vmatpush.bf16.msra.mxu0 %v6022
    %6080 = vmatpush.bf16.msra.mxu0 %v6021
    %6081 = vmatpush.bf16.msra.mxu0 %v6020
    %6082 = vmatpush.bf16.msra.mxu0 %v6019
    %6083 = vmatpush.bf16.msra.mxu0 %v6018
    %6084 = vmatpush.bf16.msra.mxu0 %v6017
    %6085 = vmatpush.bf16.msra.mxu0 %v6016
    %6086 = vmatpush.bf16.msra.mxu0 %v6015
    %6087 = vmatmul.bf16.gmra.mxu0 %v5815
    %v6088 = vpop.f32.mrf.mxu0
    %v6089 = vadd.f32 %v5885, %v6088
    %v6090 = vpop.f32.mrf.mxu0
    %6091 = vdwg.mxu0
    %6092 = vmatpush.bf16.msra.mxu0 %v6030
    %6093 = vmatpush.bf16.msra.mxu0 %v6029
    %6094 = vmatpush.bf16.msra.mxu0 %v6028
    %6095 = vmatpush.bf16.msra.mxu0 %v6027
    %6096 = vmatpush.bf16.msra.mxu0 %v6026
    %6097 = vmatpush.bf16.msra.mxu0 %v6025
    %6098 = vmatpush.bf16.msra.mxu0 %v6024
    %6099 = vmatpush.bf16.msra.mxu0 %v6023
    %6100 = vmatmul.bf16.gmra.mxu0 %v5816
    %v6101 = vpop.f32.mrf.mxu0
    %v6102 = vadd.f32 %v6089, %v6101
    %v6103 = vpop.f32.mrf.mxu0
    %6104 = vdwg.mxu0
    %6105 = vmatpush.bf16.msra.mxu0 %v6038
    %6106 = vmatpush.bf16.msra.mxu0 %v6037
    %6107 = vmatpush.bf16.msra.mxu0 %v6036
    %6108 = vmatpush.bf16.msra.mxu0 %v6035
    %6109 = vmatpush.bf16.msra.mxu0 %v6034
    %6110 = vmatpush.bf16.msra.mxu0 %v6033
    %6111 = vmatpush.bf16.msra.mxu0 %v6032
    %6112 = vmatpush.bf16.msra.mxu0 %v6031
    %6113 = vmatmul.bf16.gmra.mxu0 %v5817
    %v6114 = vpop.f32.mrf.mxu0
    %v6115 = vadd.f32 %v6102, %v6114
    %v6116 = vpop.f32.mrf.mxu0
    %6117 = vdwg.mxu0
    %6118 = vmatpush.bf16.msra.mxu0 %v6046
    %6119 = vmatpush.bf16.msra.mxu0 %v6045
    %6120 = vmatpush.bf16.msra.mxu0 %v6044
    %6121 = vmatpush.bf16.msra.mxu0 %v6043
    %6122 = vmatpush.bf16.msra.mxu0 %v6042
    %6123 = vmatpush.bf16.msra.mxu0 %v6041
    %6124 = vmatpush.bf16.msra.mxu0 %v6040
    %6125 = vmatpush.bf16.msra.mxu0 %v6039
    %6126 = vmatmul.bf16.gmra.mxu0 %v5818
    %v6127 = vpop.f32.mrf.mxu0
    %v6128 = vadd.f32 %v6115, %v6127
    %v6129 = vpop.f32.mrf.mxu0
    %6130 = vdwg.mxu0
    %v6131 = vmax.f32 %v6128, 0.0
    %v6132 = vpack.c.bf16 %v6131, %v6131
    %v6133 = vld [vmem:[#allocation14] sm:$0xf]
    %v6134 = vld [vmem:[#allocation14 + $0x4] sm:$0xf]
    %v6135 = vld [vmem:[#allocation14 + $0x8] sm:$0xf]
    %v6136 = vld [vmem:[#allocation14 + $0xc] sm:$0xf]
    %v6137 = vld [vmem:[#allocation14 + $0x10] sm:$0xf]
    %v6138 = vld [vmem:[#allocation14 + $0x14] sm:$0xf]
    %v6139 = vld [vmem:[#allocation14 + $0x18] sm:$0xf]
    %v6140 = vld [vmem:[#allocation14 + $0x1c] sm:$0xf]
    %v6141 = vld [vmem:[#allocation14 + $0x20] sm:$0xf]
    %v6142 = vld [vmem:[#allocation14 + $0x24] sm:$0xf]
    %v6143 = vld [vmem:[#allocation14 + $0x28] sm:$0xf]
    %v6144 = vld [vmem:[#allocation14 + $0x2c] sm:$0xf]
    %v6145 = vld [vmem:[#allocation14 + $0x30] sm:$0xf]
    %v6146 = vld [vmem:[#allocation14 + $0x34] sm:$0xf]
    %v6147 = vld [vmem:[#allocation14 + $0x38] sm:$0xf]
    %v6148 = vld [vmem:[#allocation14 + $0x3c] sm:$0xf]
    %v6149 = vld [vmem:[#allocation16] sm:$0x1]
    %v6151 = vperm.slane %v6149, 0
    %v6169 = vunpack.c.l.b16 %v6133
    %v6170 = vunpack.c.l.b16 %v6134
    %v6171 = vunpack.c.l.b16 %v6135
    %v6172 = vunpack.c.l.b16 %v6136
    %v6173 = vunpack.c.l.b16 %v6137
    %v6174 = vunpack.c.l.b16 %v6138
    %v6175 = vunpack.c.l.b16 %v6139
    %v6176 = vunpack.c.l.b16 %v6140
    %v6177 = vunpack.c.l.b16 %v6141
    %v6178 = vunpack.c.l.b16 %v6142
    %v6179 = vunpack.c.l.b16 %v6143
    %v6180 = vunpack.c.l.b16 %v6144
    %v6181 = vunpack.c.l.b16 %v6145
    %v6182 = vunpack.c.l.b16 %v6146
    %v6183 = vunpack.c.l.b16 %v6147
    %v6184 = vunpack.c.l.b16 %v6148
    %v6185 = vpack.c.b16 %v6170, %v6169
    %v6186 = vpack.c.b16 %v6172, %v6171
    %v6187 = vpack.c.b16 %v6174, %v6173
    %v6188 = vpack.c.b16 %v6176, %v6175
    %v6189 = vpack.c.b16 %v6178, %v6177
    %v6190 = vpack.c.b16 %v6180, %v6179
    %v6191 = vpack.c.b16 %v6182, %v6181
    %v6192 = vpack.c.b16 %v6184, %v6183
    %6201 = vmatpush.bf16.msra.mxu0 %v6192
    %6202 = vmatpush.bf16.msra.mxu0 %v6191
    %6203 = vmatpush.bf16.msra.mxu0 %v6190
    %6204 = vmatpush.bf16.msra.mxu0 %v6189
    %6205 = vmatpush.bf16.msra.mxu0 %v6188
    %6206 = vmatpush.bf16.msra.mxu0 %v6187
    %6207 = vmatpush.bf16.msra.mxu0 %v6186
    %6208 = vmatpush.bf16.msra.mxu0 %v6185
    %6209 = vmatmul.bf16.gmra.mxu0 %v6132
    %v6210 = vpop.f32.mrf.mxu0
    %v6211 = vadd.f32 %v6151, %v6210
    %v6212 = vpop.f32.mrf.mxu0
    %6213 = vdwg.mxu0
    %v6214 = vsub.f32 0.0, %v6211
    %v6215 = vmul.f32 %v6214, 1.442695
    %v6216 = vpow.pop %v6215
    %v6217 = vadd.f32 %v6216, 1.0
    %v6218 = vrcp.pop %v6217
    %6219 = vst [vmem:[#allocation17] sm:$0xff] %v6218
    // Predicated region
    $region74: #{tpu_custom_call.1} parent=1 // pred_check
      _
    $region75: #{tpu_custom_call.1} parent=1 // pred_check_branch
      %6221 = sbr.rel (0) target = $region77
    $region76: #{tpu_custom_call.1} parent=1 // pred_region
      %6223 = vsyncadd [#allocation4], 0
      %s6225 = sshll.u32 [#allocation17], 4
      %s6226 = int_to_ptr.vmem [resolvable:$true] %s6225
      %s6227 = sshll.u32 %s9, 4
      %s6228 = int_to_ptr.hbm [resolvable:$true] %s6227
      %6230 = dma.vmem_to_hbm [thread:$0]  %s6226, 128, %s6228, [#allocation4]
    $region77: #{tpu_custom_call.1} parent=1 // pred_fallthru
      _
    // Predicated region
    $region78: #{tpu_custom_call.1} parent=1 // pred_check
      _
    $region79: #{tpu_custom_call.1} parent=1 // pred_check_branch
      %6232 = sbr.rel (0) target = $region81
    $region80: #{tpu_custom_call.1} parent=1 // pred_region
      %6234 = dma.done [#allocation4], 128
    $region81: #{tpu_custom_call.1} parent=1 // pred_fallthru
      _
    %6235 = vsyncpa [#allocation3], 1
    %6236 = vsyncpa [#allocation6], 1
    %6237 = vsyncpa [#allocation9], 1
    %6238 = vsyncpa [#allocation12], 1
    %6239 = vsyncpa [#allocation15], 1
    %6240 = vsyncpa [#allocation4], 1

</llo_original>
